<compile_context>
chip_gen: v6e
topology: v6e:2x2x1
jax: 0.10.0
libtpu: 0.0.40
codegen_flags: <defaults>
</compile_context>

<pallas_src>
import numpy as np
import jax
import jax.numpy as jnp
from jax.experimental import pallas as pl
from jax.experimental.pallas import tpu as pltpu

# ---------------- model hyperparameters (small, consistent with the forward) -----------
B, T, D, H, L = 2, 8, 32, 4, 2      # batch, seq, n_embd, n_head, gpt_layers
HD = D // H                         # head dim
FF = 4 * D                          # MLP inner dim
EPS = 1e-5                          # GPT-2 layer_norm_epsilon
BT = B * T
NEG = -1e9                          # additive causal-mask bias (finite, bf16-safe)


# ---------------- shared math (pure jnp; used inside the kernel and in the reference) --
def _ln(h, g, b):
    mu = jnp.mean(h, axis=-1, keepdims=True)
    var = jnp.mean(jnp.square(h - mu), axis=-1, keepdims=True)
    return (h - mu) * jax.lax.rsqrt(var + EPS) * g + b


def _gelu_new(x):  # GPT-2 "gelu_new" (tanh approximation)
    return 0.5 * x * (1.0 + jnp.tanh(0.7978845608028654 * (x + 0.044715 * x * x * x)))


# ---------------- the single fused Pallas kernel ----------------------------------------
def _gpt2_fused_kernel(x_ref, wpe_ref,
                       g1_ref, b1_ref,            # (L,1,D)
                       wqkv_ref, bqkv_ref,        # (L,D,3D), (L,1,3D)  (Q part pre-scaled)
                       wo_ref, bo_ref,            # (L,D,D),  (L,1,D)
                       g2_ref, b2_ref,            # (L,1,D)
                       wfc_ref, bfc_ref,          # (L,D,FF), (L,1,FF)
                       wpr_ref, bpr_ref,          # (L,FF,D), (L,1,D)
                       gf_ref, bf_ref,            # (1,D)
                       o_ref,                     # (B*T, D) output
                       ctx_ref):                  # (B*T, D) f32 VMEM scratch
    # residual stream with batch folded into rows (sublanes)
    h = x_ref[...].astype(jnp.float32) + wpe_ref[...]                  # (BT, D)

    # additive causal bias, built ONCE and pre-broadcast (hoisted out of all loops;
    # JAX does not CSE iota/broadcast_in_dim)
    rows = jax.lax.broadcasted_iota(jnp.int32, (T, T), 0)
    cols = jax.lax.broadcasted_iota(jnp.int32, (T, T), 1)
    mask_bias = jnp.broadcast_to(
        jnp.where(cols <= rows, 0.0, NEG).astype(jnp.float32), (B, T, T))

    for l in range(L):                                                 # static unroll
        # ---- attention sub-block: h = h + attn(ln_1(h)) @ Wo + bo ----
        ln1 = _ln(h, g1_ref[l], b1_ref[l])

        # ONE fused QKV matmul per layer: (BT,D)@(D,3D); Q columns pre-scaled by 1/sqrt(HD)
        qkv = jnp.dot(ln1, wqkv_ref[l], preferred_element_type=jnp.float32) + bqkv_ref[l]
        qkv3 = qkv.reshape(B, T, 3 * D)        # splits rows only; lane (minor) dim untouched

        for hd in range(H):                    # static; heads = static lane slices of qkv
            qh = qkv3[:, :, hd * HD:(hd + 1) * HD]                       # (B, T, HD)
            kh = qkv3[:, :, D + hd * HD:D + (hd + 1) * HD]               # (B, T, HD)
            vh = qkv3[:, :, 2 * D + hd * HD:2 * D + (hd + 1) * HD]       # (B, T, HD)

            s = jnp.einsum("bqd,bkd->bqk", qh, kh,
                           preferred_element_type=jnp.float32) + mask_bias   # (B, T, T)
            s = s - jnp.max(s, axis=-1, keepdims=True)
            p = jnp.exp(s)
            p = p * pl.reciprocal(jnp.sum(p, axis=-1, keepdims=True), approx=True)
            ctx_h = jnp.einsum("bqk,bkd->bqd", p, vh,
                               preferred_element_type=jnp.float32)           # (B, T, HD)

            # static lane write: reassemble the (BT, D) context in VMEM scratch
            ctx_ref[:, hd * HD:(hd + 1) * HD] = ctx_h.reshape(BT, HD)

        # ONE output projection over the full D axis: (BT,D)@(D,D)
        h = h + jnp.dot(ctx_ref[...], wo_ref[l],
                        preferred_element_type=jnp.float32) + bo_ref[l]

        # ---- MLP sub-block: h = h + proj(gelu(fc(ln_2(h)))) ----
        ln2 = _ln(h, g2_ref[l], b2_ref[l])
        f = _gelu_new(jnp.dot(ln2, wfc_ref[l], preferred_element_type=jnp.float32) + bfc_ref[l])
        h = h + jnp.dot(f, wpr_ref[l], preferred_element_type=jnp.float32) + bpr_ref[l]

    # final LayerNorm and store
    o_ref[...] = _ln(h, gf_ref[...], bf_ref[...]).astype(o_ref.dtype)


# ---------------- wrapper: stack weights per layer, one pallas_call ---------------------
def gpt4ts_forward(x, params):
    """GPT-2 backbone forward (inputs_embeds -> last_hidden_state), fully fused."""
    blocks = params["blocks"]
    scale = 1.0 / (HD ** 0.5)
    # fold 1/sqrt(HD) into the Q columns of the fused QKV weight & bias (trace-time fold)
    qkv_scale = jnp.concatenate(
        [jnp.full((1, D), scale, jnp.float32), jnp.ones((1, 2 * D), jnp.float32)], axis=1)

    def stack_layers(fn):
        return jnp.stack([fn(blk) for blk in blocks], axis=0)              # (L, ...)

    args = (
        x.reshape(BT, D),                                                   # batch folded into rows
        jnp.tile(params["wpe"], (B, 1)),                                    # (B*T, D) positions
        stack_layers(lambda p: p["ln1_g"]),
        stack_layers(lambda p: p["ln1_b"]),
        stack_layers(lambda p: p["attn_w"] * qkv_scale),                    # (L, D, 3D)
        stack_layers(lambda p: p["attn_b"] * qkv_scale),                    # (L, 1, 3D)
        stack_layers(lambda p: p["attn_proj_w"]),                           # (L, D, D)
        stack_layers(lambda p: p["attn_proj_b"]),                           # (L, 1, D)
        stack_layers(lambda p: p["ln2_g"]),
        stack_layers(lambda p: p["ln2_b"]),
        stack_layers(lambda p: p["fc_w"]),
        stack_layers(lambda p: p["fc_b"]),
        stack_layers(lambda p: p["mlp_proj_w"]),
        stack_layers(lambda p: p["mlp_proj_b"]),
        params["lnf_g"],
        params["lnf_b"],
    )

    vmem = pl.BlockSpec(memory_space=pltpu.MemorySpace.VMEM)   # whole array, VMEM-resident
    out = pl.pallas_call(
        _gpt2_fused_kernel,
        out_shape=jax.ShapeDtypeStruct((BT, D), x.dtype),
        in_specs=[vmem] * len(args),
        out_specs=vmem,
        scratch_shapes=[pltpu.VMEM((BT, D), jnp.float32)],      # ctx reassembly buffer
        compiler_params=pltpu.CompilerParams(vmem_limit_bytes=32 * 1024 * 1024),
    )(*args)
    return out.reshape(B, T, D)


# ---------------- deterministic synthetic parameters ------------------------------------
def init_params(key):
    std = 0.02
    k_wpe, key = jax.random.split(key)
    params = {"wpe": std * jax.random.normal(k_wpe, (T, D), jnp.float32)}
    blocks = []
    for _ in range(L):
        key, k1, k2, k3, k4, k5, k6 = jax.random.split(key, 7)
        blocks.append(dict(
            ln1_g=jnp.ones((1, D), jnp.float32), ln1_b=jnp.zeros((1, D), jnp.float32),
            attn_w=std * jax.random.normal(k1, (D, 3 * D), jnp.float32),
            attn_b=std * jax.random.normal(k2, (1, 3 * D), jnp.float32),
            attn_proj_w=std * jax.random.normal(k3, (D, D), jnp.float32),
            attn_proj_b=std * jax.random.normal(k4, (1, D), jnp.float32),
            ln2_g=jnp.ones((1, D), jnp.float32), ln2_b=jnp.zeros((1, D), jnp.float32),
            fc_w=std * jax.random.normal(k5, (D, FF), jnp.float32),
            fc_b=jnp.zeros((1, FF), jnp.float32),
            mlp_proj_w=std * jax.random.normal(k6, (FF, D), jnp.float32),
            mlp_proj_b=jnp.zeros((1, D), jnp.float32),
        ))
    params["blocks"] = blocks
    params["lnf_g"] = jnp.ones((1, D), jnp.float32)
    params["lnf_b"] = jnp.zeros((1, D), jnp.float32)
    return params


# ---------------- pure-JAX reference (same math, no Pallas) -----------------------------
def reference_forward(x, params):
    h = x + params["wpe"]
    for p in params["blocks"]:
        ln1 = _ln(h, p["ln1_g"], p["ln1_b"])
        qkv = ln1 @ p["attn_w"] + p["attn_b"]
        q, k, v = jnp.split(qkv, 3, axis=-1)

        def heads(t):
            return t.reshape(B, T, H, HD).transpose(0, 2, 1, 3)

        q, k, v = heads(q), heads(k), heads(v)
        s = jnp.einsum("bhqd,bhkd->bhqk", q, k) / (HD ** 0.5)
        mask = jnp.tril(jnp.ones((T, T), dtype=bool))
        s = jnp.where(mask, s, jnp.finfo(jnp.float32).min)
        a = jax.nn.softmax(s, axis=-1)
        ctx = jnp.einsum("bhqk,bhkd->bhqd", a, v).transpose(0, 2, 1, 3).reshape(B, T, D)
        h = h + ctx @ p["attn_proj_w"] + p["attn_proj_b"]
        ln2 = _ln(h, p["ln2_g"], p["ln2_b"])
        f = _gelu_new(ln2 @ p["fc_w"] + p["fc_b"])
        h = h + f @ p["mlp_proj_w"] + p["mlp_proj_b"]
    return _ln(h, params["lnf_g"], params["lnf_b"])


# ---------------- main -------------------------------------------------------------------
if __name__ == "__main__":
    key = jax.random.PRNGKey(0)
    pkey, xkey = jax.random.split(key)
    params = init_params(pkey)
    x = jax.random.normal(xkey, (B, T, D), jnp.float32)   # inputs_embeds

    out = jax.block_until_ready(gpt4ts_forward(x, params))

    ref = reference_forward(x, params)
    assert out.shape == (B, T, D), out.shape
    np.testing.assert_allclose(np.asarray(out), np.asarray(ref), rtol=1e-3, atol=1e-3)
    print("KERNEL_OK")
</pallas_src>

<mosaic_0001>
module attributes {stable_mosaic.version = 11 : i64} {
  func.func @_gpt2_fused_kernel(%arg0: memref<16x32xf32, #tpu.memory_space<vmem>>, %arg1: memref<16x32xf32, #tpu.memory_space<vmem>>, %arg2: memref<2x1x32xf32, #tpu.memory_space<vmem>>, %arg3: memref<2x1x32xf32, #tpu.memory_space<vmem>>, %arg4: memref<2x32x96xf32, #tpu.memory_space<vmem>>, %arg5: memref<2x1x96xf32, #tpu.memory_space<vmem>>, %arg6: memref<2x32x32xf32, #tpu.memory_space<vmem>>, %arg7: memref<2x1x32xf32, #tpu.memory_space<vmem>>, %arg8: memref<2x1x32xf32, #tpu.memory_space<vmem>>, %arg9: memref<2x1x32xf32, #tpu.memory_space<vmem>>, %arg10: memref<2x32x128xf32, #tpu.memory_space<vmem>>, %arg11: memref<2x1x128xf32, #tpu.memory_space<vmem>>, %arg12: memref<2x128x32xf32, #tpu.memory_space<vmem>>, %arg13: memref<2x1x32xf32, #tpu.memory_space<vmem>>, %arg14: memref<1x32xf32, #tpu.memory_space<vmem>>, %arg15: memref<1x32xf32, #tpu.memory_space<vmem>>, %arg16: memref<16x32xf32, #tpu.memory_space<vmem>>, %arg17: memref<16x32xf32, #tpu.memory_space<vmem>>) attributes {dimension_semantics = [], scalar_prefetch = 0 : i64, scratch_operands = 1 : i64, tpu.core_type = #tpu.core_type<tc>} {
    %c0 = arith.constant 0 : index
    %c0_0 = arith.constant 0 : index
    %0 = vector.load %arg0[%c0, %c0_0] : memref<16x32xf32, #tpu.memory_space<vmem>>, vector<16x32xf32>
    %c0_1 = arith.constant 0 : index
    %c0_2 = arith.constant 0 : index
    %1 = vector.load %arg1[%c0_1, %c0_2] : memref<16x32xf32, #tpu.memory_space<vmem>>, vector<16x32xf32>
    %2 = arith.addf %0, %1 : vector<16x32xf32>
    %3 = tpu.iota {dimensions = array<i32: 0>} : vector<8x8xi32>
    %4 = tpu.iota {dimensions = array<i32: 1>} : vector<8x8xi32>
    %5 = arith.cmpi sle, %4, %3 : vector<8x8xi32>
    %cst = arith.constant 0.000000e+00 : f32
    %cst_3 = arith.constant -1.000000e+09 : f32
    %6 = vector.broadcast %cst : f32 to vector<8x8xf32>
    %7 = vector.broadcast %cst_3 : f32 to vector<8x8xf32>
    %8 = arith.select %5, %6, %7 : vector<8x8xi1>, vector<8x8xf32>
    %9 = vector.shape_cast %8 : vector<8x8xf32> to vector<1x8x8xf32>
    %10 = vector.broadcast %9 : vector<1x8x8xf32> to vector<2x8x8xf32>
    %c0_4 = arith.constant 0 : index
    %c0_5 = arith.constant 0 : index
    %c0_6 = arith.constant 0 : index
    %11 = vector.load %arg2[%c0_4, %c0_5, %c0_6] : memref<2x1x32xf32, #tpu.memory_space<vmem>>, vector<1x1x32xf32>
    %12 = vector.shape_cast %11 : vector<1x1x32xf32> to vector<1x32xf32>
    %c0_7 = arith.constant 0 : index
    %c0_8 = arith.constant 0 : index
    %c0_9 = arith.constant 0 : index
    %13 = vector.load %arg3[%c0_7, %c0_8, %c0_9] : memref<2x1x32xf32, #tpu.memory_space<vmem>>, vector<1x1x32xf32>
    %14 = vector.shape_cast %13 : vector<1x1x32xf32> to vector<1x32xf32>
    %cst_10 = arith.constant dense<0.000000e+00> : vector<16xf32>
    %15 = vector.multi_reduction <add>, %2, %cst_10 [1] : vector<16x32xf32> to vector<16xf32>
    %16 = vector.shape_cast %15 : vector<16xf32> to vector<16x1xf32>
    %cst_11 = arith.constant 3.200000e+01 : f32
    %17 = vector.broadcast %cst_11 : f32 to vector<16x1xf32>
    %18 = arith.divf %16, %17 : vector<16x1xf32>
    %19 = vector.broadcast %18 : vector<16x1xf32> to vector<16x32xf32>
    %20 = arith.subf %2, %19 : vector<16x32xf32>
    %21 = arith.mulf %20, %20 : vector<16x32xf32>
    %cst_12 = arith.constant dense<0.000000e+00> : vector<16xf32>
    %22 = vector.multi_reduction <add>, %21, %cst_12 [1] : vector<16x32xf32> to vector<16xf32>
    %23 = vector.shape_cast %22 : vector<16xf32> to vector<16x1xf32>
    %cst_13 = arith.constant 3.200000e+01 : f32
    %24 = vector.broadcast %cst_13 : f32 to vector<16x1xf32>
    %25 = arith.divf %23, %24 : vector<16x1xf32>
    %26 = vector.broadcast %18 : vector<16x1xf32> to vector<16x32xf32>
    %27 = arith.subf %2, %26 : vector<16x32xf32>
    %cst_14 = arith.constant 9.99999974E-6 : f32
    %28 = vector.broadcast %cst_14 : f32 to vector<16x1xf32>
    %29 = arith.addf %25, %28 : vector<16x1xf32>
    %30 = math.rsqrt %29 : vector<16x1xf32>
    %31 = vector.broadcast %30 : vector<16x1xf32> to vector<16x32xf32>
    %32 = arith.mulf %27, %31 : vector<16x32xf32>
    %33 = vector.broadcast %12 : vector<1x32xf32> to vector<16x32xf32>
    %34 = arith.mulf %32, %33 : vector<16x32xf32>
    %35 = vector.broadcast %14 : vector<1x32xf32> to vector<16x32xf32>
    %36 = arith.addf %34, %35 : vector<16x32xf32>
    %c0_15 = arith.constant 0 : index
    %c0_16 = arith.constant 0 : index
    %c0_17 = arith.constant 0 : index
    %37 = vector.load %arg4[%c0_15, %c0_16, %c0_17] : memref<2x32x96xf32, #tpu.memory_space<vmem>>, vector<1x32x96xf32>
    %38 = vector.shape_cast %37 : vector<1x32x96xf32> to vector<32x96xf32>
    %cst_18 = arith.constant dense<0.000000e+00> : vector<16x96xf32>
    %39 = tpu.matmul %36, %38, %cst_18 {dimension_numbers = #tpu.dot_dimension_numbers<[1], [0], [0], [1], [0, 0, 1, 1], [], []>} : vector<16x32xf32>, vector<32x96xf32>, vector<16x96xf32> -> vector<16x96xf32>
    %c0_19 = arith.constant 0 : index
    %c0_20 = arith.constant 0 : index
    %c0_21 = arith.constant 0 : index
    %40 = vector.load %arg5[%c0_19, %c0_20, %c0_21] : memref<2x1x96xf32, #tpu.memory_space<vmem>>, vector<1x1x96xf32>
    %41 = vector.shape_cast %40 : vector<1x1x96xf32> to vector<1x96xf32>
    %42 = vector.broadcast %41 : vector<1x96xf32> to vector<16x96xf32>
    %43 = arith.addf %39, %42 : vector<16x96xf32>
    %44 = vector.shape_cast %43 : vector<16x96xf32> to vector<2x8x96xf32>
    %45 = vector.extract_strided_slice %44 {offsets = [0, 0, 0], sizes = [2, 8, 8], strides = [1, 1, 1]} : vector<2x8x96xf32> to vector<2x8x8xf32>
    %46 = vector.extract_strided_slice %44 {offsets = [0, 0, 32], sizes = [2, 8, 8], strides = [1, 1, 1]} : vector<2x8x96xf32> to vector<2x8x8xf32>
    %47 = vector.extract_strided_slice %44 {offsets = [0, 0, 64], sizes = [2, 8, 8], strides = [1, 1, 1]} : vector<2x8x96xf32> to vector<2x8x8xf32>
    "tpu.trace_start"() <{level = 10 : i32, message = "bqd,bkd->bqk"}> : () -> ()
    %cst_22 = arith.constant dense<0.000000e+00> : vector<2x8x8xf32>
    %48 = tpu.matmul %45, %46, %cst_22 {dimension_numbers = #tpu.dot_dimension_numbers<[2], [2], [1], [1], [0, 0, 0, 1, 1, 1], [0], [0]>} : vector<2x8x8xf32>, vector<2x8x8xf32>, vector<2x8x8xf32> -> vector<2x8x8xf32>
    "tpu.trace_stop"() : () -> ()
    %49 = arith.addf %48, %10 : vector<2x8x8xf32>
    %cst_23 = arith.constant dense<0xFF800000> : vector<2x8xf32>
    %50 = vector.multi_reduction <maximumf>, %49, %cst_23 [2] : vector<2x8x8xf32> to vector<2x8xf32>
    %51 = vector.shape_cast %50 : vector<2x8xf32> to vector<2x8x1xf32>
    %52 = vector.broadcast %51 : vector<2x8x1xf32> to vector<2x8x8xf32>
    %53 = arith.subf %49, %52 : vector<2x8x8xf32>
    %54 = math.exp %53 : vector<2x8x8xf32>
    %cst_24 = arith.constant dense<0.000000e+00> : vector<2x8xf32>
    %55 = vector.multi_reduction <add>, %54, %cst_24 [2] : vector<2x8x8xf32> to vector<2x8xf32>
    %56 = vector.shape_cast %55 : vector<2x8xf32> to vector<2x8x1xf32>
    %57 = tpu.reciprocal %56 {approx = true} : vector<2x8x1xf32> -> vector<2x8x1xf32>
    %58 = vector.broadcast %57 : vector<2x8x1xf32> to vector<2x8x8xf32>
    %59 = arith.mulf %54, %58 : vector<2x8x8xf32>
    "tpu.trace_start"() <{level = 10 : i32, message = "bqk,bkd->bqd"}> : () -> ()
    %cst_25 = arith.constant dense<0.000000e+00> : vector<2x8x8xf32>
    %60 = tpu.matmul %59, %47, %cst_25 {dimension_numbers = #tpu.dot_dimension_numbers<[2], [1], [1], [2], [0, 0, 0, 1, 1, 2], [0], [0]>} : vector<2x8x8xf32>, vector<2x8x8xf32>, vector<2x8x8xf32> -> vector<2x8x8xf32>
    "tpu.trace_stop"() : () -> ()
    %61 = vector.shape_cast %60 : vector<2x8x8xf32> to vector<16x8xf32>
    %c0_26 = arith.constant 0 : index
    %c0_27 = arith.constant 0 : index
    %62 = vector.load %arg17[%c0_26, %c0_27] : memref<16x32xf32, #tpu.memory_space<vmem>>, vector<16x8xf32>
    tpu.vector_store %arg17[%c0_26, %c0_27], %61 {strides = array<i32>} : memref<16x32xf32, #tpu.memory_space<vmem>>, vector<16x8xf32>,
    %63 = vector.extract_strided_slice %44 {offsets = [0, 0, 8], sizes = [2, 8, 8], strides = [1, 1, 1]} : vector<2x8x96xf32> to vector<2x8x8xf32>
    %64 = vector.extract_strided_slice %44 {offsets = [0, 0, 40], sizes = [2, 8, 8], strides = [1, 1, 1]} : vector<2x8x96xf32> to vector<2x8x8xf32>
    %65 = vector.extract_strided_slice %44 {offsets = [0, 0, 72], sizes = [2, 8, 8], strides = [1, 1, 1]} : vector<2x8x96xf32> to vector<2x8x8xf32>
    "tpu.trace_start"() <{level = 10 : i32, message = "bqd,bkd->bqk"}> : () -> ()
    %cst_28 = arith.constant dense<0.000000e+00> : vector<2x8x8xf32>
    %66 = tpu.matmul %63, %64, %cst_28 {dimension_numbers = #tpu.dot_dimension_numbers<[2], [2], [1], [1], [0, 0, 0, 1, 1, 1], [0], [0]>} : vector<2x8x8xf32>, vector<2x8x8xf32>, vector<2x8x8xf32> -> vector<2x8x8xf32>
    "tpu.trace_stop"() : () -> ()
    %67 = arith.addf %66, %10 : vector<2x8x8xf32>
    %cst_29 = arith.constant dense<0xFF800000> : vector<2x8xf32>
    %68 = vector.multi_reduction <maximumf>, %67, %cst_29 [2] : vector<2x8x8xf32> to vector<2x8xf32>
    %69 = vector.shape_cast %68 : vector<2x8xf32> to vector<2x8x1xf32>
    %70 = vector.broadcast %69 : vector<2x8x1xf32> to vector<2x8x8xf32>
    %71 = arith.subf %67, %70 : vector<2x8x8xf32>
    %72 = math.exp %71 : vector<2x8x8xf32>
    %cst_30 = arith.constant dense<0.000000e+00> : vector<2x8xf32>
    %73 = vector.multi_reduction <add>, %72, %cst_30 [2] : vector<2x8x8xf32> to vector<2x8xf32>
    %74 = vector.shape_cast %73 : vector<2x8xf32> to vector<2x8x1xf32>
    %75 = tpu.reciprocal %74 {approx = true} : vector<2x8x1xf32> -> vector<2x8x1xf32>
    %76 = vector.broadcast %75 : vector<2x8x1xf32> to vector<2x8x8xf32>
    %77 = arith.mulf %72, %76 : vector<2x8x8xf32>
    "tpu.trace_start"() <{level = 10 : i32, message = "bqk,bkd->bqd"}> : () -> ()
    %cst_31 = arith.constant dense<0.000000e+00> : vector<2x8x8xf32>
    %78 = tpu.matmul %77, %65, %cst_31 {dimension_numbers = #tpu.dot_dimension_numbers<[2], [1], [1], [2], [0, 0, 0, 1, 1, 2], [0], [0]>} : vector<2x8x8xf32>, vector<2x8x8xf32>, vector<2x8x8xf32> -> vector<2x8x8xf32>
    "tpu.trace_stop"() : () -> ()
    %79 = vector.shape_cast %78 : vector<2x8x8xf32> to vector<16x8xf32>
    %c0_32 = arith.constant 0 : index
    %c8 = arith.constant 8 : index
    %80 = vector.load %arg17[%c0_32, %c8] : memref<16x32xf32, #tpu.memory_space<vmem>>, vector<16x8xf32>
    tpu.vector_store %arg17[%c0_32, %c8], %79 {strides = array<i32>} : memref<16x32xf32, #tpu.memory_space<vmem>>, vector<16x8xf32>,
    %81 = vector.extract_strided_slice %44 {offsets = [0, 0, 16], sizes = [2, 8, 8], strides = [1, 1, 1]} : vector<2x8x96xf32> to vector<2x8x8xf32>
    %82 = vector.extract_strided_slice %44 {offsets = [0, 0, 48], sizes = [2, 8, 8], strides = [1, 1, 1]} : vector<2x8x96xf32> to vector<2x8x8xf32>
    %83 = vector.extract_strided_slice %44 {offsets = [0, 0, 80], sizes = [2, 8, 8], strides = [1, 1, 1]} : vector<2x8x96xf32> to vector<2x8x8xf32>
    "tpu.trace_start"() <{level = 10 : i32, message = "bqd,bkd->bqk"}> : () -> ()
    %cst_33 = arith.constant dense<0.000000e+00> : vector<2x8x8xf32>
    %84 = tpu.matmul %81, %82, %cst_33 {dimension_numbers = #tpu.dot_dimension_numbers<[2], [2], [1], [1], [0, 0, 0, 1, 1, 1], [0], [0]>} : vector<2x8x8xf32>, vector<2x8x8xf32>, vector<2x8x8xf32> -> vector<2x8x8xf32>
    "tpu.trace_stop"() : () -> ()
    %85 = arith.addf %84, %10 : vector<2x8x8xf32>
    %cst_34 = arith.constant dense<0xFF800000> : vector<2x8xf32>
    %86 = vector.multi_reduction <maximumf>, %85, %cst_34 [2] : vector<2x8x8xf32> to vector<2x8xf32>
    %87 = vector.shape_cast %86 : vector<2x8xf32> to vector<2x8x1xf32>
    %88 = vector.broadcast %87 : vector<2x8x1xf32> to vector<2x8x8xf32>
    %89 = arith.subf %85, %88 : vector<2x8x8xf32>
    %90 = math.exp %89 : vector<2x8x8xf32>
    %cst_35 = arith.constant dense<0.000000e+00> : vector<2x8xf32>
    %91 = vector.multi_reduction <add>, %90, %cst_35 [2] : vector<2x8x8xf32> to vector<2x8xf32>
    %92 = vector.shape_cast %91 : vector<2x8xf32> to vector<2x8x1xf32>
    %93 = tpu.reciprocal %92 {approx = true} : vector<2x8x1xf32> -> vector<2x8x1xf32>
    %94 = vector.broadcast %93 : vector<2x8x1xf32> to vector<2x8x8xf32>
    %95 = arith.mulf %90, %94 : vector<2x8x8xf32>
    "tpu.trace_start"() <{level = 10 : i32, message = "bqk,bkd->bqd"}> : () -> ()
    %cst_36 = arith.constant dense<0.000000e+00> : vector<2x8x8xf32>
    %96 = tpu.matmul %95, %83, %cst_36 {dimension_numbers = #tpu.dot_dimension_numbers<[2], [1], [1], [2], [0, 0, 0, 1, 1, 2], [0], [0]>} : vector<2x8x8xf32>, vector<2x8x8xf32>, vector<2x8x8xf32> -> vector<2x8x8xf32>
    "tpu.trace_stop"() : () -> ()
    %97 = vector.shape_cast %96 : vector<2x8x8xf32> to vector<16x8xf32>
    %c0_37 = arith.constant 0 : index
    %c16 = arith.constant 16 : index
    %98 = vector.load %arg17[%c0_37, %c16] : memref<16x32xf32, #tpu.memory_space<vmem>>, vector<16x8xf32>
    tpu.vector_store %arg17[%c0_37, %c16], %97 {strides = array<i32>} : memref<16x32xf32, #tpu.memory_space<vmem>>, vector<16x8xf32>,
    %99 = vector.extract_strided_slice %44 {offsets = [0, 0, 24], sizes = [2, 8, 8], strides = [1, 1, 1]} : vector<2x8x96xf32> to vector<2x8x8xf32>
    %100 = vector.extract_strided_slice %44 {offsets = [0, 0, 56], sizes = [2, 8, 8], strides = [1, 1, 1]} : vector<2x8x96xf32> to vector<2x8x8xf32>
    %101 = vector.extract_strided_slice %44 {offsets = [0, 0, 88], sizes = [2, 8, 8], strides = [1, 1, 1]} : vector<2x8x96xf32> to vector<2x8x8xf32>
    "tpu.trace_start"() <{level = 10 : i32, message = "bqd,bkd->bqk"}> : () -> ()
    %cst_38 = arith.constant dense<0.000000e+00> : vector<2x8x8xf32>
    %102 = tpu.matmul %99, %100, %cst_38 {dimension_numbers = #tpu.dot_dimension_numbers<[2], [2], [1], [1], [0, 0, 0, 1, 1, 1], [0], [0]>} : vector<2x8x8xf32>, vector<2x8x8xf32>, vector<2x8x8xf32> -> vector<2x8x8xf32>
    "tpu.trace_stop"() : () -> ()
    %103 = arith.addf %102, %10 : vector<2x8x8xf32>
    %cst_39 = arith.constant dense<0xFF800000> : vector<2x8xf32>
    %104 = vector.multi_reduction <maximumf>, %103, %cst_39 [2] : vector<2x8x8xf32> to vector<2x8xf32>
    %105 = vector.shape_cast %104 : vector<2x8xf32> to vector<2x8x1xf32>
    %106 = vector.broadcast %105 : vector<2x8x1xf32> to vector<2x8x8xf32>
    %107 = arith.subf %103, %106 : vector<2x8x8xf32>
    %108 = math.exp %107 : vector<2x8x8xf32>
    %cst_40 = arith.constant dense<0.000000e+00> : vector<2x8xf32>
    %109 = vector.multi_reduction <add>, %108, %cst_40 [2] : vector<2x8x8xf32> to vector<2x8xf32>
    %110 = vector.shape_cast %109 : vector<2x8xf32> to vector<2x8x1xf32>
    %111 = tpu.reciprocal %110 {approx = true} : vector<2x8x1xf32> -> vector<2x8x1xf32>
    %112 = vector.broadcast %111 : vector<2x8x1xf32> to vector<2x8x8xf32>
    %113 = arith.mulf %108, %112 : vector<2x8x8xf32>
    "tpu.trace_start"() <{level = 10 : i32, message = "bqk,bkd->bqd"}> : () -> ()
    %cst_41 = arith.constant dense<0.000000e+00> : vector<2x8x8xf32>
    %114 = tpu.matmul %113, %101, %cst_41 {dimension_numbers = #tpu.dot_dimension_numbers<[2], [1], [1], [2], [0, 0, 0, 1, 1, 2], [0], [0]>} : vector<2x8x8xf32>, vector<2x8x8xf32>, vector<2x8x8xf32> -> vector<2x8x8xf32>
    "tpu.trace_stop"() : () -> ()
    %115 = vector.shape_cast %114 : vector<2x8x8xf32> to vector<16x8xf32>
    %c0_42 = arith.constant 0 : index
    %c24 = arith.constant 24 : index
    %116 = vector.load %arg17[%c0_42, %c24] : memref<16x32xf32, #tpu.memory_space<vmem>>, vector<16x8xf32>
    tpu.vector_store %arg17[%c0_42, %c24], %115 {strides = array<i32>} : memref<16x32xf32, #tpu.memory_space<vmem>>, vector<16x8xf32>,
    %c0_43 = arith.constant 0 : index
    %c0_44 = arith.constant 0 : index
    %117 = vector.load %arg17[%c0_43, %c0_44] : memref<16x32xf32, #tpu.memory_space<vmem>>, vector<16x32xf32>
    %c0_45 = arith.constant 0 : index
    %c0_46 = arith.constant 0 : index
    %c0_47 = arith.constant 0 : index
    %118 = vector.load %arg6[%c0_45, %c0_46, %c0_47] : memref<2x32x32xf32, #tpu.memory_space<vmem>>, vector<1x32x32xf32>
    %119 = vector.shape_cast %118 : vector<1x32x32xf32> to vector<32x32xf32>
    %cst_48 = arith.constant dense<0.000000e+00> : vector<16x32xf32>
    %120 = tpu.matmul %117, %119, %cst_48 {dimension_numbers = #tpu.dot_dimension_numbers<[1], [0], [0], [1], [0, 0, 1, 1], [], []>} : vector<16x32xf32>, vector<32x32xf32>, vector<16x32xf32> -> vector<16x32xf32>
    %121 = arith.addf %2, %120 : vector<16x32xf32>
    %c0_49 = arith.constant 0 : index
    %c0_50 = arith.constant 0 : index
    %c0_51 = arith.constant 0 : index
    %122 = vector.load %arg7[%c0_49, %c0_50, %c0_51] : memref<2x1x32xf32, #tpu.memory_space<vmem>>, vector<1x1x32xf32>
    %123 = vector.shape_cast %122 : vector<1x1x32xf32> to vector<1x32xf32>
    %124 = vector.broadcast %123 : vector<1x32xf32> to vector<16x32xf32>
    %125 = arith.addf %121, %124 : vector<16x32xf32>
    %c0_52 = arith.constant 0 : index
    %c0_53 = arith.constant 0 : index
    %c0_54 = arith.constant 0 : index
    %126 = vector.load %arg8[%c0_52, %c0_53, %c0_54] : memref<2x1x32xf32, #tpu.memory_space<vmem>>, vector<1x1x32xf32>
    %127 = vector.shape_cast %126 : vector<1x1x32xf32> to vector<1x32xf32>
    %c0_55 = arith.constant 0 : index
    %c0_56 = arith.constant 0 : index
    %c0_57 = arith.constant 0 : index
    %128 = vector.load %arg9[%c0_55, %c0_56, %c0_57] : memref<2x1x32xf32, #tpu.memory_space<vmem>>, vector<1x1x32xf32>
    %129 = vector.shape_cast %128 : vector<1x1x32xf32> to vector<1x32xf32>
    %cst_58 = arith.constant dense<0.000000e+00> : vector<16xf32>
    %130 = vector.multi_reduction <add>, %125, %cst_58 [1] : vector<16x32xf32> to vector<16xf32>
    %131 = vector.shape_cast %130 : vector<16xf32> to vector<16x1xf32>
    %cst_59 = arith.constant 3.200000e+01 : f32
    %132 = vector.broadcast %cst_59 : f32 to vector<16x1xf32>
    %133 = arith.divf %131, %132 : vector<16x1xf32>
    %134 = vector.broadcast %133 : vector<16x1xf32> to vector<16x32xf32>
    %135 = arith.subf %125, %134 : vector<16x32xf32>
    %136 = arith.mulf %135, %135 : vector<16x32xf32>
    %cst_60 = arith.constant dense<0.000000e+00> : vector<16xf32>
    %137 = vector.multi_reduction <add>, %136, %cst_60 [1] : vector<16x32xf32> to vector<16xf32>
    %138 = vector.shape_cast %137 : vector<16xf32> to vector<16x1xf32>
    %cst_61 = arith.constant 3.200000e+01 : f32
    %139 = vector.broadcast %cst_61 : f32 to vector<16x1xf32>
    %140 = arith.divf %138, %139 : vector<16x1xf32>
    %141 = vector.broadcast %133 : vector<16x1xf32> to vector<16x32xf32>
    %142 = arith.subf %125, %141 : vector<16x32xf32>
    %cst_62 = arith.constant 9.99999974E-6 : f32
    %143 = vector.broadcast %cst_62 : f32 to vector<16x1xf32>
    %144 = arith.addf %140, %143 : vector<16x1xf32>
    %145 = math.rsqrt %144 : vector<16x1xf32>
    %146 = vector.broadcast %145 : vector<16x1xf32> to vector<16x32xf32>
    %147 = arith.mulf %142, %146 : vector<16x32xf32>
    %148 = vector.broadcast %127 : vector<1x32xf32> to vector<16x32xf32>
    %149 = arith.mulf %147, %148 : vector<16x32xf32>
    %150 = vector.broadcast %129 : vector<1x32xf32> to vector<16x32xf32>
    %151 = arith.addf %149, %150 : vector<16x32xf32>
    %c0_63 = arith.constant 0 : index
    %c0_64 = arith.constant 0 : index
    %c0_65 = arith.constant 0 : index
    %152 = vector.load %arg10[%c0_63, %c0_64, %c0_65] : memref<2x32x128xf32, #tpu.memory_space<vmem>>, vector<1x32x128xf32>
    %153 = vector.shape_cast %152 : vector<1x32x128xf32> to vector<32x128xf32>
    %cst_66 = arith.constant dense<0.000000e+00> : vector<16x128xf32>
    %154 = tpu.matmul %151, %153, %cst_66 {dimension_numbers = #tpu.dot_dimension_numbers<[1], [0], [0], [1], [0, 0, 1, 1], [], []>} : vector<16x32xf32>, vector<32x128xf32>, vector<16x128xf32> -> vector<16x128xf32>
    %c0_67 = arith.constant 0 : index
    %c0_68 = arith.constant 0 : index
    %c0_69 = arith.constant 0 : index
    %155 = vector.load %arg11[%c0_67, %c0_68, %c0_69] : memref<2x1x128xf32, #tpu.memory_space<vmem>>, vector<1x1x128xf32>
    %156 = vector.shape_cast %155 : vector<1x1x128xf32> to vector<1x128xf32>
    %157 = vector.broadcast %156 : vector<1x128xf32> to vector<16x128xf32>
    %158 = arith.addf %154, %157 : vector<16x128xf32>
    %cst_70 = arith.constant 5.000000e-01 : f32
    %159 = vector.broadcast %cst_70 : f32 to vector<16x128xf32>
    %160 = arith.mulf %159, %158 : vector<16x128xf32>
    %cst_71 = arith.constant 4.471500e-02 : f32
    %161 = vector.broadcast %cst_71 : f32 to vector<16x128xf32>
    %162 = arith.mulf %161, %158 : vector<16x128xf32>
    %163 = arith.mulf %162, %158 : vector<16x128xf32>
    %164 = arith.mulf %163, %158 : vector<16x128xf32>
    %165 = arith.addf %158, %164 : vector<16x128xf32>
    %cst_72 = arith.constant 0.797884583 : f32
    %166 = vector.broadcast %cst_72 : f32 to vector<16x128xf32>
    %167 = arith.mulf %166, %165 : vector<16x128xf32>
    %168 = math.tanh %167 : vector<16x128xf32>
    %cst_73 = arith.constant 1.000000e+00 : f32
    %169 = vector.broadcast %cst_73 : f32 to vector<16x128xf32>
    %170 = arith.addf %169, %168 : vector<16x128xf32>
    %171 = arith.mulf %160, %170 : vector<16x128xf32>
    %c0_74 = arith.constant 0 : index
    %c0_75 = arith.constant 0 : index
    %c0_76 = arith.constant 0 : index
    %172 = vector.load %arg12[%c0_74, %c0_75, %c0_76] : memref<2x128x32xf32, #tpu.memory_space<vmem>>, vector<1x128x32xf32>
    %173 = vector.shape_cast %172 : vector<1x128x32xf32> to vector<128x32xf32>
    %cst_77 = arith.constant dense<0.000000e+00> : vector<16x32xf32>
    %174 = tpu.matmul %171, %173, %cst_77 {dimension_numbers = #tpu.dot_dimension_numbers<[1], [0], [0], [1], [0, 0, 1, 1], [], []>} : vector<16x128xf32>, vector<128x32xf32>, vector<16x32xf32> -> vector<16x32xf32>
    %175 = arith.addf %125, %174 : vector<16x32xf32>
    %c0_78 = arith.constant 0 : index
    %c0_79 = arith.constant 0 : index
    %c0_80 = arith.constant 0 : index
    %176 = vector.load %arg13[%c0_78, %c0_79, %c0_80] : memref<2x1x32xf32, #tpu.memory_space<vmem>>, vector<1x1x32xf32>
    %177 = vector.shape_cast %176 : vector<1x1x32xf32> to vector<1x32xf32>
    %178 = vector.broadcast %177 : vector<1x32xf32> to vector<16x32xf32>
    %179 = arith.addf %175, %178 : vector<16x32xf32>
    %c1 = arith.constant 1 : index
    %c0_81 = arith.constant 0 : index
    %c0_82 = arith.constant 0 : index
    %180 = vector.load %arg2[%c1, %c0_81, %c0_82] : memref<2x1x32xf32, #tpu.memory_space<vmem>>, vector<1x1x32xf32>
    %181 = vector.shape_cast %180 : vector<1x1x32xf32> to vector<1x32xf32>
    %c1_83 = arith.constant 1 : index
    %c0_84 = arith.constant 0 : index
    %c0_85 = arith.constant 0 : index
    %182 = vector.load %arg3[%c1_83, %c0_84, %c0_85] : memref<2x1x32xf32, #tpu.memory_space<vmem>>, vector<1x1x32xf32>
    %183 = vector.shape_cast %182 : vector<1x1x32xf32> to vector<1x32xf32>
    %cst_86 = arith.constant dense<0.000000e+00> : vector<16xf32>
    %184 = vector.multi_reduction <add>, %179, %cst_86 [1] : vector<16x32xf32> to vector<16xf32>
    %185 = vector.shape_cast %184 : vector<16xf32> to vector<16x1xf32>
    %cst_87 = arith.constant 3.200000e+01 : f32
    %186 = vector.broadcast %cst_87 : f32 to vector<16x1xf32>
    %187 = arith.divf %185, %186 : vector<16x1xf32>
    %188 = vector.broadcast %187 : vector<16x1xf32> to vector<16x32xf32>
    %189 = arith.subf %179, %188 : vector<16x32xf32>
    %190 = arith.mulf %189, %189 : vector<16x32xf32>
    %cst_88 = arith.constant dense<0.000000e+00> : vector<16xf32>
    %191 = vector.multi_reduction <add>, %190, %cst_88 [1] : vector<16x32xf32> to vector<16xf32>
    %192 = vector.shape_cast %191 : vector<16xf32> to vector<16x1xf32>
    %cst_89 = arith.constant 3.200000e+01 : f32
    %193 = vector.broadcast %cst_89 : f32 to vector<16x1xf32>
    %194 = arith.divf %192, %193 : vector<16x1xf32>
    %195 = vector.broadcast %187 : vector<16x1xf32> to vector<16x32xf32>
    %196 = arith.subf %179, %195 : vector<16x32xf32>
    %cst_90 = arith.constant 9.99999974E-6 : f32
    %197 = vector.broadcast %cst_90 : f32 to vector<16x1xf32>
    %198 = arith.addf %194, %197 : vector<16x1xf32>
    %199 = math.rsqrt %198 : vector<16x1xf32>
    %200 = vector.broadcast %199 : vector<16x1xf32> to vector<16x32xf32>
    %201 = arith.mulf %196, %200 : vector<16x32xf32>
    %202 = vector.broadcast %181 : vector<1x32xf32> to vector<16x32xf32>
    %203 = arith.mulf %201, %202 : vector<16x32xf32>
    %204 = vector.broadcast %183 : vector<1x32xf32> to vector<16x32xf32>
    %205 = arith.addf %203, %204 : vector<16x32xf32>
    %c1_91 = arith.constant 1 : index
    %c0_92 = arith.constant 0 : index
    %c0_93 = arith.constant 0 : index
    %206 = vector.load %arg4[%c1_91, %c0_92, %c0_93] : memref<2x32x96xf32, #tpu.memory_space<vmem>>, vector<1x32x96xf32>
    %207 = vector.shape_cast %206 : vector<1x32x96xf32> to vector<32x96xf32>
    %cst_94 = arith.constant dense<0.000000e+00> : vector<16x96xf32>
    %208 = tpu.matmul %205, %207, %cst_94 {dimension_numbers = #tpu.dot_dimension_numbers<[1], [0], [0], [1], [0, 0, 1, 1], [], []>} : vector<16x32xf32>, vector<32x96xf32>, vector<16x96xf32> -> vector<16x96xf32>
    %c1_95 = arith.constant 1 : index
    %c0_96 = arith.constant 0 : index
    %c0_97 = arith.constant 0 : index
    %209 = vector.load %arg5[%c1_95, %c0_96, %c0_97] : memref<2x1x96xf32, #tpu.memory_space<vmem>>, vector<1x1x96xf32>
    %210 = vector.shape_cast %209 : vector<1x1x96xf32> to vector<1x96xf32>
    %211 = vector.broadcast %210 : vector<1x96xf32> to vector<16x96xf32>
    %212 = arith.addf %208, %211 : vector<16x96xf32>
    %213 = vector.shape_cast %212 : vector<16x96xf32> to vector<2x8x96xf32>
    %214 = vector.extract_strided_slice %213 {offsets = [0, 0, 0], sizes = [2, 8, 8], strides = [1, 1, 1]} : vector<2x8x96xf32> to vector<2x8x8xf32>
    %215 = vector.extract_strided_slice %213 {offsets = [0, 0, 32], sizes = [2, 8, 8], strides = [1, 1, 1]} : vector<2x8x96xf32> to vector<2x8x8xf32>
    %216 = vector.extract_strided_slice %213 {offsets = [0, 0, 64], sizes = [2, 8, 8], strides = [1, 1, 1]} : vector<2x8x96xf32> to vector<2x8x8xf32>
    "tpu.trace_start"() <{level = 10 : i32, message = "bqd,bkd->bqk"}> : () -> ()
    %cst_98 = arith.constant dense<0.000000e+00> : vector<2x8x8xf32>
    %217 = tpu.matmul %214, %215, %cst_98 {dimension_numbers = #tpu.dot_dimension_numbers<[2], [2], [1], [1], [0, 0, 0, 1, 1, 1], [0], [0]>} : vector<2x8x8xf32>, vector<2x8x8xf32>, vector<2x8x8xf32> -> vector<2x8x8xf32>
    "tpu.trace_stop"() : () -> ()
    %218 = arith.addf %217, %10 : vector<2x8x8xf32>
    %cst_99 = arith.constant dense<0xFF800000> : vector<2x8xf32>
    %219 = vector.multi_reduction <maximumf>, %218, %cst_99 [2] : vector<2x8x8xf32> to vector<2x8xf32>
    %220 = vector.shape_cast %219 : vector<2x8xf32> to vector<2x8x1xf32>
    %221 = vector.broadcast %220 : vector<2x8x1xf32> to vector<2x8x8xf32>
    %222 = arith.subf %218, %221 : vector<2x8x8xf32>
    %223 = math.exp %222 : vector<2x8x8xf32>
    %cst_100 = arith.constant dense<0.000000e+00> : vector<2x8xf32>
    %224 = vector.multi_reduction <add>, %223, %cst_100 [2] : vector<2x8x8xf32> to vector<2x8xf32>
    %225 = vector.shape_cast %224 : vector<2x8xf32> to vector<2x8x1xf32>
    %226 = tpu.reciprocal %225 {approx = true} : vector<2x8x1xf32> -> vector<2x8x1xf32>
    %227 = vector.broadcast %226 : vector<2x8x1xf32> to vector<2x8x8xf32>
    %228 = arith.mulf %223, %227 : vector<2x8x8xf32>
    "tpu.trace_start"() <{level = 10 : i32, message = "bqk,bkd->bqd"}> : () -> ()
    %cst_101 = arith.constant dense<0.000000e+00> : vector<2x8x8xf32>
    %229 = tpu.matmul %228, %216, %cst_101 {dimension_numbers = #tpu.dot_dimension_numbers<[2], [1], [1], [2], [0, 0, 0, 1, 1, 2], [0], [0]>} : vector<2x8x8xf32>, vector<2x8x8xf32>, vector<2x8x8xf32> -> vector<2x8x8xf32>
    "tpu.trace_stop"() : () -> ()
    %230 = vector.shape_cast %229 : vector<2x8x8xf32> to vector<16x8xf32>
    %c0_102 = arith.constant 0 : index
    %c0_103 = arith.constant 0 : index
    %231 = vector.load %arg17[%c0_102, %c0_103] : memref<16x32xf32, #tpu.memory_space<vmem>>, vector<16x8xf32>
    tpu.vector_store %arg17[%c0_102, %c0_103], %230 {strides = array<i32>} : memref<16x32xf32, #tpu.memory_space<vmem>>, vector<16x8xf32>,
    %232 = vector.extract_strided_slice %213 {offsets = [0, 0, 8], sizes = [2, 8, 8], strides = [1, 1, 1]} : vector<2x8x96xf32> to vector<2x8x8xf32>
    %233 = vector.extract_strided_slice %213 {offsets = [0, 0, 40], sizes = [2, 8, 8], strides = [1, 1, 1]} : vector<2x8x96xf32> to vector<2x8x8xf32>
    %234 = vector.extract_strided_slice %213 {offsets = [0, 0, 72], sizes = [2, 8, 8], strides = [1, 1, 1]} : vector<2x8x96xf32> to vector<2x8x8xf32>
    "tpu.trace_start"() <{level = 10 : i32, message = "bqd,bkd->bqk"}> : () -> ()
    %cst_104 = arith.constant dense<0.000000e+00> : vector<2x8x8xf32>
    %235 = tpu.matmul %232, %233, %cst_104 {dimension_numbers = #tpu.dot_dimension_numbers<[2], [2], [1], [1], [0, 0, 0, 1, 1, 1], [0], [0]>} : vector<2x8x8xf32>, vector<2x8x8xf32>, vector<2x8x8xf32> -> vector<2x8x8xf32>
    "tpu.trace_stop"() : () -> ()
    %236 = arith.addf %235, %10 : vector<2x8x8xf32>
    %cst_105 = arith.constant dense<0xFF800000> : vector<2x8xf32>
    %237 = vector.multi_reduction <maximumf>, %236, %cst_105 [2] : vector<2x8x8xf32> to vector<2x8xf32>
    %238 = vector.shape_cast %237 : vector<2x8xf32> to vector<2x8x1xf32>
    %239 = vector.broadcast %238 : vector<2x8x1xf32> to vector<2x8x8xf32>
    %240 = arith.subf %236, %239 : vector<2x8x8xf32>
    %241 = math.exp %240 : vector<2x8x8xf32>
    %cst_106 = arith.constant dense<0.000000e+00> : vector<2x8xf32>
    %242 = vector.multi_reduction <add>, %241, %cst_106 [2] : vector<2x8x8xf32> to vector<2x8xf32>
    %243 = vector.shape_cast %242 : vector<2x8xf32> to vector<2x8x1xf32>
    %244 = tpu.reciprocal %243 {approx = true} : vector<2x8x1xf32> -> vector<2x8x1xf32>
    %245 = vector.broadcast %244 : vector<2x8x1xf32> to vector<2x8x8xf32>
    %246 = arith.mulf %241, %245 : vector<2x8x8xf32>
    "tpu.trace_start"() <{level = 10 : i32, message = "bqk,bkd->bqd"}> : () -> ()
    %cst_107 = arith.constant dense<0.000000e+00> : vector<2x8x8xf32>
    %247 = tpu.matmul %246, %234, %cst_107 {dimension_numbers = #tpu.dot_dimension_numbers<[2], [1], [1], [2], [0, 0, 0, 1, 1, 2], [0], [0]>} : vector<2x8x8xf32>, vector<2x8x8xf32>, vector<2x8x8xf32> -> vector<2x8x8xf32>
    "tpu.trace_stop"() : () -> ()
    %248 = vector.shape_cast %247 : vector<2x8x8xf32> to vector<16x8xf32>
    %c0_108 = arith.constant 0 : index
    %c8_109 = arith.constant 8 : index
    %249 = vector.load %arg17[%c0_108, %c8_109] : memref<16x32xf32, #tpu.memory_space<vmem>>, vector<16x8xf32>
    tpu.vector_store %arg17[%c0_108, %c8_109], %248 {strides = array<i32>} : memref<16x32xf32, #tpu.memory_space<vmem>>, vector<16x8xf32>,
    %250 = vector.extract_strided_slice %213 {offsets = [0, 0, 16], sizes = [2, 8, 8], strides = [1, 1, 1]} : vector<2x8x96xf32> to vector<2x8x8xf32>
    %251 = vector.extract_strided_slice %213 {offsets = [0, 0, 48], sizes = [2, 8, 8], strides = [1, 1, 1]} : vector<2x8x96xf32> to vector<2x8x8xf32>
    %252 = vector.extract_strided_slice %213 {offsets = [0, 0, 80], sizes = [2, 8, 8], strides = [1, 1, 1]} : vector<2x8x96xf32> to vector<2x8x8xf32>
    "tpu.trace_start"() <{level = 10 : i32, message = "bqd,bkd->bqk"}> : () -> ()
    %cst_110 = arith.constant dense<0.000000e+00> : vector<2x8x8xf32>
    %253 = tpu.matmul %250, %251, %cst_110 {dimension_numbers = #tpu.dot_dimension_numbers<[2], [2], [1], [1], [0, 0, 0, 1, 1, 1], [0], [0]>} : vector<2x8x8xf32>, vector<2x8x8xf32>, vector<2x8x8xf32> -> vector<2x8x8xf32>
    "tpu.trace_stop"() : () -> ()
    %254 = arith.addf %253, %10 : vector<2x8x8xf32>
    %cst_111 = arith.constant dense<0xFF800000> : vector<2x8xf32>
    %255 = vector.multi_reduction <maximumf>, %254, %cst_111 [2] : vector<2x8x8xf32> to vector<2x8xf32>
    %256 = vector.shape_cast %255 : vector<2x8xf32> to vector<2x8x1xf32>
    %257 = vector.broadcast %256 : vector<2x8x1xf32> to vector<2x8x8xf32>
    %258 = arith.subf %254, %257 : vector<2x8x8xf32>
    %259 = math.exp %258 : vector<2x8x8xf32>
    %cst_112 = arith.constant dense<0.000000e+00> : vector<2x8xf32>
    %260 = vector.multi_reduction <add>, %259, %cst_112 [2] : vector<2x8x8xf32> to vector<2x8xf32>
    %261 = vector.shape_cast %260 : vector<2x8xf32> to vector<2x8x1xf32>
    %262 = tpu.reciprocal %261 {approx = true} : vector<2x8x1xf32> -> vector<2x8x1xf32>
    %263 = vector.broadcast %262 : vector<2x8x1xf32> to vector<2x8x8xf32>
    %264 = arith.mulf %259, %263 : vector<2x8x8xf32>
    "tpu.trace_start"() <{level = 10 : i32, message = "bqk,bkd->bqd"}> : () -> ()
    %cst_113 = arith.constant dense<0.000000e+00> : vector<2x8x8xf32>
    %265 = tpu.matmul %264, %252, %cst_113 {dimension_numbers = #tpu.dot_dimension_numbers<[2], [1], [1], [2], [0, 0, 0, 1, 1, 2], [0], [0]>} : vector<2x8x8xf32>, vector<2x8x8xf32>, vector<2x8x8xf32> -> vector<2x8x8xf32>
    "tpu.trace_stop"() : () -> ()
    %266 = vector.shape_cast %265 : vector<2x8x8xf32> to vector<16x8xf32>
    %c0_114 = arith.constant 0 : index
    %c16_115 = arith.constant 16 : index
    %267 = vector.load %arg17[%c0_114, %c16_115] : memref<16x32xf32, #tpu.memory_space<vmem>>, vector<16x8xf32>
    tpu.vector_store %arg17[%c0_114, %c16_115], %266 {strides = array<i32>} : memref<16x32xf32, #tpu.memory_space<vmem>>, vector<16x8xf32>,
    %268 = vector.extract_strided_slice %213 {offsets = [0, 0, 24], sizes = [2, 8, 8], strides = [1, 1, 1]} : vector<2x8x96xf32> to vector<2x8x8xf32>
    %269 = vector.extract_strided_slice %213 {offsets = [0, 0, 56], sizes = [2, 8, 8], strides = [1, 1, 1]} : vector<2x8x96xf32> to vector<2x8x8xf32>
    %270 = vector.extract_strided_slice %213 {offsets = [0, 0, 88], sizes = [2, 8, 8], strides = [1, 1, 1]} : vector<2x8x96xf32> to vector<2x8x8xf32>
    "tpu.trace_start"() <{level = 10 : i32, message = "bqd,bkd->bqk"}> : () -> ()
    %cst_116 = arith.constant dense<0.000000e+00> : vector<2x8x8xf32>
    %271 = tpu.matmul %268, %269, %cst_116 {dimension_numbers = #tpu.dot_dimension_numbers<[2], [2], [1], [1], [0, 0, 0, 1, 1, 1], [0], [0]>} : vector<2x8x8xf32>, vector<2x8x8xf32>, vector<2x8x8xf32> -> vector<2x8x8xf32>
    "tpu.trace_stop"() : () -> ()
    %272 = arith.addf %271, %10 : vector<2x8x8xf32>
    %cst_117 = arith.constant dense<0xFF800000> : vector<2x8xf32>
    %273 = vector.multi_reduction <maximumf>, %272, %cst_117 [2] : vector<2x8x8xf32> to vector<2x8xf32>
    %274 = vector.shape_cast %273 : vector<2x8xf32> to vector<2x8x1xf32>
    %275 = vector.broadcast %274 : vector<2x8x1xf32> to vector<2x8x8xf32>
    %276 = arith.subf %272, %275 : vector<2x8x8xf32>
    %277 = math.exp %276 : vector<2x8x8xf32>
    %cst_118 = arith.constant dense<0.000000e+00> : vector<2x8xf32>
    %278 = vector.multi_reduction <add>, %277, %cst_118 [2] : vector<2x8x8xf32> to vector<2x8xf32>
    %279 = vector.shape_cast %278 : vector<2x8xf32> to vector<2x8x1xf32>
    %280 = tpu.reciprocal %279 {approx = true} : vector<2x8x1xf32> -> vector<2x8x1xf32>
    %281 = vector.broadcast %280 : vector<2x8x1xf32> to vector<2x8x8xf32>
    %282 = arith.mulf %277, %281 : vector<2x8x8xf32>
    "tpu.trace_start"() <{level = 10 : i32, message = "bqk,bkd->bqd"}> : () -> ()
    %cst_119 = arith.constant dense<0.000000e+00> : vector<2x8x8xf32>
    %283 = tpu.matmul %282, %270, %cst_119 {dimension_numbers = #tpu.dot_dimension_numbers<[2], [1], [1], [2], [0, 0, 0, 1, 1, 2], [0], [0]>} : vector<2x8x8xf32>, vector<2x8x8xf32>, vector<2x8x8xf32> -> vector<2x8x8xf32>
    "tpu.trace_stop"() : () -> ()
    %284 = vector.shape_cast %283 : vector<2x8x8xf32> to vector<16x8xf32>
    %c0_120 = arith.constant 0 : index
    %c24_121 = arith.constant 24 : index
    %285 = vector.load %arg17[%c0_120, %c24_121] : memref<16x32xf32, #tpu.memory_space<vmem>>, vector<16x8xf32>
    tpu.vector_store %arg17[%c0_120, %c24_121], %284 {strides = array<i32>} : memref<16x32xf32, #tpu.memory_space<vmem>>, vector<16x8xf32>,
    %c0_122 = arith.constant 0 : index
    %c0_123 = arith.constant 0 : index
    %286 = vector.load %arg17[%c0_122, %c0_123] : memref<16x32xf32, #tpu.memory_space<vmem>>, vector<16x32xf32>
    %c1_124 = arith.constant 1 : index
    %c0_125 = arith.constant 0 : index
    %c0_126 = arith.constant 0 : index
    %287 = vector.load %arg6[%c1_124, %c0_125, %c0_126] : memref<2x32x32xf32, #tpu.memory_space<vmem>>, vector<1x32x32xf32>
    %288 = vector.shape_cast %287 : vector<1x32x32xf32> to vector<32x32xf32>
    %cst_127 = arith.constant dense<0.000000e+00> : vector<16x32xf32>
    %289 = tpu.matmul %286, %288, %cst_127 {dimension_numbers = #tpu.dot_dimension_numbers<[1], [0], [0], [1], [0, 0, 1, 1], [], []>} : vector<16x32xf32>, vector<32x32xf32>, vector<16x32xf32> -> vector<16x32xf32>
    %290 = arith.addf %179, %289 : vector<16x32xf32>
    %c1_128 = arith.constant 1 : index
    %c0_129 = arith.constant 0 : index
    %c0_130 = arith.constant 0 : index
    %291 = vector.load %arg7[%c1_128, %c0_129, %c0_130] : memref<2x1x32xf32, #tpu.memory_space<vmem>>, vector<1x1x32xf32>
    %292 = vector.shape_cast %291 : vector<1x1x32xf32> to vector<1x32xf32>
    %293 = vector.broadcast %292 : vector<1x32xf32> to vector<16x32xf32>
    %294 = arith.addf %290, %293 : vector<16x32xf32>
    %c1_131 = arith.constant 1 : index
    %c0_132 = arith.constant 0 : index
    %c0_133 = arith.constant 0 : index
    %295 = vector.load %arg8[%c1_131, %c0_132, %c0_133] : memref<2x1x32xf32, #tpu.memory_space<vmem>>, vector<1x1x32xf32>
    %296 = vector.shape_cast %295 : vector<1x1x32xf32> to vector<1x32xf32>
    %c1_134 = arith.constant 1 : index
    %c0_135 = arith.constant 0 : index
    %c0_136 = arith.constant 0 : index
    %297 = vector.load %arg9[%c1_134, %c0_135, %c0_136] : memref<2x1x32xf32, #tpu.memory_space<vmem>>, vector<1x1x32xf32>
    %298 = vector.shape_cast %297 : vector<1x1x32xf32> to vector<1x32xf32>
    %cst_137 = arith.constant dense<0.000000e+00> : vector<16xf32>
    %299 = vector.multi_reduction <add>, %294, %cst_137 [1] : vector<16x32xf32> to vector<16xf32>
    %300 = vector.shape_cast %299 : vector<16xf32> to vector<16x1xf32>
    %cst_138 = arith.constant 3.200000e+01 : f32
    %301 = vector.broadcast %cst_138 : f32 to vector<16x1xf32>
    %302 = arith.divf %300, %301 : vector<16x1xf32>
    %303 = vector.broadcast %302 : vector<16x1xf32> to vector<16x32xf32>
    %304 = arith.subf %294, %303 : vector<16x32xf32>
    %305 = arith.mulf %304, %304 : vector<16x32xf32>
    %cst_139 = arith.constant dense<0.000000e+00> : vector<16xf32>
    %306 = vector.multi_reduction <add>, %305, %cst_139 [1] : vector<16x32xf32> to vector<16xf32>
    %307 = vector.shape_cast %306 : vector<16xf32> to vector<16x1xf32>
    %cst_140 = arith.constant 3.200000e+01 : f32
    %308 = vector.broadcast %cst_140 : f32 to vector<16x1xf32>
    %309 = arith.divf %307, %308 : vector<16x1xf32>
    %310 = vector.broadcast %302 : vector<16x1xf32> to vector<16x32xf32>
    %311 = arith.subf %294, %310 : vector<16x32xf32>
    %cst_141 = arith.constant 9.99999974E-6 : f32
    %312 = vector.broadcast %cst_141 : f32 to vector<16x1xf32>
    %313 = arith.addf %309, %312 : vector<16x1xf32>
    %314 = math.rsqrt %313 : vector<16x1xf32>
    %315 = vector.broadcast %314 : vector<16x1xf32> to vector<16x32xf32>
    %316 = arith.mulf %311, %315 : vector<16x32xf32>
    %317 = vector.broadcast %296 : vector<1x32xf32> to vector<16x32xf32>
    %318 = arith.mulf %316, %317 : vector<16x32xf32>
    %319 = vector.broadcast %298 : vector<1x32xf32> to vector<16x32xf32>
    %320 = arith.addf %318, %319 : vector<16x32xf32>
    %c1_142 = arith.constant 1 : index
    %c0_143 = arith.constant 0 : index
    %c0_144 = arith.constant 0 : index
    %321 = vector.load %arg10[%c1_142, %c0_143, %c0_144] : memref<2x32x128xf32, #tpu.memory_space<vmem>>, vector<1x32x128xf32>
    %322 = vector.shape_cast %321 : vector<1x32x128xf32> to vector<32x128xf32>
    %cst_145 = arith.constant dense<0.000000e+00> : vector<16x128xf32>
    %323 = tpu.matmul %320, %322, %cst_145 {dimension_numbers = #tpu.dot_dimension_numbers<[1], [0], [0], [1], [0, 0, 1, 1], [], []>} : vector<16x32xf32>, vector<32x128xf32>, vector<16x128xf32> -> vector<16x128xf32>
    %c1_146 = arith.constant 1 : index
    %c0_147 = arith.constant 0 : index
    %c0_148 = arith.constant 0 : index
    %324 = vector.load %arg11[%c1_146, %c0_147, %c0_148] : memref<2x1x128xf32, #tpu.memory_space<vmem>>, vector<1x1x128xf32>
    %325 = vector.shape_cast %324 : vector<1x1x128xf32> to vector<1x128xf32>
    %326 = vector.broadcast %325 : vector<1x128xf32> to vector<16x128xf32>
    %327 = arith.addf %323, %326 : vector<16x128xf32>
    %cst_149 = arith.constant 5.000000e-01 : f32
    %328 = vector.broadcast %cst_149 : f32 to vector<16x128xf32>
    %329 = arith.mulf %328, %327 : vector<16x128xf32>
    %cst_150 = arith.constant 4.471500e-02 : f32
    %330 = vector.broadcast %cst_150 : f32 to vector<16x128xf32>
    %331 = arith.mulf %330, %327 : vector<16x128xf32>
    %332 = arith.mulf %331, %327 : vector<16x128xf32>
    %333 = arith.mulf %332, %327 : vector<16x128xf32>
    %334 = arith.addf %327, %333 : vector<16x128xf32>
    %cst_151 = arith.constant 0.797884583 : f32
    %335 = vector.broadcast %cst_151 : f32 to vector<16x128xf32>
    %336 = arith.mulf %335, %334 : vector<16x128xf32>
    %337 = math.tanh %336 : vector<16x128xf32>
    %cst_152 = arith.constant 1.000000e+00 : f32
    %338 = vector.broadcast %cst_152 : f32 to vector<16x128xf32>
    %339 = arith.addf %338, %337 : vector<16x128xf32>
    %340 = arith.mulf %329, %339 : vector<16x128xf32>
    %c1_153 = arith.constant 1 : index
    %c0_154 = arith.constant 0 : index
    %c0_155 = arith.constant 0 : index
    %341 = vector.load %arg12[%c1_153, %c0_154, %c0_155] : memref<2x128x32xf32, #tpu.memory_space<vmem>>, vector<1x128x32xf32>
    %342 = vector.shape_cast %341 : vector<1x128x32xf32> to vector<128x32xf32>
    %cst_156 = arith.constant dense<0.000000e+00> : vector<16x32xf32>
    %343 = tpu.matmul %340, %342, %cst_156 {dimension_numbers = #tpu.dot_dimension_numbers<[1], [0], [0], [1], [0, 0, 1, 1], [], []>} : vector<16x128xf32>, vector<128x32xf32>, vector<16x32xf32> -> vector<16x32xf32>
    %344 = arith.addf %294, %343 : vector<16x32xf32>
    %c1_157 = arith.constant 1 : index
    %c0_158 = arith.constant 0 : index
    %c0_159 = arith.constant 0 : index
    %345 = vector.load %arg13[%c1_157, %c0_158, %c0_159] : memref<2x1x32xf32, #tpu.memory_space<vmem>>, vector<1x1x32xf32>
    %346 = vector.shape_cast %345 : vector<1x1x32xf32> to vector<1x32xf32>
    %347 = vector.broadcast %346 : vector<1x32xf32> to vector<16x32xf32>
    %348 = arith.addf %344, %347 : vector<16x32xf32>
    %c0_160 = arith.constant 0 : index
    %c0_161 = arith.constant 0 : index
    %349 = vector.load %arg14[%c0_160, %c0_161] : memref<1x32xf32, #tpu.memory_space<vmem>>, vector<1x32xf32>
    %c0_162 = arith.constant 0 : index
    %c0_163 = arith.constant 0 : index
    %350 = vector.load %arg15[%c0_162, %c0_163] : memref<1x32xf32, #tpu.memory_space<vmem>>, vector<1x32xf32>
    %cst_164 = arith.constant dense<0.000000e+00> : vector<16xf32>
    %351 = vector.multi_reduction <add>, %348, %cst_164 [1] : vector<16x32xf32> to vector<16xf32>
    %352 = vector.shape_cast %351 : vector<16xf32> to vector<16x1xf32>
    %cst_165 = arith.constant 3.200000e+01 : f32
    %353 = vector.broadcast %cst_165 : f32 to vector<16x1xf32>
    %354 = arith.divf %352, %353 : vector<16x1xf32>
    %355 = vector.broadcast %354 : vector<16x1xf32> to vector<16x32xf32>
    %356 = arith.subf %348, %355 : vector<16x32xf32>
    %357 = arith.mulf %356, %356 : vector<16x32xf32>
    %cst_166 = arith.constant dense<0.000000e+00> : vector<16xf32>
    %358 = vector.multi_reduction <add>, %357, %cst_166 [1] : vector<16x32xf32> to vector<16xf32>
    %359 = vector.shape_cast %358 : vector<16xf32> to vector<16x1xf32>
    %cst_167 = arith.constant 3.200000e+01 : f32
    %360 = vector.broadcast %cst_167 : f32 to vector<16x1xf32>
    %361 = arith.divf %359, %360 : vector<16x1xf32>
    %362 = vector.broadcast %354 : vector<16x1xf32> to vector<16x32xf32>
    %363 = arith.subf %348, %362 : vector<16x32xf32>
    %cst_168 = arith.constant 9.99999974E-6 : f32
    %364 = vector.broadcast %cst_168 : f32 to vector<16x1xf32>
    %365 = arith.addf %361, %364 : vector<16x1xf32>
    %366 = math.rsqrt %365 : vector<16x1xf32>
    %367 = vector.broadcast %366 : vector<16x1xf32> to vector<16x32xf32>
    %368 = arith.mulf %363, %367 : vector<16x32xf32>
    %369 = vector.broadcast %349 : vector<1x32xf32> to vector<16x32xf32>
    %370 = arith.mulf %368, %369 : vector<16x32xf32>
    %371 = vector.broadcast %350 : vector<1x32xf32> to vector<16x32xf32>
    %372 = arith.addf %370, %371 : vector<16x32xf32>
    %c0_169 = arith.constant 0 : index
    %c0_170 = arith.constant 0 : index
    %373 = vector.load %arg16[%c0_169, %c0_170] : memref<16x32xf32, #tpu.memory_space<vmem>>, vector<16x32xf32>
    tpu.vector_store %arg16[%c0_169, %c0_170], %372 {strides = array<i32>} : memref<16x32xf32, #tpu.memory_space<vmem>>, vector<16x32xf32>,
    return
  }
}

</mosaic_0001>

<llo_original>
// kernel: tpu_custom_call.1
$region0: #{tpu_custom_call.1}
  #allocation0 [shape = 'u32[]', space=smem, size = 0x4, offset = 0x4, fixed_abs, tag = 'smem constant byte address 0x4 - core index']
  #allocation1 [shape = 'u32[144,128]{1,0:T(1,128)}', space=vmem, size = 0x12000, scoped, tag = 'internal scratch']
  #allocation2 [shape = 'f32[16,32]{1,0:T(8,128)}', space=vmem, size = 0x2000, scoped, tag = 'scratch operand']
  %s0 = inlined_call_operand.vmem [shape: f32[16,32], index: 0, kind: input, shape index: {}]
  %s1 = inlined_call_operand.vmem [shape: f32[16,32], index: 1, kind: input, shape index: {}]
  %s2 = inlined_call_operand.vmem [shape: f32[2,1,32], index: 2, kind: input, shape index: {}]
  %s3 = inlined_call_operand.vmem [shape: f32[2,1,32], index: 3, kind: input, shape index: {}]
  %s4 = inlined_call_operand.vmem [shape: f32[2,32,96], index: 4, kind: input, shape index: {}]
  %s5 = inlined_call_operand.vmem [shape: f32[2,1,96], index: 5, kind: input, shape index: {}]
  %s6 = inlined_call_operand.vmem [shape: f32[2,32,32], index: 6, kind: input, shape index: {}]
  %s7 = inlined_call_operand.vmem [shape: f32[2,1,32], index: 7, kind: input, shape index: {}]
  %s8 = inlined_call_operand.vmem [shape: f32[2,1,32], index: 8, kind: input, shape index: {}]
  %s9 = inlined_call_operand.vmem [shape: f32[2,1,32], index: 9, kind: input, shape index: {}]
  %s10 = inlined_call_operand.vmem [shape: f32[2,32,128], index: 10, kind: input, shape index: {}]
  %s11 = inlined_call_operand.vmem [shape: f32[2,1,128], index: 11, kind: input, shape index: {}]
  %s12 = inlined_call_operand.vmem [shape: f32[2,128,32], index: 12, kind: input, shape index: {}]
  %s13 = inlined_call_operand.vmem [shape: f32[2,1,32], index: 13, kind: input, shape index: {}]
  %s14 = inlined_call_operand.vmem [shape: f32[1,32], index: 14, kind: input, shape index: {}]
  %s15 = inlined_call_operand.vmem [shape: f32[1,32], index: 15, kind: input, shape index: {}]
  %s16 = inlined_call_operand.hbm [shape: f32[16,32], index: 16, kind: output, shape index: {}]
  %s17 = sld [smem:[#allocation0]]
  $region74: #{tpu_custom_call.1} parent=0
    _
  %s19 = ssub.s32 1, %s17
  %s20 = scalar_select 0, %s19, %s17
  $region1: #{tpu_custom_call.1} parent=0
    #allocation3 [shape = 'u8[8192]{0}', space=vmem, size = 0x2000, scoped, tag = 'output window, operand 0, single buffered']
    #allocation4 [shape = 's32[1]{0}', space=sflag, size = 0x4, scoped, tag = 'scoped memory for tpu_custom_call.1']
    %21 = vsyncpa [#allocation4], 0
    // Predicated region
    $region2: #{tpu_custom_call.1} parent=1 // pred_check
      _
    $region3: #{tpu_custom_call.1} parent=1 // pred_check_branch
      %23 = sbr.rel (0) target = $region5
    $region4: #{tpu_custom_call.1} parent=1 // pred_region
      _
    $region5: #{tpu_custom_call.1} parent=1 // pred_fallthru
      _
    // Predicated region
    $region6: #{tpu_custom_call.1} parent=1 // pred_check
      _
    $region7: #{tpu_custom_call.1} parent=1 // pred_check_branch
      %25 = sbr.rel (0) target = $region9
    $region8: #{tpu_custom_call.1} parent=1 // pred_region
      _
    $region9: #{tpu_custom_call.1} parent=1 // pred_fallthru
      _
    // Predicated region
    $region10: #{tpu_custom_call.1} parent=1 // pred_check
      _
    $region11: #{tpu_custom_call.1} parent=1 // pred_check_branch
      %27 = sbr.rel (0) target = $region13
    $region12: #{tpu_custom_call.1} parent=1 // pred_region
      _
    $region13: #{tpu_custom_call.1} parent=1 // pred_fallthru
      _
    // Predicated region
    $region14: #{tpu_custom_call.1} parent=1 // pred_check
      _
    $region15: #{tpu_custom_call.1} parent=1 // pred_check_branch
      %29 = sbr.rel (0) target = $region17
    $region16: #{tpu_custom_call.1} parent=1 // pred_region
      _
    $region17: #{tpu_custom_call.1} parent=1 // pred_fallthru
      _
    // Predicated region
    $region18: #{tpu_custom_call.1} parent=1 // pred_check
      _
    $region19: #{tpu_custom_call.1} parent=1 // pred_check_branch
      %31 = sbr.rel (0) target = $region21
    $region20: #{tpu_custom_call.1} parent=1 // pred_region
      _
    $region21: #{tpu_custom_call.1} parent=1 // pred_fallthru
      _
    // Predicated region
    $region22: #{tpu_custom_call.1} parent=1 // pred_check
      _
    $region23: #{tpu_custom_call.1} parent=1 // pred_check_branch
      %33 = sbr.rel (0) target = $region25
    $region24: #{tpu_custom_call.1} parent=1 // pred_region
      _
    $region25: #{tpu_custom_call.1} parent=1 // pred_fallthru
      _
    // Predicated region
    $region26: #{tpu_custom_call.1} parent=1 // pred_check
      _
    $region27: #{tpu_custom_call.1} parent=1 // pred_check_branch
      %35 = sbr.rel (0) target = $region29
    $region28: #{tpu_custom_call.1} parent=1 // pred_region
      _
    $region29: #{tpu_custom_call.1} parent=1 // pred_fallthru
      _
    // Predicated region
    $region30: #{tpu_custom_call.1} parent=1 // pred_check
      _
    $region31: #{tpu_custom_call.1} parent=1 // pred_check_branch
      %37 = sbr.rel (0) target = $region33
    $region32: #{tpu_custom_call.1} parent=1 // pred_region
      _
    $region33: #{tpu_custom_call.1} parent=1 // pred_fallthru
      _
    // Predicated region
    $region34: #{tpu_custom_call.1} parent=1 // pred_check
      _
    $region35: #{tpu_custom_call.1} parent=1 // pred_check_branch
      %39 = sbr.rel (0) target = $region37
    $region36: #{tpu_custom_call.1} parent=1 // pred_region
      _
    $region37: #{tpu_custom_call.1} parent=1 // pred_fallthru
      _
    // Predicated region
    $region38: #{tpu_custom_call.1} parent=1 // pred_check
      _
    $region39: #{tpu_custom_call.1} parent=1 // pred_check_branch
      %41 = sbr.rel (0) target = $region41
    $region40: #{tpu_custom_call.1} parent=1 // pred_region
      _
    $region41: #{tpu_custom_call.1} parent=1 // pred_fallthru
      _
    // Predicated region
    $region42: #{tpu_custom_call.1} parent=1 // pred_check
      _
    $region43: #{tpu_custom_call.1} parent=1 // pred_check_branch
      %43 = sbr.rel (0) target = $region45
    $region44: #{tpu_custom_call.1} parent=1 // pred_region
      _
    $region45: #{tpu_custom_call.1} parent=1 // pred_fallthru
      _
    // Predicated region
    $region46: #{tpu_custom_call.1} parent=1 // pred_check
      _
    $region47: #{tpu_custom_call.1} parent=1 // pred_check_branch
      %45 = sbr.rel (0) target = $region49
    $region48: #{tpu_custom_call.1} parent=1 // pred_region
      _
    $region49: #{tpu_custom_call.1} parent=1 // pred_fallthru
      _
    // Predicated region
    $region50: #{tpu_custom_call.1} parent=1 // pred_check
      _
    $region51: #{tpu_custom_call.1} parent=1 // pred_check_branch
      %47 = sbr.rel (0) target = $region53
    $region52: #{tpu_custom_call.1} parent=1 // pred_region
      _
    $region53: #{tpu_custom_call.1} parent=1 // pred_fallthru
      _
    // Predicated region
    $region54: #{tpu_custom_call.1} parent=1 // pred_check
      _
    $region55: #{tpu_custom_call.1} parent=1 // pred_check_branch
      %49 = sbr.rel (0) target = $region57
    $region56: #{tpu_custom_call.1} parent=1 // pred_region
      _
    $region57: #{tpu_custom_call.1} parent=1 // pred_fallthru
      _
    // Predicated region
    $region58: #{tpu_custom_call.1} parent=1 // pred_check
      _
    $region59: #{tpu_custom_call.1} parent=1 // pred_check_branch
      %51 = sbr.rel (0) target = $region61
    $region60: #{tpu_custom_call.1} parent=1 // pred_region
      _
    $region61: #{tpu_custom_call.1} parent=1 // pred_fallthru
      _
    // Predicated region
    $region62: #{tpu_custom_call.1} parent=1 // pred_check
      _
    $region63: #{tpu_custom_call.1} parent=1 // pred_check_branch
      %53 = sbr.rel (0) target = $region65
    $region64: #{tpu_custom_call.1} parent=1 // pred_region
      _
    $region65: #{tpu_custom_call.1} parent=1 // pred_fallthru
      _
    %v54 = vld [vmem:[%s0] sm:$0xff]
    %v55 = vld [vmem:[%s0 + $0x8] sm:$0xff]
    %v56 = vld [vmem:[%s1] sm:$0xff]
    %v57 = vld [vmem:[%s1 + $0x8] sm:$0xff]
    %v58 = vadd.f32 %v54, %v56
    %v59 = vadd.f32 %v55, %v57
    %v60 = vlaneseq
    %v61 = vshrl.u32 %v60, 7
    %v62 = vlaneseq
    %v63 = vand.u32 %v62, 127
    %vm64 = vcmp.le.s32.totalorder %v63, %v61
    %v65 = vsel %vm64, 0.0, -1e+09
    %v66 = vld [vmem:[%s2] sm:$0x1]
    %v67 = vld [vmem:[%s3] sm:$0x1]
    %vm68 = vcmask 261120
    %v69 = vsel %vm68, %v58, 0.0
    %70 = vadd.xlane.f32.xlu0 %v69
    %v71 = vpop.xlane.xlu0 %70
    %v72 = vsel %vm68, %v59, 0.0
    %73 = vadd.xlane.f32.xlu0 %v72
    %v74 = vpop.xlane.xlu0 %73
    %v75 = vrcp.pop 32.0
    %v76 = vmul.f32 %v71, %v75
    %v77 = vmul.f32 %v74, %v75
    %v78 = vsub.f32 %v58, %v76
    %v79 = vsub.f32 %v59, %v77
    %v80 = vmul.f32 %v78, %v78
    %v81 = vmul.f32 %v79, %v79
    %v82 = vsel %vm68, %v80, 0.0
    %83 = vadd.xlane.f32.xlu0 %v82
    %v84 = vpop.xlane.xlu0 %83
    %v85 = vsel %vm68, %v81, 0.0
    %86 = vadd.xlane.f32.xlu0 %v85
    %v87 = vpop.xlane.xlu0 %86
    %v88 = vmul.f32 %v84, %v75
    %v89 = vmul.f32 %v87, %v75
    %v90 = vadd.f32 %v88, 1e-05
    %v91 = vadd.f32 %v89, 1e-05
    %v92 = vrsqrt.pop %v90
    %v93 = vrsqrt.pop %v91
    %v94 = vmul.f32 %v78, %v92
    %v95 = vmul.f32 %v79, %v93
    %v97 = vlaneseq
    %v98 = vshrl.u32 %v97, 7
    %v99 = vsub.s32 0, %v98
    %v100 = vrot.slane %v66, %v99
    %v102 = vmul.f32 %v94, %v100
    %v103 = vmul.f32 %v95, %v100
    %v105 = vlaneseq
    %v106 = vshrl.u32 %v105, 7
    %v107 = vsub.s32 0, %v106
    %v108 = vrot.slane %v67, %v107
    %v110 = vadd.f32 %v102, %v108
    %v111 = vadd.f32 %v103, %v108
    %v112 = vld [vmem:[%s4] sm:$0xff]
    %v113 = vld [vmem:[%s4 + $0x8] sm:$0xff]
    %v114 = vld [vmem:[%s4 + $0x10] sm:$0xff]
    %v115 = vld [vmem:[%s4 + $0x18] sm:$0xff]
    %v116 = vld [vmem:[%s5] sm:$0x1]
    %v118 = vlaneseq
    %v119 = vshrl.u32 %v118, 7
    %v120 = vsub.s32 0, %v119
    %v121 = vrot.slane %v116, %v120
    %v124 = vsel %vm68, %v110, 0
    %v127 = vsel %vm68, %v111, 0
    %129 = vmatprep.subr.mxu0 0.0
    %130 = vmatpush1.msra.mxu0 0.0
    %131 = vmatprep.subr.mxu0 0.0
    %132 = vmatpush1.msra.mxu0 0.0
    %133 = vmatprep.subr.mxu0 0.0
    %134 = vmatpush1.msra.mxu0 0.0
    %135 = vmatprep.subr.mxu0 0.0
    %136 = vmatpush1.msra.mxu0 0.0
    %137 = vmatprep.subr.mxu0 0.0
    %138 = vmatpush1.msra.mxu0 0.0
    %139 = vmatprep.subr.mxu0 0.0
    %140 = vmatpush1.msra.mxu0 0.0
    %141 = vmatprep.subr.mxu0 0.0
    %142 = vmatpush1.msra.mxu0 0.0
    %143 = vmatprep.subr.mxu0 0.0
    %144 = vmatpush1.msra.mxu0 0.0
    %145 = vmatprep.subr.mxu0 0.0
    %146 = vmatpush1.msra.mxu0 0.0
    %147 = vmatprep.subr.mxu0 0.0
    %148 = vmatpush1.msra.mxu0 0.0
    %149 = vmatprep.subr.mxu0 0.0
    %150 = vmatpush1.msra.mxu0 0.0
    %151 = vmatprep.subr.mxu0 0.0
    %152 = vmatpush1.msra.mxu0 0.0
    %153 = vmatprep.subr.mxu0 0.0
    %154 = vmatpush1.msra.mxu0 %v115
    %155 = vmatprep.subr.mxu0 0.0
    %156 = vmatpush1.msra.mxu0 %v114
    %157 = vmatprep.subr.mxu0 0.0
    %158 = vmatpush1.msra.mxu0 %v113
    %159 = vmatprep.subr.mxu0 0.0
    %160 = vmatpush1.msra.mxu0 %v112
    %161 = vmatprep.subr.mxu0 0.0
    %162 = vmatpush2.msra.mxu0 0.0
    %163 = vmatprep.subr.mxu0 0.0
    %164 = vmatpush2.msra.mxu0 0.0
    %165 = vmatprep.subr.mxu0 0.0
    %166 = vmatpush2.msra.mxu0 0.0
    %167 = vmatprep.subr.mxu0 0.0
    %168 = vmatpush2.msra.mxu0 0.0
    %169 = vmatprep.subr.mxu0 0.0
    %170 = vmatpush2.msra.mxu0 0.0
    %171 = vmatprep.subr.mxu0 0.0
    %172 = vmatpush2.msra.mxu0 0.0
    %173 = vmatprep.subr.mxu0 0.0
    %174 = vmatpush2.msra.mxu0 0.0
    %175 = vmatprep.subr.mxu0 0.0
    %176 = vmatpush2.msra.mxu0 0.0
    %177 = vmatprep.subr.mxu0 0.0
    %178 = vmatpush2.msra.mxu0 0.0
    %179 = vmatprep.subr.mxu0 0.0
    %180 = vmatpush2.msra.mxu0 0.0
    %181 = vmatprep.subr.mxu0 0.0
    %182 = vmatpush2.msra.mxu0 0.0
    %183 = vmatprep.subr.mxu0 0.0
    %184 = vmatpush2.msra.mxu0 0.0
    %185 = vmatprep.subr.mxu0 0.0
    %186 = vmatpush2.msra.mxu0 0.0
    %187 = vmatprep.subr.mxu0 0.0
    %188 = vmatpush2.msra.mxu0 0.0
    %189 = vmatprep.subr.mxu0 0.0
    %190 = vmatpush2.msra.mxu0 0.0
    %191 = vmatprep.subr.mxu0 0.0
    %192 = vmatpush2.msra.mxu0 0.0
    %193 = vmatprep.mubr.f32.mxu0 0.0
    %194 = vmatmul.mubr.f32.gmra.mxu0 %v124
    %v195 = vpop.f32.mrf.mxu0
    %v196 = vadd.f32 %v121, %v195
    %v197 = vpop.f32.mrf.mxu0
    %198 = vmatprep.mubr.f32.mxu0 0.0
    %199 = vmatmul.mubr.f32.gmra.mxu0 %v127
    %v200 = vpop.f32.mrf.mxu0
    %v201 = vadd.f32 %v121, %v200
    %v202 = vpop.f32.mrf.mxu0
    %203 = vdwg.mxu0
    %205 = vrot.lane.b32.xlu0 %v196, 96
    %v206 = vpop.permute.xlu0 %205
    %vm207 = vcmask 64512
    %v208 = vsel %vm207, %v196, 0
    %v210 = vsel %vm207, %v206, 0
    %212 = vmatprep.subr.mxu0 0.0
    %213 = vmatpush1.xpose.msra.mxu0 0.0
    %214 = vmatprep.subr.mxu0 0.0
    %215 = vmatpush1.xpose.msra.mxu0 0.0
    %216 = vmatprep.subr.mxu0 0.0
    %217 = vmatpush1.xpose.msra.mxu0 0.0
    %218 = vmatprep.subr.mxu0 0.0
    %219 = vmatpush1.xpose.msra.mxu0 0.0
    %220 = vmatprep.subr.mxu0 0.0
    %221 = vmatpush1.xpose.msra.mxu0 0.0
    %222 = vmatprep.subr.mxu0 0.0
    %223 = vmatpush1.xpose.msra.mxu0 0.0
    %224 = vmatprep.subr.mxu0 0.0
    %225 = vmatpush1.xpose.msra.mxu0 0.0
    %226 = vmatprep.subr.mxu0 0.0
    %227 = vmatpush1.xpose.msra.mxu0 0.0
    %228 = vmatprep.subr.mxu0 0.0
    %229 = vmatpush1.xpose.msra.mxu0 0.0
    %230 = vmatprep.subr.mxu0 0.0
    %231 = vmatpush1.xpose.msra.mxu0 0.0
    %232 = vmatprep.subr.mxu0 0.0
    %233 = vmatpush1.xpose.msra.mxu0 0.0
    %234 = vmatprep.subr.mxu0 0.0
    %235 = vmatpush1.xpose.msra.mxu0 0.0
    %236 = vmatprep.subr.mxu0 0.0
    %237 = vmatpush1.xpose.msra.mxu0 0.0
    %238 = vmatprep.subr.mxu0 0.0
    %239 = vmatpush1.xpose.msra.mxu0 0.0
    %240 = vmatprep.subr.mxu0 0.0
    %241 = vmatpush1.xpose.msra.mxu0 0.0
    %242 = vmatprep.subr.mxu0 0.0
    %243 = vmatpush1.xpose.msra.mxu0 %v210
    %244 = vmatprep.subr.mxu0 0.0
    %245 = vmatpush2.xpose.msra.mxu0 0.0
    %246 = vmatprep.subr.mxu0 0.0
    %247 = vmatpush2.xpose.msra.mxu0 0.0
    %248 = vmatprep.subr.mxu0 0.0
    %249 = vmatpush2.xpose.msra.mxu0 0.0
    %250 = vmatprep.subr.mxu0 0.0
    %251 = vmatpush2.xpose.msra.mxu0 0.0
    %252 = vmatprep.subr.mxu0 0.0
    %253 = vmatpush2.xpose.msra.mxu0 0.0
    %254 = vmatprep.subr.mxu0 0.0
    %255 = vmatpush2.xpose.msra.mxu0 0.0
    %256 = vmatprep.subr.mxu0 0.0
    %257 = vmatpush2.xpose.msra.mxu0 0.0
    %258 = vmatprep.subr.mxu0 0.0
    %259 = vmatpush2.xpose.msra.mxu0 0.0
    %260 = vmatprep.subr.mxu0 0.0
    %261 = vmatpush2.xpose.msra.mxu0 0.0
    %262 = vmatprep.subr.mxu0 0.0
    %263 = vmatpush2.xpose.msra.mxu0 0.0
    %264 = vmatprep.subr.mxu0 0.0
    %265 = vmatpush2.xpose.msra.mxu0 0.0
    %266 = vmatprep.subr.mxu0 0.0
    %267 = vmatpush2.xpose.msra.mxu0 0.0
    %268 = vmatprep.subr.mxu0 0.0
    %269 = vmatpush2.xpose.msra.mxu0 0.0
    %270 = vmatprep.subr.mxu0 0.0
    %271 = vmatpush2.xpose.msra.mxu0 0.0
    %272 = vmatprep.subr.mxu0 0.0
    %273 = vmatpush2.xpose.msra.mxu0 0.0
    %274 = vmatprep.subr.mxu0 0.0
    %275 = vmatpush2.xpose.msra.mxu0 0.0
    %276 = vmatprep.mubr.f32.mxu0 0.0
    %277 = vmatmul.mubr.f32.gmra.mxu0 %v208
    %v278 = vpop.f32.mrf.mxu0
    %v279 = vadd.f32 %v65, %v278
    %v280 = vpop.f32.mrf.mxu0
    %281 = vdwg.mxu0
    %283 = vrot.lane.b32.xlu0 %v201, 96
    %v284 = vpop.permute.xlu0 %283
    %v285 = vsel %vm207, %v201, 0
    %v287 = vsel %vm207, %v284, 0
    %289 = vmatprep.subr.mxu0 0.0
    %290 = vmatpush1.xpose.msra.mxu0 0.0
    %291 = vmatprep.subr.mxu0 0.0
    %292 = vmatpush1.xpose.msra.mxu0 0.0
    %293 = vmatprep.subr.mxu0 0.0
    %294 = vmatpush1.xpose.msra.mxu0 0.0
    %295 = vmatprep.subr.mxu0 0.0
    %296 = vmatpush1.xpose.msra.mxu0 0.0
    %297 = vmatprep.subr.mxu0 0.0
    %298 = vmatpush1.xpose.msra.mxu0 0.0
    %299 = vmatprep.subr.mxu0 0.0
    %300 = vmatpush1.xpose.msra.mxu0 0.0
    %301 = vmatprep.subr.mxu0 0.0
    %302 = vmatpush1.xpose.msra.mxu0 0.0
    %303 = vmatprep.subr.mxu0 0.0
    %304 = vmatpush1.xpose.msra.mxu0 0.0
    %305 = vmatprep.subr.mxu0 0.0
    %306 = vmatpush1.xpose.msra.mxu0 0.0
    %307 = vmatprep.subr.mxu0 0.0
    %308 = vmatpush1.xpose.msra.mxu0 0.0
    %309 = vmatprep.subr.mxu0 0.0
    %310 = vmatpush1.xpose.msra.mxu0 0.0
    %311 = vmatprep.subr.mxu0 0.0
    %312 = vmatpush1.xpose.msra.mxu0 0.0
    %313 = vmatprep.subr.mxu0 0.0
    %314 = vmatpush1.xpose.msra.mxu0 0.0
    %315 = vmatprep.subr.mxu0 0.0
    %316 = vmatpush1.xpose.msra.mxu0 0.0
    %317 = vmatprep.subr.mxu0 0.0
    %318 = vmatpush1.xpose.msra.mxu0 0.0
    %319 = vmatprep.subr.mxu0 0.0
    %320 = vmatpush1.xpose.msra.mxu0 %v287
    %321 = vmatprep.subr.mxu0 0.0
    %322 = vmatpush2.xpose.msra.mxu0 0.0
    %323 = vmatprep.subr.mxu0 0.0
    %324 = vmatpush2.xpose.msra.mxu0 0.0
    %325 = vmatprep.subr.mxu0 0.0
    %326 = vmatpush2.xpose.msra.mxu0 0.0
    %327 = vmatprep.subr.mxu0 0.0
    %328 = vmatpush2.xpose.msra.mxu0 0.0
    %329 = vmatprep.subr.mxu0 0.0
    %330 = vmatpush2.xpose.msra.mxu0 0.0
    %331 = vmatprep.subr.mxu0 0.0
    %332 = vmatpush2.xpose.msra.mxu0 0.0
    %333 = vmatprep.subr.mxu0 0.0
    %334 = vmatpush2.xpose.msra.mxu0 0.0
    %335 = vmatprep.subr.mxu0 0.0
    %336 = vmatpush2.xpose.msra.mxu0 0.0
    %337 = vmatprep.subr.mxu0 0.0
    %338 = vmatpush2.xpose.msra.mxu0 0.0
    %339 = vmatprep.subr.mxu0 0.0
    %340 = vmatpush2.xpose.msra.mxu0 0.0
    %341 = vmatprep.subr.mxu0 0.0
    %342 = vmatpush2.xpose.msra.mxu0 0.0
    %343 = vmatprep.subr.mxu0 0.0
    %344 = vmatpush2.xpose.msra.mxu0 0.0
    %345 = vmatprep.subr.mxu0 0.0
    %346 = vmatpush2.xpose.msra.mxu0 0.0
    %347 = vmatprep.subr.mxu0 0.0
    %348 = vmatpush2.xpose.msra.mxu0 0.0
    %349 = vmatprep.subr.mxu0 0.0
    %350 = vmatpush2.xpose.msra.mxu0 0.0
    %351 = vmatprep.subr.mxu0 0.0
    %352 = vmatpush2.xpose.msra.mxu0 0.0
    %353 = vmatprep.mubr.f32.mxu0 0.0
    %354 = vmatmul.mubr.f32.gmra.mxu0 %v285
    %v355 = vpop.f32.mrf.mxu0
    %v356 = vadd.f32 %v65, %v355
    %v357 = vpop.f32.mrf.mxu0
    %358 = vdwg.mxu0
    %v359 = vsel %vm207, %v279, -inf
    %360 = vmax.xlane.f32.xlu0 %v359
    %v361 = vpop.xlane.xlu0 %360
    %v362 = vsel %vm207, %v356, -inf
    %363 = vmax.xlane.f32.xlu0 %v362
    %v364 = vpop.xlane.xlu0 %363
    %v365 = vsub.f32 %v279, %v361
    %v366 = vsub.f32 %v356, %v364
    %v367 = vmul.f32 %v365, 1.442695
    %v368 = vpow.pop %v367
    %v369 = vmul.f32 %v366, 1.442695
    %v370 = vpow.pop %v369
    %v371 = vsel %vm207, %v368, 0.0
    %372 = vadd.xlane.f32.xlu0 %v371
    %v373 = vpop.xlane.xlu0 %372
    %v374 = vsel %vm207, %v370, 0.0
    %375 = vadd.xlane.f32.xlu0 %v374
    %v376 = vpop.xlane.xlu0 %375
    %v377 = vrcp.pop %v373
    %v378 = vrcp.pop %v376
    %v379 = vmul.f32 %v368, %v377
    %v380 = vmul.f32 %v370, %v378
    %381 = vrot.lane.b32.xlu0 %v196, 64
    %v382 = vpop.permute.xlu0 %381
    %v385 = vsel %vm207, %v379, 0
    %387 = vmatprep.subr.mxu0 0.0
    %388 = vmatpush1.msra.mxu0 0.0
    %389 = vmatprep.subr.mxu0 0.0
    %390 = vmatpush1.msra.mxu0 0.0
    %391 = vmatprep.subr.mxu0 0.0
    %392 = vmatpush1.msra.mxu0 0.0
    %393 = vmatprep.subr.mxu0 0.0
    %394 = vmatpush1.msra.mxu0 0.0
    %395 = vmatprep.subr.mxu0 0.0
    %396 = vmatpush1.msra.mxu0 0.0
    %397 = vmatprep.subr.mxu0 0.0
    %398 = vmatpush1.msra.mxu0 0.0
    %399 = vmatprep.subr.mxu0 0.0
    %400 = vmatpush1.msra.mxu0 0.0
    %401 = vmatprep.subr.mxu0 0.0
    %402 = vmatpush1.msra.mxu0 0.0
    %403 = vmatprep.subr.mxu0 0.0
    %404 = vmatpush1.msra.mxu0 0.0
    %405 = vmatprep.subr.mxu0 0.0
    %406 = vmatpush1.msra.mxu0 0.0
    %407 = vmatprep.subr.mxu0 0.0
    %408 = vmatpush1.msra.mxu0 0.0
    %409 = vmatprep.subr.mxu0 0.0
    %410 = vmatpush1.msra.mxu0 0.0
    %411 = vmatprep.subr.mxu0 0.0
    %412 = vmatpush1.msra.mxu0 0.0
    %413 = vmatprep.subr.mxu0 0.0
    %414 = vmatpush1.msra.mxu0 0.0
    %415 = vmatprep.subr.mxu0 0.0
    %416 = vmatpush1.msra.mxu0 0.0
    %417 = vmatprep.subr.mxu0 0.0
    %418 = vmatpush1.msra.mxu0 %v382
    %419 = vmatprep.subr.mxu0 0.0
    %420 = vmatpush2.msra.mxu0 0.0
    %421 = vmatprep.subr.mxu0 0.0
    %422 = vmatpush2.msra.mxu0 0.0
    %423 = vmatprep.subr.mxu0 0.0
    %424 = vmatpush2.msra.mxu0 0.0
    %425 = vmatprep.subr.mxu0 0.0
    %426 = vmatpush2.msra.mxu0 0.0
    %427 = vmatprep.subr.mxu0 0.0
    %428 = vmatpush2.msra.mxu0 0.0
    %429 = vmatprep.subr.mxu0 0.0
    %430 = vmatpush2.msra.mxu0 0.0
    %431 = vmatprep.subr.mxu0 0.0
    %432 = vmatpush2.msra.mxu0 0.0
    %433 = vmatprep.subr.mxu0 0.0
    %434 = vmatpush2.msra.mxu0 0.0
    %435 = vmatprep.subr.mxu0 0.0
    %436 = vmatpush2.msra.mxu0 0.0
    %437 = vmatprep.subr.mxu0 0.0
    %438 = vmatpush2.msra.mxu0 0.0
    %439 = vmatprep.subr.mxu0 0.0
    %440 = vmatpush2.msra.mxu0 0.0
    %441 = vmatprep.subr.mxu0 0.0
    %442 = vmatpush2.msra.mxu0 0.0
    %443 = vmatprep.subr.mxu0 0.0
    %444 = vmatpush2.msra.mxu0 0.0
    %445 = vmatprep.subr.mxu0 0.0
    %446 = vmatpush2.msra.mxu0 0.0
    %447 = vmatprep.subr.mxu0 0.0
    %448 = vmatpush2.msra.mxu0 0.0
    %449 = vmatprep.subr.mxu0 0.0
    %450 = vmatpush2.msra.mxu0 0.0
    %451 = vmatprep.mubr.f32.mxu0 0.0
    %452 = vmatmul.mubr.f32.gmra.mxu0 %v385
    %v453 = vpop.f32.mrf.mxu0
    %v454 = vadd.f32 0.0, %v453
    %v455 = vpop.f32.mrf.mxu0
    %456 = vdwg.mxu0
    %457 = vrot.lane.b32.xlu0 %v201, 64
    %v458 = vpop.permute.xlu0 %457
    %v461 = vsel %vm207, %v380, 0
    %463 = vmatprep.subr.mxu0 0.0
    %464 = vmatpush1.msra.mxu0 0.0
    %465 = vmatprep.subr.mxu0 0.0
    %466 = vmatpush1.msra.mxu0 0.0
    %467 = vmatprep.subr.mxu0 0.0
    %468 = vmatpush1.msra.mxu0 0.0
    %469 = vmatprep.subr.mxu0 0.0
    %470 = vmatpush1.msra.mxu0 0.0
    %471 = vmatprep.subr.mxu0 0.0
    %472 = vmatpush1.msra.mxu0 0.0
    %473 = vmatprep.subr.mxu0 0.0
    %474 = vmatpush1.msra.mxu0 0.0
    %475 = vmatprep.subr.mxu0 0.0
    %476 = vmatpush1.msra.mxu0 0.0
    %477 = vmatprep.subr.mxu0 0.0
    %478 = vmatpush1.msra.mxu0 0.0
    %479 = vmatprep.subr.mxu0 0.0
    %480 = vmatpush1.msra.mxu0 0.0
    %481 = vmatprep.subr.mxu0 0.0
    %482 = vmatpush1.msra.mxu0 0.0
    %483 = vmatprep.subr.mxu0 0.0
    %484 = vmatpush1.msra.mxu0 0.0
    %485 = vmatprep.subr.mxu0 0.0
    %486 = vmatpush1.msra.mxu0 0.0
    %487 = vmatprep.subr.mxu0 0.0
    %488 = vmatpush1.msra.mxu0 0.0
    %489 = vmatprep.subr.mxu0 0.0
    %490 = vmatpush1.msra.mxu0 0.0
    %491 = vmatprep.subr.mxu0 0.0
    %492 = vmatpush1.msra.mxu0 0.0
    %493 = vmatprep.subr.mxu0 0.0
    %494 = vmatpush1.msra.mxu0 %v458
    %495 = vmatprep.subr.mxu0 0.0
    %496 = vmatpush2.msra.mxu0 0.0
    %497 = vmatprep.subr.mxu0 0.0
    %498 = vmatpush2.msra.mxu0 0.0
    %499 = vmatprep.subr.mxu0 0.0
    %500 = vmatpush2.msra.mxu0 0.0
    %501 = vmatprep.subr.mxu0 0.0
    %502 = vmatpush2.msra.mxu0 0.0
    %503 = vmatprep.subr.mxu0 0.0
    %504 = vmatpush2.msra.mxu0 0.0
    %505 = vmatprep.subr.mxu0 0.0
    %506 = vmatpush2.msra.mxu0 0.0
    %507 = vmatprep.subr.mxu0 0.0
    %508 = vmatpush2.msra.mxu0 0.0
    %509 = vmatprep.subr.mxu0 0.0
    %510 = vmatpush2.msra.mxu0 0.0
    %511 = vmatprep.subr.mxu0 0.0
    %512 = vmatpush2.msra.mxu0 0.0
    %513 = vmatprep.subr.mxu0 0.0
    %514 = vmatpush2.msra.mxu0 0.0
    %515 = vmatprep.subr.mxu0 0.0
    %516 = vmatpush2.msra.mxu0 0.0
    %517 = vmatprep.subr.mxu0 0.0
    %518 = vmatpush2.msra.mxu0 0.0
    %519 = vmatprep.subr.mxu0 0.0
    %520 = vmatpush2.msra.mxu0 0.0
    %521 = vmatprep.subr.mxu0 0.0
    %522 = vmatpush2.msra.mxu0 0.0
    %523 = vmatprep.subr.mxu0 0.0
    %524 = vmatpush2.msra.mxu0 0.0
    %525 = vmatprep.subr.mxu0 0.0
    %526 = vmatpush2.msra.mxu0 0.0
    %527 = vmatprep.mubr.f32.mxu0 0.0
    %528 = vmatmul.mubr.f32.gmra.mxu0 %v461
    %v529 = vpop.f32.mrf.mxu0
    %v530 = vadd.f32 0.0, %v529
    %v531 = vpop.f32.mrf.mxu0
    %532 = vdwg.mxu0
    %533 = vst.msk [vmem:[#allocation2] sm:$0xff] %vm207, %v454
    %534 = vst.msk [vmem:[#allocation2 + $0x8] sm:$0xff] %vm207, %v530
    %535 = vrot.lane.b32.xlu0 %v196, 120
    %v536 = vpop.permute.xlu0 %535
    %537 = vrot.lane.b32.xlu0 %v196, 88
    %v538 = vpop.permute.xlu0 %537
    %v539 = vsel %vm207, %v536, 0
    %v541 = vsel %vm207, %v538, 0
    %543 = vmatprep.subr.mxu0 0.0
    %544 = vmatpush1.xpose.msra.mxu0 0.0
    %545 = vmatprep.subr.mxu0 0.0
    %546 = vmatpush1.xpose.msra.mxu0 0.0
    %547 = vmatprep.subr.mxu0 0.0
    %548 = vmatpush1.xpose.msra.mxu0 0.0
    %549 = vmatprep.subr.mxu0 0.0
    %550 = vmatpush1.xpose.msra.mxu0 0.0
    %551 = vmatprep.subr.mxu0 0.0
    %552 = vmatpush1.xpose.msra.mxu0 0.0
    %553 = vmatprep.subr.mxu0 0.0
    %554 = vmatpush1.xpose.msra.mxu0 0.0
    %555 = vmatprep.subr.mxu0 0.0
    %556 = vmatpush1.xpose.msra.mxu0 0.0
    %557 = vmatprep.subr.mxu0 0.0
    %558 = vmatpush1.xpose.msra.mxu0 0.0
    %559 = vmatprep.subr.mxu0 0.0
    %560 = vmatpush1.xpose.msra.mxu0 0.0
    %561 = vmatprep.subr.mxu0 0.0
    %562 = vmatpush1.xpose.msra.mxu0 0.0
    %563 = vmatprep.subr.mxu0 0.0
    %564 = vmatpush1.xpose.msra.mxu0 0.0
    %565 = vmatprep.subr.mxu0 0.0
    %566 = vmatpush1.xpose.msra.mxu0 0.0
    %567 = vmatprep.subr.mxu0 0.0
    %568 = vmatpush1.xpose.msra.mxu0 0.0
    %569 = vmatprep.subr.mxu0 0.0
    %570 = vmatpush1.xpose.msra.mxu0 0.0
    %571 = vmatprep.subr.mxu0 0.0
    %572 = vmatpush1.xpose.msra.mxu0 0.0
    %573 = vmatprep.subr.mxu0 0.0
    %574 = vmatpush1.xpose.msra.mxu0 %v541
    %575 = vmatprep.subr.mxu0 0.0
    %576 = vmatpush2.xpose.msra.mxu0 0.0
    %577 = vmatprep.subr.mxu0 0.0
    %578 = vmatpush2.xpose.msra.mxu0 0.0
    %579 = vmatprep.subr.mxu0 0.0
    %580 = vmatpush2.xpose.msra.mxu0 0.0
    %581 = vmatprep.subr.mxu0 0.0
    %582 = vmatpush2.xpose.msra.mxu0 0.0
    %583 = vmatprep.subr.mxu0 0.0
    %584 = vmatpush2.xpose.msra.mxu0 0.0
    %585 = vmatprep.subr.mxu0 0.0
    %586 = vmatpush2.xpose.msra.mxu0 0.0
    %587 = vmatprep.subr.mxu0 0.0
    %588 = vmatpush2.xpose.msra.mxu0 0.0
    %589 = vmatprep.subr.mxu0 0.0
    %590 = vmatpush2.xpose.msra.mxu0 0.0
    %591 = vmatprep.subr.mxu0 0.0
    %592 = vmatpush2.xpose.msra.mxu0 0.0
    %593 = vmatprep.subr.mxu0 0.0
    %594 = vmatpush2.xpose.msra.mxu0 0.0
    %595 = vmatprep.subr.mxu0 0.0
    %596 = vmatpush2.xpose.msra.mxu0 0.0
    %597 = vmatprep.subr.mxu0 0.0
    %598 = vmatpush2.xpose.msra.mxu0 0.0
    %599 = vmatprep.subr.mxu0 0.0
    %600 = vmatpush2.xpose.msra.mxu0 0.0
    %601 = vmatprep.subr.mxu0 0.0
    %602 = vmatpush2.xpose.msra.mxu0 0.0
    %603 = vmatprep.subr.mxu0 0.0
    %604 = vmatpush2.xpose.msra.mxu0 0.0
    %605 = vmatprep.subr.mxu0 0.0
    %606 = vmatpush2.xpose.msra.mxu0 0.0
    %607 = vmatprep.mubr.f32.mxu0 0.0
    %608 = vmatmul.mubr.f32.gmra.mxu0 %v539
    %v609 = vpop.f32.mrf.mxu0
    %v610 = vadd.f32 %v65, %v609
    %v611 = vpop.f32.mrf.mxu0
    %612 = vdwg.mxu0
    %613 = vrot.lane.b32.xlu0 %v201, 120
    %v614 = vpop.permute.xlu0 %613
    %615 = vrot.lane.b32.xlu0 %v201, 88
    %v616 = vpop.permute.xlu0 %615
    %v617 = vsel %vm207, %v614, 0
    %v619 = vsel %vm207, %v616, 0
    %621 = vmatprep.subr.mxu0 0.0
    %622 = vmatpush1.xpose.msra.mxu0 0.0
    %623 = vmatprep.subr.mxu0 0.0
    %624 = vmatpush1.xpose.msra.mxu0 0.0
    %625 = vmatprep.subr.mxu0 0.0
    %626 = vmatpush1.xpose.msra.mxu0 0.0
    %627 = vmatprep.subr.mxu0 0.0
    %628 = vmatpush1.xpose.msra.mxu0 0.0
    %629 = vmatprep.subr.mxu0 0.0
    %630 = vmatpush1.xpose.msra.mxu0 0.0
    %631 = vmatprep.subr.mxu0 0.0
    %632 = vmatpush1.xpose.msra.mxu0 0.0
    %633 = vmatprep.subr.mxu0 0.0
    %634 = vmatpush1.xpose.msra.mxu0 0.0
    %635 = vmatprep.subr.mxu0 0.0
    %636 = vmatpush1.xpose.msra.mxu0 0.0
    %637 = vmatprep.subr.mxu0 0.0
    %638 = vmatpush1.xpose.msra.mxu0 0.0
    %639 = vmatprep.subr.mxu0 0.0
    %640 = vmatpush1.xpose.msra.mxu0 0.0
    %641 = vmatprep.subr.mxu0 0.0
    %642 = vmatpush1.xpose.msra.mxu0 0.0
    %643 = vmatprep.subr.mxu0 0.0
    %644 = vmatpush1.xpose.msra.mxu0 0.0
    %645 = vmatprep.subr.mxu0 0.0
    %646 = vmatpush1.xpose.msra.mxu0 0.0
    %647 = vmatprep.subr.mxu0 0.0
    %648 = vmatpush1.xpose.msra.mxu0 0.0
    %649 = vmatprep.subr.mxu0 0.0
    %650 = vmatpush1.xpose.msra.mxu0 0.0
    %651 = vmatprep.subr.mxu0 0.0
    %652 = vmatpush1.xpose.msra.mxu0 %v619
    %653 = vmatprep.subr.mxu0 0.0
    %654 = vmatpush2.xpose.msra.mxu0 0.0
    %655 = vmatprep.subr.mxu0 0.0
    %656 = vmatpush2.xpose.msra.mxu0 0.0
    %657 = vmatprep.subr.mxu0 0.0
    %658 = vmatpush2.xpose.msra.mxu0 0.0
    %659 = vmatprep.subr.mxu0 0.0
    %660 = vmatpush2.xpose.msra.mxu0 0.0
    %661 = vmatprep.subr.mxu0 0.0
    %662 = vmatpush2.xpose.msra.mxu0 0.0
    %663 = vmatprep.subr.mxu0 0.0
    %664 = vmatpush2.xpose.msra.mxu0 0.0
    %665 = vmatprep.subr.mxu0 0.0
    %666 = vmatpush2.xpose.msra.mxu0 0.0
    %667 = vmatprep.subr.mxu0 0.0
    %668 = vmatpush2.xpose.msra.mxu0 0.0
    %669 = vmatprep.subr.mxu0 0.0
    %670 = vmatpush2.xpose.msra.mxu0 0.0
    %671 = vmatprep.subr.mxu0 0.0
    %672 = vmatpush2.xpose.msra.mxu0 0.0
    %673 = vmatprep.subr.mxu0 0.0
    %674 = vmatpush2.xpose.msra.mxu0 0.0
    %675 = vmatprep.subr.mxu0 0.0
    %676 = vmatpush2.xpose.msra.mxu0 0.0
    %677 = vmatprep.subr.mxu0 0.0
    %678 = vmatpush2.xpose.msra.mxu0 0.0
    %679 = vmatprep.subr.mxu0 0.0
    %680 = vmatpush2.xpose.msra.mxu0 0.0
    %681 = vmatprep.subr.mxu0 0.0
    %682 = vmatpush2.xpose.msra.mxu0 0.0
    %683 = vmatprep.subr.mxu0 0.0
    %684 = vmatpush2.xpose.msra.mxu0 0.0
    %685 = vmatprep.mubr.f32.mxu0 0.0
    %686 = vmatmul.mubr.f32.gmra.mxu0 %v617
    %v687 = vpop.f32.mrf.mxu0
    %v688 = vadd.f32 %v65, %v687
    %v689 = vpop.f32.mrf.mxu0
    %690 = vdwg.mxu0
    %v691 = vsel %vm207, %v610, -inf
    %692 = vmax.xlane.f32.xlu0 %v691
    %v693 = vpop.xlane.xlu0 %692
    %v694 = vsel %vm207, %v688, -inf
    %695 = vmax.xlane.f32.xlu0 %v694
    %v696 = vpop.xlane.xlu0 %695
    %v697 = vsub.f32 %v610, %v693
    %v698 = vsub.f32 %v688, %v696
    %v699 = vmul.f32 %v697, 1.442695
    %v700 = vpow.pop %v699
    %v701 = vmul.f32 %v698, 1.442695
    %v702 = vpow.pop %v701
    %v703 = vsel %vm207, %v700, 0.0
    %704 = vadd.xlane.f32.xlu0 %v703
    %v705 = vpop.xlane.xlu0 %704
    %v706 = vsel %vm207, %v702, 0.0
    %707 = vadd.xlane.f32.xlu0 %v706
    %v708 = vpop.xlane.xlu0 %707
    %v709 = vrcp.pop %v705
    %v710 = vrcp.pop %v708
    %v711 = vmul.f32 %v700, %v709
    %v712 = vmul.f32 %v702, %v710
    %713 = vrot.lane.b32.xlu0 %v196, 56
    %v714 = vpop.permute.xlu0 %713
    %v717 = vsel %vm207, %v711, 0
    %719 = vmatprep.subr.mxu0 0.0
    %720 = vmatpush1.msra.mxu0 0.0
    %721 = vmatprep.subr.mxu0 0.0
    %722 = vmatpush1.msra.mxu0 0.0
    %723 = vmatprep.subr.mxu0 0.0
    %724 = vmatpush1.msra.mxu0 0.0
    %725 = vmatprep.subr.mxu0 0.0
    %726 = vmatpush1.msra.mxu0 0.0
    %727 = vmatprep.subr.mxu0 0.0
    %728 = vmatpush1.msra.mxu0 0.0
    %729 = vmatprep.subr.mxu0 0.0
    %730 = vmatpush1.msra.mxu0 0.0
    %731 = vmatprep.subr.mxu0 0.0
    %732 = vmatpush1.msra.mxu0 0.0
    %733 = vmatprep.subr.mxu0 0.0
    %734 = vmatpush1.msra.mxu0 0.0
    %735 = vmatprep.subr.mxu0 0.0
    %736 = vmatpush1.msra.mxu0 0.0
    %737 = vmatprep.subr.mxu0 0.0
    %738 = vmatpush1.msra.mxu0 0.0
    %739 = vmatprep.subr.mxu0 0.0
    %740 = vmatpush1.msra.mxu0 0.0
    %741 = vmatprep.subr.mxu0 0.0
    %742 = vmatpush1.msra.mxu0 0.0
    %743 = vmatprep.subr.mxu0 0.0
    %744 = vmatpush1.msra.mxu0 0.0
    %745 = vmatprep.subr.mxu0 0.0
    %746 = vmatpush1.msra.mxu0 0.0
    %747 = vmatprep.subr.mxu0 0.0
    %748 = vmatpush1.msra.mxu0 0.0
    %749 = vmatprep.subr.mxu0 0.0
    %750 = vmatpush1.msra.mxu0 %v714
    %751 = vmatprep.subr.mxu0 0.0
    %752 = vmatpush2.msra.mxu0 0.0
    %753 = vmatprep.subr.mxu0 0.0
    %754 = vmatpush2.msra.mxu0 0.0
    %755 = vmatprep.subr.mxu0 0.0
    %756 = vmatpush2.msra.mxu0 0.0
    %757 = vmatprep.subr.mxu0 0.0
    %758 = vmatpush2.msra.mxu0 0.0
    %759 = vmatprep.subr.mxu0 0.0
    %760 = vmatpush2.msra.mxu0 0.0
    %761 = vmatprep.subr.mxu0 0.0
    %762 = vmatpush2.msra.mxu0 0.0
    %763 = vmatprep.subr.mxu0 0.0
    %764 = vmatpush2.msra.mxu0 0.0
    %765 = vmatprep.subr.mxu0 0.0
    %766 = vmatpush2.msra.mxu0 0.0
    %767 = vmatprep.subr.mxu0 0.0
    %768 = vmatpush2.msra.mxu0 0.0
    %769 = vmatprep.subr.mxu0 0.0
    %770 = vmatpush2.msra.mxu0 0.0
    %771 = vmatprep.subr.mxu0 0.0
    %772 = vmatpush2.msra.mxu0 0.0
    %773 = vmatprep.subr.mxu0 0.0
    %774 = vmatpush2.msra.mxu0 0.0
    %775 = vmatprep.subr.mxu0 0.0
    %776 = vmatpush2.msra.mxu0 0.0
    %777 = vmatprep.subr.mxu0 0.0
    %778 = vmatpush2.msra.mxu0 0.0
    %779 = vmatprep.subr.mxu0 0.0
    %780 = vmatpush2.msra.mxu0 0.0
    %781 = vmatprep.subr.mxu0 0.0
    %782 = vmatpush2.msra.mxu0 0.0
    %783 = vmatprep.mubr.f32.mxu0 0.0
    %784 = vmatmul.mubr.f32.gmra.mxu0 %v717
    %v785 = vpop.f32.mrf.mxu0
    %v786 = vadd.f32 0.0, %v785
    %v787 = vpop.f32.mrf.mxu0
    %788 = vdwg.mxu0
    %789 = vrot.lane.b32.xlu0 %v201, 56
    %v790 = vpop.permute.xlu0 %789
    %v793 = vsel %vm207, %v712, 0
    %795 = vmatprep.subr.mxu0 0.0
    %796 = vmatpush1.msra.mxu0 0.0
    %797 = vmatprep.subr.mxu0 0.0
    %798 = vmatpush1.msra.mxu0 0.0
    %799 = vmatprep.subr.mxu0 0.0
    %800 = vmatpush1.msra.mxu0 0.0
    %801 = vmatprep.subr.mxu0 0.0
    %802 = vmatpush1.msra.mxu0 0.0
    %803 = vmatprep.subr.mxu0 0.0
    %804 = vmatpush1.msra.mxu0 0.0
    %805 = vmatprep.subr.mxu0 0.0
    %806 = vmatpush1.msra.mxu0 0.0
    %807 = vmatprep.subr.mxu0 0.0
    %808 = vmatpush1.msra.mxu0 0.0
    %809 = vmatprep.subr.mxu0 0.0
    %810 = vmatpush1.msra.mxu0 0.0
    %811 = vmatprep.subr.mxu0 0.0
    %812 = vmatpush1.msra.mxu0 0.0
    %813 = vmatprep.subr.mxu0 0.0
    %814 = vmatpush1.msra.mxu0 0.0
    %815 = vmatprep.subr.mxu0 0.0
    %816 = vmatpush1.msra.mxu0 0.0
    %817 = vmatprep.subr.mxu0 0.0
    %818 = vmatpush1.msra.mxu0 0.0
    %819 = vmatprep.subr.mxu0 0.0
    %820 = vmatpush1.msra.mxu0 0.0
    %821 = vmatprep.subr.mxu0 0.0
    %822 = vmatpush1.msra.mxu0 0.0
    %823 = vmatprep.subr.mxu0 0.0
    %824 = vmatpush1.msra.mxu0 0.0
    %825 = vmatprep.subr.mxu0 0.0
    %826 = vmatpush1.msra.mxu0 %v790
    %827 = vmatprep.subr.mxu0 0.0
    %828 = vmatpush2.msra.mxu0 0.0
    %829 = vmatprep.subr.mxu0 0.0
    %830 = vmatpush2.msra.mxu0 0.0
    %831 = vmatprep.subr.mxu0 0.0
    %832 = vmatpush2.msra.mxu0 0.0
    %833 = vmatprep.subr.mxu0 0.0
    %834 = vmatpush2.msra.mxu0 0.0
    %835 = vmatprep.subr.mxu0 0.0
    %836 = vmatpush2.msra.mxu0 0.0
    %837 = vmatprep.subr.mxu0 0.0
    %838 = vmatpush2.msra.mxu0 0.0
    %839 = vmatprep.subr.mxu0 0.0
    %840 = vmatpush2.msra.mxu0 0.0
    %841 = vmatprep.subr.mxu0 0.0
    %842 = vmatpush2.msra.mxu0 0.0
    %843 = vmatprep.subr.mxu0 0.0
    %844 = vmatpush2.msra.mxu0 0.0
    %845 = vmatprep.subr.mxu0 0.0
    %846 = vmatpush2.msra.mxu0 0.0
    %847 = vmatprep.subr.mxu0 0.0
    %848 = vmatpush2.msra.mxu0 0.0
    %849 = vmatprep.subr.mxu0 0.0
    %850 = vmatpush2.msra.mxu0 0.0
    %851 = vmatprep.subr.mxu0 0.0
    %852 = vmatpush2.msra.mxu0 0.0
    %853 = vmatprep.subr.mxu0 0.0
    %854 = vmatpush2.msra.mxu0 0.0
    %855 = vmatprep.subr.mxu0 0.0
    %856 = vmatpush2.msra.mxu0 0.0
    %857 = vmatprep.subr.mxu0 0.0
    %858 = vmatpush2.msra.mxu0 0.0
    %859 = vmatprep.mubr.f32.mxu0 0.0
    %860 = vmatmul.mubr.f32.gmra.mxu0 %v793
    %v861 = vpop.f32.mrf.mxu0
    %v862 = vadd.f32 0.0, %v861
    %v863 = vpop.f32.mrf.mxu0
    %864 = vdwg.mxu0
    %867 = vrot.lane.b32.xlu0 %v786, 8
    %v868 = vpop.permute.xlu0 %867
    %869 = vrot.lane.b32.xlu0 %v862, 8
    %v870 = vpop.permute.xlu0 %869
    %vm873 = vcmask 130112
    %874 = vst.msk [vmem:[#allocation2] sm:$0xff] %vm873, %v868
    %875 = vst.msk [vmem:[#allocation2 + $0x8] sm:$0xff] %vm873, %v870
    %876 = vrot.lane.b32.xlu0 %v196, 112
    %v877 = vpop.permute.xlu0 %876
    %878 = vrot.lane.b32.xlu0 %v196, 80
    %v879 = vpop.permute.xlu0 %878
    %v880 = vsel %vm207, %v877, 0
    %v882 = vsel %vm207, %v879, 0
    %884 = vmatprep.subr.mxu0 0.0
    %885 = vmatpush1.xpose.msra.mxu0 0.0
    %886 = vmatprep.subr.mxu0 0.0
    %887 = vmatpush1.xpose.msra.mxu0 0.0
    %888 = vmatprep.subr.mxu0 0.0
    %889 = vmatpush1.xpose.msra.mxu0 0.0
    %890 = vmatprep.subr.mxu0 0.0
    %891 = vmatpush1.xpose.msra.mxu0 0.0
    %892 = vmatprep.subr.mxu0 0.0
    %893 = vmatpush1.xpose.msra.mxu0 0.0
    %894 = vmatprep.subr.mxu0 0.0
    %895 = vmatpush1.xpose.msra.mxu0 0.0
    %896 = vmatprep.subr.mxu0 0.0
    %897 = vmatpush1.xpose.msra.mxu0 0.0
    %898 = vmatprep.subr.mxu0 0.0
    %899 = vmatpush1.xpose.msra.mxu0 0.0
    %900 = vmatprep.subr.mxu0 0.0
    %901 = vmatpush1.xpose.msra.mxu0 0.0
    %902 = vmatprep.subr.mxu0 0.0
    %903 = vmatpush1.xpose.msra.mxu0 0.0
    %904 = vmatprep.subr.mxu0 0.0
    %905 = vmatpush1.xpose.msra.mxu0 0.0
    %906 = vmatprep.subr.mxu0 0.0
    %907 = vmatpush1.xpose.msra.mxu0 0.0
    %908 = vmatprep.subr.mxu0 0.0
    %909 = vmatpush1.xpose.msra.mxu0 0.0
    %910 = vmatprep.subr.mxu0 0.0
    %911 = vmatpush1.xpose.msra.mxu0 0.0
    %912 = vmatprep.subr.mxu0 0.0
    %913 = vmatpush1.xpose.msra.mxu0 0.0
    %914 = vmatprep.subr.mxu0 0.0
    %915 = vmatpush1.xpose.msra.mxu0 %v882
    %916 = vmatprep.subr.mxu0 0.0
    %917 = vmatpush2.xpose.msra.mxu0 0.0
    %918 = vmatprep.subr.mxu0 0.0
    %919 = vmatpush2.xpose.msra.mxu0 0.0
    %920 = vmatprep.subr.mxu0 0.0
    %921 = vmatpush2.xpose.msra.mxu0 0.0
    %922 = vmatprep.subr.mxu0 0.0
    %923 = vmatpush2.xpose.msra.mxu0 0.0
    %924 = vmatprep.subr.mxu0 0.0
    %925 = vmatpush2.xpose.msra.mxu0 0.0
    %926 = vmatprep.subr.mxu0 0.0
    %927 = vmatpush2.xpose.msra.mxu0 0.0
    %928 = vmatprep.subr.mxu0 0.0
    %929 = vmatpush2.xpose.msra.mxu0 0.0
    %930 = vmatprep.subr.mxu0 0.0
    %931 = vmatpush2.xpose.msra.mxu0 0.0
    %932 = vmatprep.subr.mxu0 0.0
    %933 = vmatpush2.xpose.msra.mxu0 0.0
    %934 = vmatprep.subr.mxu0 0.0
    %935 = vmatpush2.xpose.msra.mxu0 0.0
    %936 = vmatprep.subr.mxu0 0.0
    %937 = vmatpush2.xpose.msra.mxu0 0.0
    %938 = vmatprep.subr.mxu0 0.0
    %939 = vmatpush2.xpose.msra.mxu0 0.0
    %940 = vmatprep.subr.mxu0 0.0
    %941 = vmatpush2.xpose.msra.mxu0 0.0
    %942 = vmatprep.subr.mxu0 0.0
    %943 = vmatpush2.xpose.msra.mxu0 0.0
    %944 = vmatprep.subr.mxu0 0.0
    %945 = vmatpush2.xpose.msra.mxu0 0.0
    %946 = vmatprep.subr.mxu0 0.0
    %947 = vmatpush2.xpose.msra.mxu0 0.0
    %948 = vmatprep.mubr.f32.mxu0 0.0
    %949 = vmatmul.mubr.f32.gmra.mxu0 %v880
    %v950 = vpop.f32.mrf.mxu0
    %v951 = vadd.f32 %v65, %v950
    %v952 = vpop.f32.mrf.mxu0
    %953 = vdwg.mxu0
    %954 = vrot.lane.b32.xlu0 %v201, 112
    %v955 = vpop.permute.xlu0 %954
    %956 = vrot.lane.b32.xlu0 %v201, 80
    %v957 = vpop.permute.xlu0 %956
    %v958 = vsel %vm207, %v955, 0
    %v960 = vsel %vm207, %v957, 0
    %962 = vmatprep.subr.mxu0 0.0
    %963 = vmatpush1.xpose.msra.mxu0 0.0
    %964 = vmatprep.subr.mxu0 0.0
    %965 = vmatpush1.xpose.msra.mxu0 0.0
    %966 = vmatprep.subr.mxu0 0.0
    %967 = vmatpush1.xpose.msra.mxu0 0.0
    %968 = vmatprep.subr.mxu0 0.0
    %969 = vmatpush1.xpose.msra.mxu0 0.0
    %970 = vmatprep.subr.mxu0 0.0
    %971 = vmatpush1.xpose.msra.mxu0 0.0
    %972 = vmatprep.subr.mxu0 0.0
    %973 = vmatpush1.xpose.msra.mxu0 0.0
    %974 = vmatprep.subr.mxu0 0.0
    %975 = vmatpush1.xpose.msra.mxu0 0.0
    %976 = vmatprep.subr.mxu0 0.0
    %977 = vmatpush1.xpose.msra.mxu0 0.0
    %978 = vmatprep.subr.mxu0 0.0
    %979 = vmatpush1.xpose.msra.mxu0 0.0
    %980 = vmatprep.subr.mxu0 0.0
    %981 = vmatpush1.xpose.msra.mxu0 0.0
    %982 = vmatprep.subr.mxu0 0.0
    %983 = vmatpush1.xpose.msra.mxu0 0.0
    %984 = vmatprep.subr.mxu0 0.0
    %985 = vmatpush1.xpose.msra.mxu0 0.0
    %986 = vmatprep.subr.mxu0 0.0
    %987 = vmatpush1.xpose.msra.mxu0 0.0
    %988 = vmatprep.subr.mxu0 0.0
    %989 = vmatpush1.xpose.msra.mxu0 0.0
    %990 = vmatprep.subr.mxu0 0.0
    %991 = vmatpush1.xpose.msra.mxu0 0.0
    %992 = vmatprep.subr.mxu0 0.0
    %993 = vmatpush1.xpose.msra.mxu0 %v960
    %994 = vmatprep.subr.mxu0 0.0
    %995 = vmatpush2.xpose.msra.mxu0 0.0
    %996 = vmatprep.subr.mxu0 0.0
    %997 = vmatpush2.xpose.msra.mxu0 0.0
    %998 = vmatprep.subr.mxu0 0.0
    %999 = vmatpush2.xpose.msra.mxu0 0.0
    %1000 = vmatprep.subr.mxu0 0.0
    %1001 = vmatpush2.xpose.msra.mxu0 0.0
    %1002 = vmatprep.subr.mxu0 0.0
    %1003 = vmatpush2.xpose.msra.mxu0 0.0
    %1004 = vmatprep.subr.mxu0 0.0
    %1005 = vmatpush2.xpose.msra.mxu0 0.0
    %1006 = vmatprep.subr.mxu0 0.0
    %1007 = vmatpush2.xpose.msra.mxu0 0.0
    %1008 = vmatprep.subr.mxu0 0.0
    %1009 = vmatpush2.xpose.msra.mxu0 0.0
    %1010 = vmatprep.subr.mxu0 0.0
    %1011 = vmatpush2.xpose.msra.mxu0 0.0
    %1012 = vmatprep.subr.mxu0 0.0
    %1013 = vmatpush2.xpose.msra.mxu0 0.0
    %1014 = vmatprep.subr.mxu0 0.0
    %1015 = vmatpush2.xpose.msra.mxu0 0.0
    %1016 = vmatprep.subr.mxu0 0.0
    %1017 = vmatpush2.xpose.msra.mxu0 0.0
    %1018 = vmatprep.subr.mxu0 0.0
    %1019 = vmatpush2.xpose.msra.mxu0 0.0
    %1020 = vmatprep.subr.mxu0 0.0
    %1021 = vmatpush2.xpose.msra.mxu0 0.0
    %1022 = vmatprep.subr.mxu0 0.0
    %1023 = vmatpush2.xpose.msra.mxu0 0.0
    %1024 = vmatprep.subr.mxu0 0.0
    %1025 = vmatpush2.xpose.msra.mxu0 0.0
    %1026 = vmatprep.mubr.f32.mxu0 0.0
    %1027 = vmatmul.mubr.f32.gmra.mxu0 %v958
    %v1028 = vpop.f32.mrf.mxu0
    %v1029 = vadd.f32 %v65, %v1028
    %v1030 = vpop.f32.mrf.mxu0
    %1031 = vdwg.mxu0
    %v1032 = vsel %vm207, %v951, -inf
    %1033 = vmax.xlane.f32.xlu0 %v1032
    %v1034 = vpop.xlane.xlu0 %1033
    %v1035 = vsel %vm207, %v1029, -inf
    %1036 = vmax.xlane.f32.xlu0 %v1035
    %v1037 = vpop.xlane.xlu0 %1036
    %v1038 = vsub.f32 %v951, %v1034
    %v1039 = vsub.f32 %v1029, %v1037
    %v1040 = vmul.f32 %v1038, 1.442695
    %v1041 = vpow.pop %v1040
    %v1042 = vmul.f32 %v1039, 1.442695
    %v1043 = vpow.pop %v1042
    %v1044 = vsel %vm207, %v1041, 0.0
    %1045 = vadd.xlane.f32.xlu0 %v1044
    %v1046 = vpop.xlane.xlu0 %1045
    %v1047 = vsel %vm207, %v1043, 0.0
    %1048 = vadd.xlane.f32.xlu0 %v1047
    %v1049 = vpop.xlane.xlu0 %1048
    %v1050 = vrcp.pop %v1046
    %v1051 = vrcp.pop %v1049
    %v1052 = vmul.f32 %v1041, %v1050
    %v1053 = vmul.f32 %v1043, %v1051
    %1054 = vrot.lane.b32.xlu0 %v196, 48
    %v1055 = vpop.permute.xlu0 %1054
    %v1058 = vsel %vm207, %v1052, 0
    %1060 = vmatprep.subr.mxu0 0.0
    %1061 = vmatpush1.msra.mxu0 0.0
    %1062 = vmatprep.subr.mxu0 0.0
    %1063 = vmatpush1.msra.mxu0 0.0
    %1064 = vmatprep.subr.mxu0 0.0
    %1065 = vmatpush1.msra.mxu0 0.0
    %1066 = vmatprep.subr.mxu0 0.0
    %1067 = vmatpush1.msra.mxu0 0.0
    %1068 = vmatprep.subr.mxu0 0.0
    %1069 = vmatpush1.msra.mxu0 0.0
    %1070 = vmatprep.subr.mxu0 0.0
    %1071 = vmatpush1.msra.mxu0 0.0
    %1072 = vmatprep.subr.mxu0 0.0
    %1073 = vmatpush1.msra.mxu0 0.0
    %1074 = vmatprep.subr.mxu0 0.0
    %1075 = vmatpush1.msra.mxu0 0.0
    %1076 = vmatprep.subr.mxu0 0.0
    %1077 = vmatpush1.msra.mxu0 0.0
    %1078 = vmatprep.subr.mxu0 0.0
    %1079 = vmatpush1.msra.mxu0 0.0
    %1080 = vmatprep.subr.mxu0 0.0
    %1081 = vmatpush1.msra.mxu0 0.0
    %1082 = vmatprep.subr.mxu0 0.0
    %1083 = vmatpush1.msra.mxu0 0.0
    %1084 = vmatprep.subr.mxu0 0.0
    %1085 = vmatpush1.msra.mxu0 0.0
    %1086 = vmatprep.subr.mxu0 0.0
    %1087 = vmatpush1.msra.mxu0 0.0
    %1088 = vmatprep.subr.mxu0 0.0
    %1089 = vmatpush1.msra.mxu0 0.0
    %1090 = vmatprep.subr.mxu0 0.0
    %1091 = vmatpush1.msra.mxu0 %v1055
    %1092 = vmatprep.subr.mxu0 0.0
    %1093 = vmatpush2.msra.mxu0 0.0
    %1094 = vmatprep.subr.mxu0 0.0
    %1095 = vmatpush2.msra.mxu0 0.0
    %1096 = vmatprep.subr.mxu0 0.0
    %1097 = vmatpush2.msra.mxu0 0.0
    %1098 = vmatprep.subr.mxu0 0.0
    %1099 = vmatpush2.msra.mxu0 0.0
    %1100 = vmatprep.subr.mxu0 0.0
    %1101 = vmatpush2.msra.mxu0 0.0
    %1102 = vmatprep.subr.mxu0 0.0
    %1103 = vmatpush2.msra.mxu0 0.0
    %1104 = vmatprep.subr.mxu0 0.0
    %1105 = vmatpush2.msra.mxu0 0.0
    %1106 = vmatprep.subr.mxu0 0.0
    %1107 = vmatpush2.msra.mxu0 0.0
    %1108 = vmatprep.subr.mxu0 0.0
    %1109 = vmatpush2.msra.mxu0 0.0
    %1110 = vmatprep.subr.mxu0 0.0
    %1111 = vmatpush2.msra.mxu0 0.0
    %1112 = vmatprep.subr.mxu0 0.0
    %1113 = vmatpush2.msra.mxu0 0.0
    %1114 = vmatprep.subr.mxu0 0.0
    %1115 = vmatpush2.msra.mxu0 0.0
    %1116 = vmatprep.subr.mxu0 0.0
    %1117 = vmatpush2.msra.mxu0 0.0
    %1118 = vmatprep.subr.mxu0 0.0
    %1119 = vmatpush2.msra.mxu0 0.0
    %1120 = vmatprep.subr.mxu0 0.0
    %1121 = vmatpush2.msra.mxu0 0.0
    %1122 = vmatprep.subr.mxu0 0.0
    %1123 = vmatpush2.msra.mxu0 0.0
    %1124 = vmatprep.mubr.f32.mxu0 0.0
    %1125 = vmatmul.mubr.f32.gmra.mxu0 %v1058
    %v1126 = vpop.f32.mrf.mxu0
    %v1127 = vadd.f32 0.0, %v1126
    %v1128 = vpop.f32.mrf.mxu0
    %1129 = vdwg.mxu0
    %1130 = vrot.lane.b32.xlu0 %v201, 48
    %v1131 = vpop.permute.xlu0 %1130
    %v1134 = vsel %vm207, %v1053, 0
    %1136 = vmatprep.subr.mxu0 0.0
    %1137 = vmatpush1.msra.mxu0 0.0
    %1138 = vmatprep.subr.mxu0 0.0
    %1139 = vmatpush1.msra.mxu0 0.0
    %1140 = vmatprep.subr.mxu0 0.0
    %1141 = vmatpush1.msra.mxu0 0.0
    %1142 = vmatprep.subr.mxu0 0.0
    %1143 = vmatpush1.msra.mxu0 0.0
    %1144 = vmatprep.subr.mxu0 0.0
    %1145 = vmatpush1.msra.mxu0 0.0
    %1146 = vmatprep.subr.mxu0 0.0
    %1147 = vmatpush1.msra.mxu0 0.0
    %1148 = vmatprep.subr.mxu0 0.0
    %1149 = vmatpush1.msra.mxu0 0.0
    %1150 = vmatprep.subr.mxu0 0.0
    %1151 = vmatpush1.msra.mxu0 0.0
    %1152 = vmatprep.subr.mxu0 0.0
    %1153 = vmatpush1.msra.mxu0 0.0
    %1154 = vmatprep.subr.mxu0 0.0
    %1155 = vmatpush1.msra.mxu0 0.0
    %1156 = vmatprep.subr.mxu0 0.0
    %1157 = vmatpush1.msra.mxu0 0.0
    %1158 = vmatprep.subr.mxu0 0.0
    %1159 = vmatpush1.msra.mxu0 0.0
    %1160 = vmatprep.subr.mxu0 0.0
    %1161 = vmatpush1.msra.mxu0 0.0
    %1162 = vmatprep.subr.mxu0 0.0
    %1163 = vmatpush1.msra.mxu0 0.0
    %1164 = vmatprep.subr.mxu0 0.0
    %1165 = vmatpush1.msra.mxu0 0.0
    %1166 = vmatprep.subr.mxu0 0.0
    %1167 = vmatpush1.msra.mxu0 %v1131
    %1168 = vmatprep.subr.mxu0 0.0
    %1169 = vmatpush2.msra.mxu0 0.0
    %1170 = vmatprep.subr.mxu0 0.0
    %1171 = vmatpush2.msra.mxu0 0.0
    %1172 = vmatprep.subr.mxu0 0.0
    %1173 = vmatpush2.msra.mxu0 0.0
    %1174 = vmatprep.subr.mxu0 0.0
    %1175 = vmatpush2.msra.mxu0 0.0
    %1176 = vmatprep.subr.mxu0 0.0
    %1177 = vmatpush2.msra.mxu0 0.0
    %1178 = vmatprep.subr.mxu0 0.0
    %1179 = vmatpush2.msra.mxu0 0.0
    %1180 = vmatprep.subr.mxu0 0.0
    %1181 = vmatpush2.msra.mxu0 0.0
    %1182 = vmatprep.subr.mxu0 0.0
    %1183 = vmatpush2.msra.mxu0 0.0
    %1184 = vmatprep.subr.mxu0 0.0
    %1185 = vmatpush2.msra.mxu0 0.0
    %1186 = vmatprep.subr.mxu0 0.0
    %1187 = vmatpush2.msra.mxu0 0.0
    %1188 = vmatprep.subr.mxu0 0.0
    %1189 = vmatpush2.msra.mxu0 0.0
    %1190 = vmatprep.subr.mxu0 0.0
    %1191 = vmatpush2.msra.mxu0 0.0
    %1192 = vmatprep.subr.mxu0 0.0
    %1193 = vmatpush2.msra.mxu0 0.0
    %1194 = vmatprep.subr.mxu0 0.0
    %1195 = vmatpush2.msra.mxu0 0.0
    %1196 = vmatprep.subr.mxu0 0.0
    %1197 = vmatpush2.msra.mxu0 0.0
    %1198 = vmatprep.subr.mxu0 0.0
    %1199 = vmatpush2.msra.mxu0 0.0
    %1200 = vmatprep.mubr.f32.mxu0 0.0
    %1201 = vmatmul.mubr.f32.gmra.mxu0 %v1134
    %v1202 = vpop.f32.mrf.mxu0
    %v1203 = vadd.f32 0.0, %v1202
    %v1204 = vpop.f32.mrf.mxu0
    %1205 = vdwg.mxu0
    %1208 = vrot.lane.b32.xlu0 %v1127, 16
    %v1209 = vpop.permute.xlu0 %1208
    %1210 = vrot.lane.b32.xlu0 %v1203, 16
    %v1211 = vpop.permute.xlu0 %1210
    %vm1214 = vcmask 195712
    %1215 = vst.msk [vmem:[#allocation2] sm:$0xff] %vm1214, %v1209
    %1216 = vst.msk [vmem:[#allocation2 + $0x8] sm:$0xff] %vm1214, %v1211
    %1217 = vrot.lane.b32.xlu0 %v196, 104
    %v1218 = vpop.permute.xlu0 %1217
    %1219 = vrot.lane.b32.xlu0 %v196, 72
    %v1220 = vpop.permute.xlu0 %1219
    %v1221 = vsel %vm207, %v1218, 0
    %v1223 = vsel %vm207, %v1220, 0
    %1225 = vmatprep.subr.mxu0 0.0
    %1226 = vmatpush1.xpose.msra.mxu0 0.0
    %1227 = vmatprep.subr.mxu0 0.0
    %1228 = vmatpush1.xpose.msra.mxu0 0.0
    %1229 = vmatprep.subr.mxu0 0.0
    %1230 = vmatpush1.xpose.msra.mxu0 0.0
    %1231 = vmatprep.subr.mxu0 0.0
    %1232 = vmatpush1.xpose.msra.mxu0 0.0
    %1233 = vmatprep.subr.mxu0 0.0
    %1234 = vmatpush1.xpose.msra.mxu0 0.0
    %1235 = vmatprep.subr.mxu0 0.0
    %1236 = vmatpush1.xpose.msra.mxu0 0.0
    %1237 = vmatprep.subr.mxu0 0.0
    %1238 = vmatpush1.xpose.msra.mxu0 0.0
    %1239 = vmatprep.subr.mxu0 0.0
    %1240 = vmatpush1.xpose.msra.mxu0 0.0
    %1241 = vmatprep.subr.mxu0 0.0
    %1242 = vmatpush1.xpose.msra.mxu0 0.0
    %1243 = vmatprep.subr.mxu0 0.0
    %1244 = vmatpush1.xpose.msra.mxu0 0.0
    %1245 = vmatprep.subr.mxu0 0.0
    %1246 = vmatpush1.xpose.msra.mxu0 0.0
    %1247 = vmatprep.subr.mxu0 0.0
    %1248 = vmatpush1.xpose.msra.mxu0 0.0
    %1249 = vmatprep.subr.mxu0 0.0
    %1250 = vmatpush1.xpose.msra.mxu0 0.0
    %1251 = vmatprep.subr.mxu0 0.0
    %1252 = vmatpush1.xpose.msra.mxu0 0.0
    %1253 = vmatprep.subr.mxu0 0.0
    %1254 = vmatpush1.xpose.msra.mxu0 0.0
    %1255 = vmatprep.subr.mxu0 0.0
    %1256 = vmatpush1.xpose.msra.mxu0 %v1223
    %1257 = vmatprep.subr.mxu0 0.0
    %1258 = vmatpush2.xpose.msra.mxu0 0.0
    %1259 = vmatprep.subr.mxu0 0.0
    %1260 = vmatpush2.xpose.msra.mxu0 0.0
    %1261 = vmatprep.subr.mxu0 0.0
    %1262 = vmatpush2.xpose.msra.mxu0 0.0
    %1263 = vmatprep.subr.mxu0 0.0
    %1264 = vmatpush2.xpose.msra.mxu0 0.0
    %1265 = vmatprep.subr.mxu0 0.0
    %1266 = vmatpush2.xpose.msra.mxu0 0.0
    %1267 = vmatprep.subr.mxu0 0.0
    %1268 = vmatpush2.xpose.msra.mxu0 0.0
    %1269 = vmatprep.subr.mxu0 0.0
    %1270 = vmatpush2.xpose.msra.mxu0 0.0
    %1271 = vmatprep.subr.mxu0 0.0
    %1272 = vmatpush2.xpose.msra.mxu0 0.0
    %1273 = vmatprep.subr.mxu0 0.0
    %1274 = vmatpush2.xpose.msra.mxu0 0.0
    %1275 = vmatprep.subr.mxu0 0.0
    %1276 = vmatpush2.xpose.msra.mxu0 0.0
    %1277 = vmatprep.subr.mxu0 0.0
    %1278 = vmatpush2.xpose.msra.mxu0 0.0
    %1279 = vmatprep.subr.mxu0 0.0
    %1280 = vmatpush2.xpose.msra.mxu0 0.0
    %1281 = vmatprep.subr.mxu0 0.0
    %1282 = vmatpush2.xpose.msra.mxu0 0.0
    %1283 = vmatprep.subr.mxu0 0.0
    %1284 = vmatpush2.xpose.msra.mxu0 0.0
    %1285 = vmatprep.subr.mxu0 0.0
    %1286 = vmatpush2.xpose.msra.mxu0 0.0
    %1287 = vmatprep.subr.mxu0 0.0
    %1288 = vmatpush2.xpose.msra.mxu0 0.0
    %1289 = vmatprep.mubr.f32.mxu0 0.0
    %1290 = vmatmul.mubr.f32.gmra.mxu0 %v1221
    %v1291 = vpop.f32.mrf.mxu0
    %v1292 = vadd.f32 %v65, %v1291
    %v1293 = vpop.f32.mrf.mxu0
    %1294 = vdwg.mxu0
    %1295 = vrot.lane.b32.xlu0 %v201, 104
    %v1296 = vpop.permute.xlu0 %1295
    %1297 = vrot.lane.b32.xlu0 %v201, 72
    %v1298 = vpop.permute.xlu0 %1297
    %v1299 = vsel %vm207, %v1296, 0
    %v1301 = vsel %vm207, %v1298, 0
    %1303 = vmatprep.subr.mxu0 0.0
    %1304 = vmatpush1.xpose.msra.mxu0 0.0
    %1305 = vmatprep.subr.mxu0 0.0
    %1306 = vmatpush1.xpose.msra.mxu0 0.0
    %1307 = vmatprep.subr.mxu0 0.0
    %1308 = vmatpush1.xpose.msra.mxu0 0.0
    %1309 = vmatprep.subr.mxu0 0.0
    %1310 = vmatpush1.xpose.msra.mxu0 0.0
    %1311 = vmatprep.subr.mxu0 0.0
    %1312 = vmatpush1.xpose.msra.mxu0 0.0
    %1313 = vmatprep.subr.mxu0 0.0
    %1314 = vmatpush1.xpose.msra.mxu0 0.0
    %1315 = vmatprep.subr.mxu0 0.0
    %1316 = vmatpush1.xpose.msra.mxu0 0.0
    %1317 = vmatprep.subr.mxu0 0.0
    %1318 = vmatpush1.xpose.msra.mxu0 0.0
    %1319 = vmatprep.subr.mxu0 0.0
    %1320 = vmatpush1.xpose.msra.mxu0 0.0
    %1321 = vmatprep.subr.mxu0 0.0
    %1322 = vmatpush1.xpose.msra.mxu0 0.0
    %1323 = vmatprep.subr.mxu0 0.0
    %1324 = vmatpush1.xpose.msra.mxu0 0.0
    %1325 = vmatprep.subr.mxu0 0.0
    %1326 = vmatpush1.xpose.msra.mxu0 0.0
    %1327 = vmatprep.subr.mxu0 0.0
    %1328 = vmatpush1.xpose.msra.mxu0 0.0
    %1329 = vmatprep.subr.mxu0 0.0
    %1330 = vmatpush1.xpose.msra.mxu0 0.0
    %1331 = vmatprep.subr.mxu0 0.0
    %1332 = vmatpush1.xpose.msra.mxu0 0.0
    %1333 = vmatprep.subr.mxu0 0.0
    %1334 = vmatpush1.xpose.msra.mxu0 %v1301
    %1335 = vmatprep.subr.mxu0 0.0
    %1336 = vmatpush2.xpose.msra.mxu0 0.0
    %1337 = vmatprep.subr.mxu0 0.0
    %1338 = vmatpush2.xpose.msra.mxu0 0.0
    %1339 = vmatprep.subr.mxu0 0.0
    %1340 = vmatpush2.xpose.msra.mxu0 0.0
    %1341 = vmatprep.subr.mxu0 0.0
    %1342 = vmatpush2.xpose.msra.mxu0 0.0
    %1343 = vmatprep.subr.mxu0 0.0
    %1344 = vmatpush2.xpose.msra.mxu0 0.0
    %1345 = vmatprep.subr.mxu0 0.0
    %1346 = vmatpush2.xpose.msra.mxu0 0.0
    %1347 = vmatprep.subr.mxu0 0.0
    %1348 = vmatpush2.xpose.msra.mxu0 0.0
    %1349 = vmatprep.subr.mxu0 0.0
    %1350 = vmatpush2.xpose.msra.mxu0 0.0
    %1351 = vmatprep.subr.mxu0 0.0
    %1352 = vmatpush2.xpose.msra.mxu0 0.0
    %1353 = vmatprep.subr.mxu0 0.0
    %1354 = vmatpush2.xpose.msra.mxu0 0.0
    %1355 = vmatprep.subr.mxu0 0.0
    %1356 = vmatpush2.xpose.msra.mxu0 0.0
    %1357 = vmatprep.subr.mxu0 0.0
    %1358 = vmatpush2.xpose.msra.mxu0 0.0
    %1359 = vmatprep.subr.mxu0 0.0
    %1360 = vmatpush2.xpose.msra.mxu0 0.0
    %1361 = vmatprep.subr.mxu0 0.0
    %1362 = vmatpush2.xpose.msra.mxu0 0.0
    %1363 = vmatprep.subr.mxu0 0.0
    %1364 = vmatpush2.xpose.msra.mxu0 0.0
    %1365 = vmatprep.subr.mxu0 0.0
    %1366 = vmatpush2.xpose.msra.mxu0 0.0
    %1367 = vmatprep.mubr.f32.mxu0 0.0
    %1368 = vmatmul.mubr.f32.gmra.mxu0 %v1299
    %v1369 = vpop.f32.mrf.mxu0
    %v1370 = vadd.f32 %v65, %v1369
    %v1371 = vpop.f32.mrf.mxu0
    %1372 = vdwg.mxu0
    %v1373 = vsel %vm207, %v1292, -inf
    %1374 = vmax.xlane.f32.xlu0 %v1373
    %v1375 = vpop.xlane.xlu0 %1374
    %v1376 = vsel %vm207, %v1370, -inf
    %1377 = vmax.xlane.f32.xlu0 %v1376
    %v1378 = vpop.xlane.xlu0 %1377
    %v1379 = vsub.f32 %v1292, %v1375
    %v1380 = vsub.f32 %v1370, %v1378
    %v1381 = vmul.f32 %v1379, 1.442695
    %v1382 = vpow.pop %v1381
    %v1383 = vmul.f32 %v1380, 1.442695
    %v1384 = vpow.pop %v1383
    %v1385 = vsel %vm207, %v1382, 0.0
    %1386 = vadd.xlane.f32.xlu0 %v1385
    %v1387 = vpop.xlane.xlu0 %1386
    %v1388 = vsel %vm207, %v1384, 0.0
    %1389 = vadd.xlane.f32.xlu0 %v1388
    %v1390 = vpop.xlane.xlu0 %1389
    %v1391 = vrcp.pop %v1387
    %v1392 = vrcp.pop %v1390
    %v1393 = vmul.f32 %v1382, %v1391
    %v1394 = vmul.f32 %v1384, %v1392
    %1395 = vrot.lane.b32.xlu0 %v196, 40
    %v1396 = vpop.permute.xlu0 %1395
    %v1399 = vsel %vm207, %v1393, 0
    %1401 = vmatprep.subr.mxu0 0.0
    %1402 = vmatpush1.msra.mxu0 0.0
    %1403 = vmatprep.subr.mxu0 0.0
    %1404 = vmatpush1.msra.mxu0 0.0
    %1405 = vmatprep.subr.mxu0 0.0
    %1406 = vmatpush1.msra.mxu0 0.0
    %1407 = vmatprep.subr.mxu0 0.0
    %1408 = vmatpush1.msra.mxu0 0.0
    %1409 = vmatprep.subr.mxu0 0.0
    %1410 = vmatpush1.msra.mxu0 0.0
    %1411 = vmatprep.subr.mxu0 0.0
    %1412 = vmatpush1.msra.mxu0 0.0
    %1413 = vmatprep.subr.mxu0 0.0
    %1414 = vmatpush1.msra.mxu0 0.0
    %1415 = vmatprep.subr.mxu0 0.0
    %1416 = vmatpush1.msra.mxu0 0.0
    %1417 = vmatprep.subr.mxu0 0.0
    %1418 = vmatpush1.msra.mxu0 0.0
    %1419 = vmatprep.subr.mxu0 0.0
    %1420 = vmatpush1.msra.mxu0 0.0
    %1421 = vmatprep.subr.mxu0 0.0
    %1422 = vmatpush1.msra.mxu0 0.0
    %1423 = vmatprep.subr.mxu0 0.0
    %1424 = vmatpush1.msra.mxu0 0.0
    %1425 = vmatprep.subr.mxu0 0.0
    %1426 = vmatpush1.msra.mxu0 0.0
    %1427 = vmatprep.subr.mxu0 0.0
    %1428 = vmatpush1.msra.mxu0 0.0
    %1429 = vmatprep.subr.mxu0 0.0
    %1430 = vmatpush1.msra.mxu0 0.0
    %1431 = vmatprep.subr.mxu0 0.0
    %1432 = vmatpush1.msra.mxu0 %v1396
    %1433 = vmatprep.subr.mxu0 0.0
    %1434 = vmatpush2.msra.mxu0 0.0
    %1435 = vmatprep.subr.mxu0 0.0
    %1436 = vmatpush2.msra.mxu0 0.0
    %1437 = vmatprep.subr.mxu0 0.0
    %1438 = vmatpush2.msra.mxu0 0.0
    %1439 = vmatprep.subr.mxu0 0.0
    %1440 = vmatpush2.msra.mxu0 0.0
    %1441 = vmatprep.subr.mxu0 0.0
    %1442 = vmatpush2.msra.mxu0 0.0
    %1443 = vmatprep.subr.mxu0 0.0
    %1444 = vmatpush2.msra.mxu0 0.0
    %1445 = vmatprep.subr.mxu0 0.0
    %1446 = vmatpush2.msra.mxu0 0.0
    %1447 = vmatprep.subr.mxu0 0.0
    %1448 = vmatpush2.msra.mxu0 0.0
    %1449 = vmatprep.subr.mxu0 0.0
    %1450 = vmatpush2.msra.mxu0 0.0
    %1451 = vmatprep.subr.mxu0 0.0
    %1452 = vmatpush2.msra.mxu0 0.0
    %1453 = vmatprep.subr.mxu0 0.0
    %1454 = vmatpush2.msra.mxu0 0.0
    %1455 = vmatprep.subr.mxu0 0.0
    %1456 = vmatpush2.msra.mxu0 0.0
    %1457 = vmatprep.subr.mxu0 0.0
    %1458 = vmatpush2.msra.mxu0 0.0
    %1459 = vmatprep.subr.mxu0 0.0
    %1460 = vmatpush2.msra.mxu0 0.0
    %1461 = vmatprep.subr.mxu0 0.0
    %1462 = vmatpush2.msra.mxu0 0.0
    %1463 = vmatprep.subr.mxu0 0.0
    %1464 = vmatpush2.msra.mxu0 0.0
    %1465 = vmatprep.mubr.f32.mxu0 0.0
    %1466 = vmatmul.mubr.f32.gmra.mxu0 %v1399
    %v1467 = vpop.f32.mrf.mxu0
    %v1468 = vadd.f32 0.0, %v1467
    %v1469 = vpop.f32.mrf.mxu0
    %1470 = vdwg.mxu0
    %1471 = vrot.lane.b32.xlu0 %v201, 40
    %v1472 = vpop.permute.xlu0 %1471
    %v1475 = vsel %vm207, %v1394, 0
    %1477 = vmatprep.subr.mxu0 0.0
    %1478 = vmatpush1.msra.mxu0 0.0
    %1479 = vmatprep.subr.mxu0 0.0
    %1480 = vmatpush1.msra.mxu0 0.0
    %1481 = vmatprep.subr.mxu0 0.0
    %1482 = vmatpush1.msra.mxu0 0.0
    %1483 = vmatprep.subr.mxu0 0.0
    %1484 = vmatpush1.msra.mxu0 0.0
    %1485 = vmatprep.subr.mxu0 0.0
    %1486 = vmatpush1.msra.mxu0 0.0
    %1487 = vmatprep.subr.mxu0 0.0
    %1488 = vmatpush1.msra.mxu0 0.0
    %1489 = vmatprep.subr.mxu0 0.0
    %1490 = vmatpush1.msra.mxu0 0.0
    %1491 = vmatprep.subr.mxu0 0.0
    %1492 = vmatpush1.msra.mxu0 0.0
    %1493 = vmatprep.subr.mxu0 0.0
    %1494 = vmatpush1.msra.mxu0 0.0
    %1495 = vmatprep.subr.mxu0 0.0
    %1496 = vmatpush1.msra.mxu0 0.0
    %1497 = vmatprep.subr.mxu0 0.0
    %1498 = vmatpush1.msra.mxu0 0.0
    %1499 = vmatprep.subr.mxu0 0.0
    %1500 = vmatpush1.msra.mxu0 0.0
    %1501 = vmatprep.subr.mxu0 0.0
    %1502 = vmatpush1.msra.mxu0 0.0
    %1503 = vmatprep.subr.mxu0 0.0
    %1504 = vmatpush1.msra.mxu0 0.0
    %1505 = vmatprep.subr.mxu0 0.0
    %1506 = vmatpush1.msra.mxu0 0.0
    %1507 = vmatprep.subr.mxu0 0.0
    %1508 = vmatpush1.msra.mxu0 %v1472
    %1509 = vmatprep.subr.mxu0 0.0
    %1510 = vmatpush2.msra.mxu0 0.0
    %1511 = vmatprep.subr.mxu0 0.0
    %1512 = vmatpush2.msra.mxu0 0.0
    %1513 = vmatprep.subr.mxu0 0.0
    %1514 = vmatpush2.msra.mxu0 0.0
    %1515 = vmatprep.subr.mxu0 0.0
    %1516 = vmatpush2.msra.mxu0 0.0
    %1517 = vmatprep.subr.mxu0 0.0
    %1518 = vmatpush2.msra.mxu0 0.0
    %1519 = vmatprep.subr.mxu0 0.0
    %1520 = vmatpush2.msra.mxu0 0.0
    %1521 = vmatprep.subr.mxu0 0.0
    %1522 = vmatpush2.msra.mxu0 0.0
    %1523 = vmatprep.subr.mxu0 0.0
    %1524 = vmatpush2.msra.mxu0 0.0
    %1525 = vmatprep.subr.mxu0 0.0
    %1526 = vmatpush2.msra.mxu0 0.0
    %1527 = vmatprep.subr.mxu0 0.0
    %1528 = vmatpush2.msra.mxu0 0.0
    %1529 = vmatprep.subr.mxu0 0.0
    %1530 = vmatpush2.msra.mxu0 0.0
    %1531 = vmatprep.subr.mxu0 0.0
    %1532 = vmatpush2.msra.mxu0 0.0
    %1533 = vmatprep.subr.mxu0 0.0
    %1534 = vmatpush2.msra.mxu0 0.0
    %1535 = vmatprep.subr.mxu0 0.0
    %1536 = vmatpush2.msra.mxu0 0.0
    %1537 = vmatprep.subr.mxu0 0.0
    %1538 = vmatpush2.msra.mxu0 0.0
    %1539 = vmatprep.subr.mxu0 0.0
    %1540 = vmatpush2.msra.mxu0 0.0
    %1541 = vmatprep.mubr.f32.mxu0 0.0
    %1542 = vmatmul.mubr.f32.gmra.mxu0 %v1475
    %v1543 = vpop.f32.mrf.mxu0
    %v1544 = vadd.f32 0.0, %v1543
    %v1545 = vpop.f32.mrf.mxu0
    %1546 = vdwg.mxu0
    %1549 = vrot.lane.b32.xlu0 %v1468, 24
    %v1550 = vpop.permute.xlu0 %1549
    %1551 = vrot.lane.b32.xlu0 %v1544, 24
    %v1552 = vpop.permute.xlu0 %1551
    %vm1555 = vcmask 261312
    %1556 = vst.msk [vmem:[#allocation2] sm:$0xff] %vm1555, %v1550
    %1557 = vst.msk [vmem:[#allocation2 + $0x8] sm:$0xff] %vm1555, %v1552
    %v1558 = vld [vmem:[#allocation2] sm:$0xff]
    %v1559 = vld [vmem:[#allocation2 + $0x8] sm:$0xff]
    %v1560 = vld [vmem:[%s6] sm:$0xff]
    %v1561 = vld [vmem:[%s6 + $0x8] sm:$0xff]
    %v1562 = vld [vmem:[%s6 + $0x10] sm:$0xff]
    %v1563 = vld [vmem:[%s6 + $0x18] sm:$0xff]
    %v1565 = vsel %vm68, %v1558, 0
    %v1568 = vsel %vm68, %v1559, 0
    %1570 = vmatprep.subr.mxu0 0.0
    %1571 = vmatpush1.msra.mxu0 0.0
    %1572 = vmatprep.subr.mxu0 0.0
    %1573 = vmatpush1.msra.mxu0 0.0
    %1574 = vmatprep.subr.mxu0 0.0
    %1575 = vmatpush1.msra.mxu0 0.0
    %1576 = vmatprep.subr.mxu0 0.0
    %1577 = vmatpush1.msra.mxu0 0.0
    %1578 = vmatprep.subr.mxu0 0.0
    %1579 = vmatpush1.msra.mxu0 0.0
    %1580 = vmatprep.subr.mxu0 0.0
    %1581 = vmatpush1.msra.mxu0 0.0
    %1582 = vmatprep.subr.mxu0 0.0
    %1583 = vmatpush1.msra.mxu0 0.0
    %1584 = vmatprep.subr.mxu0 0.0
    %1585 = vmatpush1.msra.mxu0 0.0
    %1586 = vmatprep.subr.mxu0 0.0
    %1587 = vmatpush1.msra.mxu0 0.0
    %1588 = vmatprep.subr.mxu0 0.0
    %1589 = vmatpush1.msra.mxu0 0.0
    %1590 = vmatprep.subr.mxu0 0.0
    %1591 = vmatpush1.msra.mxu0 0.0
    %1592 = vmatprep.subr.mxu0 0.0
    %1593 = vmatpush1.msra.mxu0 0.0
    %1594 = vmatprep.subr.mxu0 0.0
    %1595 = vmatpush1.msra.mxu0 %v1563
    %1596 = vmatprep.subr.mxu0 0.0
    %1597 = vmatpush1.msra.mxu0 %v1562
    %1598 = vmatprep.subr.mxu0 0.0
    %1599 = vmatpush1.msra.mxu0 %v1561
    %1600 = vmatprep.subr.mxu0 0.0
    %1601 = vmatpush1.msra.mxu0 %v1560
    %1602 = vmatprep.subr.mxu0 0.0
    %1603 = vmatpush2.msra.mxu0 0.0
    %1604 = vmatprep.subr.mxu0 0.0
    %1605 = vmatpush2.msra.mxu0 0.0
    %1606 = vmatprep.subr.mxu0 0.0
    %1607 = vmatpush2.msra.mxu0 0.0
    %1608 = vmatprep.subr.mxu0 0.0
    %1609 = vmatpush2.msra.mxu0 0.0
    %1610 = vmatprep.subr.mxu0 0.0
    %1611 = vmatpush2.msra.mxu0 0.0
    %1612 = vmatprep.subr.mxu0 0.0
    %1613 = vmatpush2.msra.mxu0 0.0
    %1614 = vmatprep.subr.mxu0 0.0
    %1615 = vmatpush2.msra.mxu0 0.0
    %1616 = vmatprep.subr.mxu0 0.0
    %1617 = vmatpush2.msra.mxu0 0.0
    %1618 = vmatprep.subr.mxu0 0.0
    %1619 = vmatpush2.msra.mxu0 0.0
    %1620 = vmatprep.subr.mxu0 0.0
    %1621 = vmatpush2.msra.mxu0 0.0
    %1622 = vmatprep.subr.mxu0 0.0
    %1623 = vmatpush2.msra.mxu0 0.0
    %1624 = vmatprep.subr.mxu0 0.0
    %1625 = vmatpush2.msra.mxu0 0.0
    %1626 = vmatprep.subr.mxu0 0.0
    %1627 = vmatpush2.msra.mxu0 0.0
    %1628 = vmatprep.subr.mxu0 0.0
    %1629 = vmatpush2.msra.mxu0 0.0
    %1630 = vmatprep.subr.mxu0 0.0
    %1631 = vmatpush2.msra.mxu0 0.0
    %1632 = vmatprep.subr.mxu0 0.0
    %1633 = vmatpush2.msra.mxu0 0.0
    %1634 = vmatprep.mubr.f32.mxu0 0.0
    %1635 = vmatmul.mubr.f32.gmra.mxu0 %v1565
    %v1636 = vpop.f32.mrf.mxu0
    %v1637 = vadd.f32 0.0, %v1636
    %v1638 = vpop.f32.mrf.mxu0
    %1639 = vmatprep.mubr.f32.mxu0 0.0
    %1640 = vmatmul.mubr.f32.gmra.mxu0 %v1568
    %v1641 = vpop.f32.mrf.mxu0
    %v1642 = vadd.f32 0.0, %v1641
    %v1643 = vpop.f32.mrf.mxu0
    %1644 = vdwg.mxu0
    %v1645 = vadd.f32 %v58, %v1637
    %v1646 = vadd.f32 %v59, %v1642
    %v1647 = vld [vmem:[%s7] sm:$0x1]
    %v1649 = vlaneseq
    %v1650 = vshrl.u32 %v1649, 7
    %v1651 = vsub.s32 0, %v1650
    %v1652 = vrot.slane %v1647, %v1651
    %v1654 = vadd.f32 %v1645, %v1652
    %v1655 = vadd.f32 %v1646, %v1652
    %v1656 = vld [vmem:[%s8] sm:$0x1]
    %v1657 = vld [vmem:[%s9] sm:$0x1]
    %v1658 = vsel %vm68, %v1654, 0.0
    %1659 = vadd.xlane.f32.xlu0 %v1658
    %v1660 = vpop.xlane.xlu0 %1659
    %v1661 = vsel %vm68, %v1655, 0.0
    %1662 = vadd.xlane.f32.xlu0 %v1661
    %v1663 = vpop.xlane.xlu0 %1662
    %v1664 = vmul.f32 %v1660, %v75
    %v1665 = vmul.f32 %v1663, %v75
    %v1666 = vsub.f32 %v1654, %v1664
    %v1667 = vsub.f32 %v1655, %v1665
    %v1668 = vmul.f32 %v1666, %v1666
    %v1669 = vmul.f32 %v1667, %v1667
    %v1670 = vsel %vm68, %v1668, 0.0
    %1671 = vadd.xlane.f32.xlu0 %v1670
    %v1672 = vpop.xlane.xlu0 %1671
    %v1673 = vsel %vm68, %v1669, 0.0
    %1674 = vadd.xlane.f32.xlu0 %v1673
    %v1675 = vpop.xlane.xlu0 %1674
    %v1676 = vmul.f32 %v1672, %v75
    %v1677 = vmul.f32 %v1675, %v75
    %v1678 = vadd.f32 %v1676, 1e-05
    %v1679 = vadd.f32 %v1677, 1e-05
    %v1680 = vrsqrt.pop %v1678
    %v1681 = vrsqrt.pop %v1679
    %v1682 = vmul.f32 %v1666, %v1680
    %v1683 = vmul.f32 %v1667, %v1681
    %v1685 = vlaneseq
    %v1686 = vshrl.u32 %v1685, 7
    %v1687 = vsub.s32 0, %v1686
    %v1688 = vrot.slane %v1656, %v1687
    %v1690 = vmul.f32 %v1682, %v1688
    %v1691 = vmul.f32 %v1683, %v1688
    %v1693 = vlaneseq
    %v1694 = vshrl.u32 %v1693, 7
    %v1695 = vsub.s32 0, %v1694
    %v1696 = vrot.slane %v1657, %v1695
    %v1698 = vadd.f32 %v1690, %v1696
    %v1699 = vadd.f32 %v1691, %v1696
    %v1700 = vld [vmem:[%s10] sm:$0xff]
    %v1701 = vld [vmem:[%s10 + $0x8] sm:$0xff]
    %v1702 = vld [vmem:[%s10 + $0x10] sm:$0xff]
    %v1703 = vld [vmem:[%s10 + $0x18] sm:$0xff]
    %v1704 = vld [vmem:[%s11] sm:$0x1]
    %v1706 = vlaneseq
    %v1707 = vshrl.u32 %v1706, 7
    %v1708 = vsub.s32 0, %v1707
    %v1709 = vrot.slane %v1704, %v1708
    %v1712 = vsel %vm68, %v1698, 0
    %v1715 = vsel %vm68, %v1699, 0
    %1717 = vmatprep.subr.mxu0 0.0
    %1718 = vmatpush1.msra.mxu0 0.0
    %1719 = vmatprep.subr.mxu0 0.0
    %1720 = vmatpush1.msra.mxu0 0.0
    %1721 = vmatprep.subr.mxu0 0.0
    %1722 = vmatpush1.msra.mxu0 0.0
    %1723 = vmatprep.subr.mxu0 0.0
    %1724 = vmatpush1.msra.mxu0 0.0
    %1725 = vmatprep.subr.mxu0 0.0
    %1726 = vmatpush1.msra.mxu0 0.0
    %1727 = vmatprep.subr.mxu0 0.0
    %1728 = vmatpush1.msra.mxu0 0.0
    %1729 = vmatprep.subr.mxu0 0.0
    %1730 = vmatpush1.msra.mxu0 0.0
    %1731 = vmatprep.subr.mxu0 0.0
    %1732 = vmatpush1.msra.mxu0 0.0
    %1733 = vmatprep.subr.mxu0 0.0
    %1734 = vmatpush1.msra.mxu0 0.0
    %1735 = vmatprep.subr.mxu0 0.0
    %1736 = vmatpush1.msra.mxu0 0.0
    %1737 = vmatprep.subr.mxu0 0.0
    %1738 = vmatpush1.msra.mxu0 0.0
    %1739 = vmatprep.subr.mxu0 0.0
    %1740 = vmatpush1.msra.mxu0 0.0
    %1741 = vmatprep.subr.mxu0 0.0
    %1742 = vmatpush1.msra.mxu0 %v1703
    %1743 = vmatprep.subr.mxu0 0.0
    %1744 = vmatpush1.msra.mxu0 %v1702
    %1745 = vmatprep.subr.mxu0 0.0
    %1746 = vmatpush1.msra.mxu0 %v1701
    %1747 = vmatprep.subr.mxu0 0.0
    %1748 = vmatpush1.msra.mxu0 %v1700
    %1749 = vmatprep.subr.mxu0 0.0
    %1750 = vmatpush2.msra.mxu0 0.0
    %1751 = vmatprep.subr.mxu0 0.0
    %1752 = vmatpush2.msra.mxu0 0.0
    %1753 = vmatprep.subr.mxu0 0.0
    %1754 = vmatpush2.msra.mxu0 0.0
    %1755 = vmatprep.subr.mxu0 0.0
    %1756 = vmatpush2.msra.mxu0 0.0
    %1757 = vmatprep.subr.mxu0 0.0
    %1758 = vmatpush2.msra.mxu0 0.0
    %1759 = vmatprep.subr.mxu0 0.0
    %1760 = vmatpush2.msra.mxu0 0.0
    %1761 = vmatprep.subr.mxu0 0.0
    %1762 = vmatpush2.msra.mxu0 0.0
    %1763 = vmatprep.subr.mxu0 0.0
    %1764 = vmatpush2.msra.mxu0 0.0
    %1765 = vmatprep.subr.mxu0 0.0
    %1766 = vmatpush2.msra.mxu0 0.0
    %1767 = vmatprep.subr.mxu0 0.0
    %1768 = vmatpush2.msra.mxu0 0.0
    %1769 = vmatprep.subr.mxu0 0.0
    %1770 = vmatpush2.msra.mxu0 0.0
    %1771 = vmatprep.subr.mxu0 0.0
    %1772 = vmatpush2.msra.mxu0 0.0
    %1773 = vmatprep.subr.mxu0 0.0
    %1774 = vmatpush2.msra.mxu0 0.0
    %1775 = vmatprep.subr.mxu0 0.0
    %1776 = vmatpush2.msra.mxu0 0.0
    %1777 = vmatprep.subr.mxu0 0.0
    %1778 = vmatpush2.msra.mxu0 0.0
    %1779 = vmatprep.subr.mxu0 0.0
    %1780 = vmatpush2.msra.mxu0 0.0
    %1781 = vmatprep.mubr.f32.mxu0 0.0
    %1782 = vmatmul.mubr.f32.gmra.mxu0 %v1712
    %v1783 = vpop.f32.mrf.mxu0
    %v1784 = vadd.f32 %v1709, %v1783
    %v1785 = vpop.f32.mrf.mxu0
    %1786 = vmatprep.mubr.f32.mxu0 0.0
    %1787 = vmatmul.mubr.f32.gmra.mxu0 %v1715
    %v1788 = vpop.f32.mrf.mxu0
    %v1789 = vadd.f32 %v1709, %v1788
    %v1790 = vpop.f32.mrf.mxu0
    %1791 = vdwg.mxu0
    %v1792 = vmul.f32 %v1784, 0.5
    %v1793 = vmul.f32 %v1789, 0.5
    %v1794 = vmul.f32 %v1784, 0.044715
    %v1795 = vmul.f32 %v1789, 0.044715
    %v1796 = vmul.f32 %v1794, %v1784
    %v1797 = vmul.f32 %v1795, %v1789
    %v1798 = vmul.f32 %v1796, %v1784
    %v1799 = vmul.f32 %v1797, %v1789
    %v1800 = vadd.f32 %v1784, %v1798
    %v1801 = vadd.f32 %v1789, %v1799
    %v1802 = vmul.f32 %v1800, 0.7978846
    %v1803 = vmul.f32 %v1801, 0.7978846
    %v1804 = vtanh.pop %v1802
    %v1805 = vtanh.pop %v1803
    %v1806 = vadd.f32 %v1804, 1.0
    %v1807 = vadd.f32 %v1805, 1.0
    %v1808 = vmul.f32 %v1792, %v1806
    %v1809 = vmul.f32 %v1793, %v1807
    %v1810 = vld [vmem:[%s12] sm:$0xff]
    %v1811 = vld [vmem:[%s12 + $0x8] sm:$0xff]
    %v1812 = vld [vmem:[%s12 + $0x10] sm:$0xff]
    %v1813 = vld [vmem:[%s12 + $0x18] sm:$0xff]
    %v1814 = vld [vmem:[%s12 + $0x20] sm:$0xff]
    %v1815 = vld [vmem:[%s12 + $0x28] sm:$0xff]
    %v1816 = vld [vmem:[%s12 + $0x30] sm:$0xff]
    %v1817 = vld [vmem:[%s12 + $0x38] sm:$0xff]
    %v1818 = vld [vmem:[%s12 + $0x40] sm:$0xff]
    %v1819 = vld [vmem:[%s12 + $0x48] sm:$0xff]
    %v1820 = vld [vmem:[%s12 + $0x50] sm:$0xff]
    %v1821 = vld [vmem:[%s12 + $0x58] sm:$0xff]
    %v1822 = vld [vmem:[%s12 + $0x60] sm:$0xff]
    %v1823 = vld [vmem:[%s12 + $0x68] sm:$0xff]
    %v1824 = vld [vmem:[%s12 + $0x70] sm:$0xff]
    %v1825 = vld [vmem:[%s12 + $0x78] sm:$0xff]
    %1826 = vmatprep.subr.mxu0 0.0
    %1827 = vmatpush1.msra.mxu0 %v1825
    %1828 = vmatprep.subr.mxu0 0.0
    %1829 = vmatpush1.msra.mxu0 %v1824
    %1830 = vmatprep.subr.mxu0 0.0
    %1831 = vmatpush1.msra.mxu0 %v1823
    %1832 = vmatprep.subr.mxu0 0.0
    %1833 = vmatpush1.msra.mxu0 %v1822
    %1834 = vmatprep.subr.mxu0 0.0
    %1835 = vmatpush1.msra.mxu0 %v1821
    %1836 = vmatprep.subr.mxu0 0.0
    %1837 = vmatpush1.msra.mxu0 %v1820
    %1838 = vmatprep.subr.mxu0 0.0
    %1839 = vmatpush1.msra.mxu0 %v1819
    %1840 = vmatprep.subr.mxu0 0.0
    %1841 = vmatpush1.msra.mxu0 %v1818
    %1842 = vmatprep.subr.mxu0 0.0
    %1843 = vmatpush1.msra.mxu0 %v1817
    %1844 = vmatprep.subr.mxu0 0.0
    %1845 = vmatpush1.msra.mxu0 %v1816
    %1846 = vmatprep.subr.mxu0 0.0
    %1847 = vmatpush1.msra.mxu0 %v1815
    %1848 = vmatprep.subr.mxu0 0.0
    %1849 = vmatpush1.msra.mxu0 %v1814
    %1850 = vmatprep.subr.mxu0 0.0
    %1851 = vmatpush1.msra.mxu0 %v1813
    %1852 = vmatprep.subr.mxu0 0.0
    %1853 = vmatpush1.msra.mxu0 %v1812
    %1854 = vmatprep.subr.mxu0 0.0
    %1855 = vmatpush1.msra.mxu0 %v1811
    %1856 = vmatprep.subr.mxu0 0.0
    %1857 = vmatpush1.msra.mxu0 %v1810
    %1858 = vmatprep.subr.mxu0 0.0
    %1859 = vmatpush2.msra.mxu0 0.0
    %1860 = vmatprep.subr.mxu0 0.0
    %1861 = vmatpush2.msra.mxu0 0.0
    %1862 = vmatprep.subr.mxu0 0.0
    %1863 = vmatpush2.msra.mxu0 0.0
    %1864 = vmatprep.subr.mxu0 0.0
    %1865 = vmatpush2.msra.mxu0 0.0
    %1866 = vmatprep.subr.mxu0 0.0
    %1867 = vmatpush2.msra.mxu0 0.0
    %1868 = vmatprep.subr.mxu0 0.0
    %1869 = vmatpush2.msra.mxu0 0.0
    %1870 = vmatprep.subr.mxu0 0.0
    %1871 = vmatpush2.msra.mxu0 0.0
    %1872 = vmatprep.subr.mxu0 0.0
    %1873 = vmatpush2.msra.mxu0 0.0
    %1874 = vmatprep.subr.mxu0 0.0
    %1875 = vmatpush2.msra.mxu0 0.0
    %1876 = vmatprep.subr.mxu0 0.0
    %1877 = vmatpush2.msra.mxu0 0.0
    %1878 = vmatprep.subr.mxu0 0.0
    %1879 = vmatpush2.msra.mxu0 0.0
    %1880 = vmatprep.subr.mxu0 0.0
    %1881 = vmatpush2.msra.mxu0 0.0
    %1882 = vmatprep.subr.mxu0 0.0
    %1883 = vmatpush2.msra.mxu0 0.0
    %1884 = vmatprep.subr.mxu0 0.0
    %1885 = vmatpush2.msra.mxu0 0.0
    %1886 = vmatprep.subr.mxu0 0.0
    %1887 = vmatpush2.msra.mxu0 0.0
    %1888 = vmatprep.subr.mxu0 0.0
    %1889 = vmatpush2.msra.mxu0 0.0
    %1890 = vmatprep.mubr.f32.mxu0 0.0
    %1891 = vmatmul.mubr.f32.gmra.mxu0 %v1808
    %v1892 = vpop.f32.mrf.mxu0
    %v1893 = vadd.f32 0.0, %v1892
    %v1894 = vpop.f32.mrf.mxu0
    %1895 = vmatprep.mubr.f32.mxu0 0.0
    %1896 = vmatmul.mubr.f32.gmra.mxu0 %v1809
    %v1897 = vpop.f32.mrf.mxu0
    %v1898 = vadd.f32 0.0, %v1897
    %v1899 = vpop.f32.mrf.mxu0
    %1900 = vdwg.mxu0
    %v1901 = vadd.f32 %v1654, %v1893
    %v1902 = vadd.f32 %v1655, %v1898
    %v1903 = vld [vmem:[%s13] sm:$0x1]
    %v1905 = vlaneseq
    %v1906 = vshrl.u32 %v1905, 7
    %v1907 = vsub.s32 0, %v1906
    %v1908 = vrot.slane %v1903, %v1907
    %v1910 = vadd.f32 %v1901, %v1908
    %v1911 = vadd.f32 %v1902, %v1908
    %s1912 = scalar_lea.vmem %s2, 1
    %v1913 = vld [vmem:[%s1912] sm:$0x1]
    %s1914 = scalar_lea.vmem %s3, 1
    %v1915 = vld [vmem:[%s1914] sm:$0x1]
    %v1916 = vsel %vm68, %v1910, 0.0
    %1917 = vadd.xlane.f32.xlu0 %v1916
    %v1918 = vpop.xlane.xlu0 %1917
    %v1919 = vsel %vm68, %v1911, 0.0
    %1920 = vadd.xlane.f32.xlu0 %v1919
    %v1921 = vpop.xlane.xlu0 %1920
    %v1922 = vmul.f32 %v1918, %v75
    %v1923 = vmul.f32 %v1921, %v75
    %v1924 = vsub.f32 %v1910, %v1922
    %v1925 = vsub.f32 %v1911, %v1923
    %v1926 = vmul.f32 %v1924, %v1924
    %v1927 = vmul.f32 %v1925, %v1925
    %v1928 = vsel %vm68, %v1926, 0.0
    %1929 = vadd.xlane.f32.xlu0 %v1928
    %v1930 = vpop.xlane.xlu0 %1929
    %v1931 = vsel %vm68, %v1927, 0.0
    %1932 = vadd.xlane.f32.xlu0 %v1931
    %v1933 = vpop.xlane.xlu0 %1932
    %v1934 = vmul.f32 %v1930, %v75
    %v1935 = vmul.f32 %v1933, %v75
    %v1936 = vadd.f32 %v1934, 1e-05
    %v1937 = vadd.f32 %v1935, 1e-05
    %v1938 = vrsqrt.pop %v1936
    %v1939 = vrsqrt.pop %v1937
    %v1940 = vmul.f32 %v1924, %v1938
    %v1941 = vmul.f32 %v1925, %v1939
    %v1943 = vlaneseq
    %v1944 = vshrl.u32 %v1943, 7
    %v1945 = vsub.s32 0, %v1944
    %v1946 = vrot.slane %v1913, %v1945
    %v1948 = vmul.f32 %v1940, %v1946
    %v1949 = vmul.f32 %v1941, %v1946
    %v1951 = vlaneseq
    %v1952 = vshrl.u32 %v1951, 7
    %v1953 = vsub.s32 0, %v1952
    %v1954 = vrot.slane %v1915, %v1953
    %v1956 = vadd.f32 %v1948, %v1954
    %v1957 = vadd.f32 %v1949, %v1954
    %s1958 = scalar_lea.vmem %s4, 32
    %v1959 = vld [vmem:[%s1958] sm:$0xff]
    %v1960 = vld [vmem:[%s1958 + $0x8] sm:$0xff]
    %v1961 = vld [vmem:[%s1958 + $0x10] sm:$0xff]
    %v1962 = vld [vmem:[%s1958 + $0x18] sm:$0xff]
    %s1963 = scalar_lea.vmem %s5, 1
    %v1964 = vld [vmem:[%s1963] sm:$0x1]
    %v1966 = vlaneseq
    %v1967 = vshrl.u32 %v1966, 7
    %v1968 = vsub.s32 0, %v1967
    %v1969 = vrot.slane %v1964, %v1968
    %v1972 = vsel %vm68, %v1956, 0
    %v1975 = vsel %vm68, %v1957, 0
    %1977 = vmatprep.subr.mxu0 0.0
    %1978 = vmatpush1.msra.mxu0 0.0
    %1979 = vmatprep.subr.mxu0 0.0
    %1980 = vmatpush1.msra.mxu0 0.0
    %1981 = vmatprep.subr.mxu0 0.0
    %1982 = vmatpush1.msra.mxu0 0.0
    %1983 = vmatprep.subr.mxu0 0.0
    %1984 = vmatpush1.msra.mxu0 0.0
    %1985 = vmatprep.subr.mxu0 0.0
    %1986 = vmatpush1.msra.mxu0 0.0
    %1987 = vmatprep.subr.mxu0 0.0
    %1988 = vmatpush1.msra.mxu0 0.0
    %1989 = vmatprep.subr.mxu0 0.0
    %1990 = vmatpush1.msra.mxu0 0.0
    %1991 = vmatprep.subr.mxu0 0.0
    %1992 = vmatpush1.msra.mxu0 0.0
    %1993 = vmatprep.subr.mxu0 0.0
    %1994 = vmatpush1.msra.mxu0 0.0
    %1995 = vmatprep.subr.mxu0 0.0
    %1996 = vmatpush1.msra.mxu0 0.0
    %1997 = vmatprep.subr.mxu0 0.0
    %1998 = vmatpush1.msra.mxu0 0.0
    %1999 = vmatprep.subr.mxu0 0.0
    %2000 = vmatpush1.msra.mxu0 0.0
    %2001 = vmatprep.subr.mxu0 0.0
    %2002 = vmatpush1.msra.mxu0 %v1962
    %2003 = vmatprep.subr.mxu0 0.0
    %2004 = vmatpush1.msra.mxu0 %v1961
    %2005 = vmatprep.subr.mxu0 0.0
    %2006 = vmatpush1.msra.mxu0 %v1960
    %2007 = vmatprep.subr.mxu0 0.0
    %2008 = vmatpush1.msra.mxu0 %v1959
    %2009 = vmatprep.subr.mxu0 0.0
    %2010 = vmatpush2.msra.mxu0 0.0
    %2011 = vmatprep.subr.mxu0 0.0
    %2012 = vmatpush2.msra.mxu0 0.0
    %2013 = vmatprep.subr.mxu0 0.0
    %2014 = vmatpush2.msra.mxu0 0.0
    %2015 = vmatprep.subr.mxu0 0.0
    %2016 = vmatpush2.msra.mxu0 0.0
    %2017 = vmatprep.subr.mxu0 0.0
    %2018 = vmatpush2.msra.mxu0 0.0
    %2019 = vmatprep.subr.mxu0 0.0
    %2020 = vmatpush2.msra.mxu0 0.0
    %2021 = vmatprep.subr.mxu0 0.0
    %2022 = vmatpush2.msra.mxu0 0.0
    %2023 = vmatprep.subr.mxu0 0.0
    %2024 = vmatpush2.msra.mxu0 0.0
    %2025 = vmatprep.subr.mxu0 0.0
    %2026 = vmatpush2.msra.mxu0 0.0
    %2027 = vmatprep.subr.mxu0 0.0
    %2028 = vmatpush2.msra.mxu0 0.0
    %2029 = vmatprep.subr.mxu0 0.0
    %2030 = vmatpush2.msra.mxu0 0.0
    %2031 = vmatprep.subr.mxu0 0.0
    %2032 = vmatpush2.msra.mxu0 0.0
    %2033 = vmatprep.subr.mxu0 0.0
    %2034 = vmatpush2.msra.mxu0 0.0
    %2035 = vmatprep.subr.mxu0 0.0
    %2036 = vmatpush2.msra.mxu0 0.0
    %2037 = vmatprep.subr.mxu0 0.0
    %2038 = vmatpush2.msra.mxu0 0.0
    %2039 = vmatprep.subr.mxu0 0.0
    %2040 = vmatpush2.msra.mxu0 0.0
    %2041 = vmatprep.mubr.f32.mxu0 0.0
    %2042 = vmatmul.mubr.f32.gmra.mxu0 %v1972
    %v2043 = vpop.f32.mrf.mxu0
    %v2044 = vadd.f32 %v1969, %v2043
    %v2045 = vpop.f32.mrf.mxu0
    %2046 = vmatprep.mubr.f32.mxu0 0.0
    %2047 = vmatmul.mubr.f32.gmra.mxu0 %v1975
    %v2048 = vpop.f32.mrf.mxu0
    %v2049 = vadd.f32 %v1969, %v2048
    %v2050 = vpop.f32.mrf.mxu0
    %2051 = vdwg.mxu0
    %2053 = vrot.lane.b32.xlu0 %v2044, 96
    %v2054 = vpop.permute.xlu0 %2053
    %v2055 = vsel %vm207, %v2044, 0
    %v2057 = vsel %vm207, %v2054, 0
    %2059 = vmatprep.subr.mxu0 0.0
    %2060 = vmatpush1.xpose.msra.mxu0 0.0
    %2061 = vmatprep.subr.mxu0 0.0
    %2062 = vmatpush1.xpose.msra.mxu0 0.0
    %2063 = vmatprep.subr.mxu0 0.0
    %2064 = vmatpush1.xpose.msra.mxu0 0.0
    %2065 = vmatprep.subr.mxu0 0.0
    %2066 = vmatpush1.xpose.msra.mxu0 0.0
    %2067 = vmatprep.subr.mxu0 0.0
    %2068 = vmatpush1.xpose.msra.mxu0 0.0
    %2069 = vmatprep.subr.mxu0 0.0
    %2070 = vmatpush1.xpose.msra.mxu0 0.0
    %2071 = vmatprep.subr.mxu0 0.0
    %2072 = vmatpush1.xpose.msra.mxu0 0.0
    %2073 = vmatprep.subr.mxu0 0.0
    %2074 = vmatpush1.xpose.msra.mxu0 0.0
    %2075 = vmatprep.subr.mxu0 0.0
    %2076 = vmatpush1.xpose.msra.mxu0 0.0
    %2077 = vmatprep.subr.mxu0 0.0
    %2078 = vmatpush1.xpose.msra.mxu0 0.0
    %2079 = vmatprep.subr.mxu0 0.0
    %2080 = vmatpush1.xpose.msra.mxu0 0.0
    %2081 = vmatprep.subr.mxu0 0.0
    %2082 = vmatpush1.xpose.msra.mxu0 0.0
    %2083 = vmatprep.subr.mxu0 0.0
    %2084 = vmatpush1.xpose.msra.mxu0 0.0
    %2085 = vmatprep.subr.mxu0 0.0
    %2086 = vmatpush1.xpose.msra.mxu0 0.0
    %2087 = vmatprep.subr.mxu0 0.0
    %2088 = vmatpush1.xpose.msra.mxu0 0.0
    %2089 = vmatprep.subr.mxu0 0.0
    %2090 = vmatpush1.xpose.msra.mxu0 %v2057
    %2091 = vmatprep.subr.mxu0 0.0
    %2092 = vmatpush2.xpose.msra.mxu0 0.0
    %2093 = vmatprep.subr.mxu0 0.0
    %2094 = vmatpush2.xpose.msra.mxu0 0.0
    %2095 = vmatprep.subr.mxu0 0.0
    %2096 = vmatpush2.xpose.msra.mxu0 0.0
    %2097 = vmatprep.subr.mxu0 0.0
    %2098 = vmatpush2.xpose.msra.mxu0 0.0
    %2099 = vmatprep.subr.mxu0 0.0
    %2100 = vmatpush2.xpose.msra.mxu0 0.0
    %2101 = vmatprep.subr.mxu0 0.0
    %2102 = vmatpush2.xpose.msra.mxu0 0.0
    %2103 = vmatprep.subr.mxu0 0.0
    %2104 = vmatpush2.xpose.msra.mxu0 0.0
    %2105 = vmatprep.subr.mxu0 0.0
    %2106 = vmatpush2.xpose.msra.mxu0 0.0
    %2107 = vmatprep.subr.mxu0 0.0
    %2108 = vmatpush2.xpose.msra.mxu0 0.0
    %2109 = vmatprep.subr.mxu0 0.0
    %2110 = vmatpush2.xpose.msra.mxu0 0.0
    %2111 = vmatprep.subr.mxu0 0.0
    %2112 = vmatpush2.xpose.msra.mxu0 0.0
    %2113 = vmatprep.subr.mxu0 0.0
    %2114 = vmatpush2.xpose.msra.mxu0 0.0
    %2115 = vmatprep.subr.mxu0 0.0
    %2116 = vmatpush2.xpose.msra.mxu0 0.0
    %2117 = vmatprep.subr.mxu0 0.0
    %2118 = vmatpush2.xpose.msra.mxu0 0.0
    %2119 = vmatprep.subr.mxu0 0.0
    %2120 = vmatpush2.xpose.msra.mxu0 0.0
    %2121 = vmatprep.subr.mxu0 0.0
    %2122 = vmatpush2.xpose.msra.mxu0 0.0
    %2123 = vmatprep.mubr.f32.mxu0 0.0
    %2124 = vmatmul.mubr.f32.gmra.mxu0 %v2055
    %v2125 = vpop.f32.mrf.mxu0
    %v2126 = vadd.f32 %v65, %v2125
    %v2127 = vpop.f32.mrf.mxu0
    %2128 = vdwg.mxu0
    %2130 = vrot.lane.b32.xlu0 %v2049, 96
    %v2131 = vpop.permute.xlu0 %2130
    %v2132 = vsel %vm207, %v2049, 0
    %v2134 = vsel %vm207, %v2131, 0
    %2136 = vmatprep.subr.mxu0 0.0
    %2137 = vmatpush1.xpose.msra.mxu0 0.0
    %2138 = vmatprep.subr.mxu0 0.0
    %2139 = vmatpush1.xpose.msra.mxu0 0.0
    %2140 = vmatprep.subr.mxu0 0.0
    %2141 = vmatpush1.xpose.msra.mxu0 0.0
    %2142 = vmatprep.subr.mxu0 0.0
    %2143 = vmatpush1.xpose.msra.mxu0 0.0
    %2144 = vmatprep.subr.mxu0 0.0
    %2145 = vmatpush1.xpose.msra.mxu0 0.0
    %2146 = vmatprep.subr.mxu0 0.0
    %2147 = vmatpush1.xpose.msra.mxu0 0.0
    %2148 = vmatprep.subr.mxu0 0.0
    %2149 = vmatpush1.xpose.msra.mxu0 0.0
    %2150 = vmatprep.subr.mxu0 0.0
    %2151 = vmatpush1.xpose.msra.mxu0 0.0
    %2152 = vmatprep.subr.mxu0 0.0
    %2153 = vmatpush1.xpose.msra.mxu0 0.0
    %2154 = vmatprep.subr.mxu0 0.0
    %2155 = vmatpush1.xpose.msra.mxu0 0.0
    %2156 = vmatprep.subr.mxu0 0.0
    %2157 = vmatpush1.xpose.msra.mxu0 0.0
    %2158 = vmatprep.subr.mxu0 0.0
    %2159 = vmatpush1.xpose.msra.mxu0 0.0
    %2160 = vmatprep.subr.mxu0 0.0
    %2161 = vmatpush1.xpose.msra.mxu0 0.0
    %2162 = vmatprep.subr.mxu0 0.0
    %2163 = vmatpush1.xpose.msra.mxu0 0.0
    %2164 = vmatprep.subr.mxu0 0.0
    %2165 = vmatpush1.xpose.msra.mxu0 0.0
    %2166 = vmatprep.subr.mxu0 0.0
    %2167 = vmatpush1.xpose.msra.mxu0 %v2134
    %2168 = vmatprep.subr.mxu0 0.0
    %2169 = vmatpush2.xpose.msra.mxu0 0.0
    %2170 = vmatprep.subr.mxu0 0.0
    %2171 = vmatpush2.xpose.msra.mxu0 0.0
    %2172 = vmatprep.subr.mxu0 0.0
    %2173 = vmatpush2.xpose.msra.mxu0 0.0
    %2174 = vmatprep.subr.mxu0 0.0
    %2175 = vmatpush2.xpose.msra.mxu0 0.0
    %2176 = vmatprep.subr.mxu0 0.0
    %2177 = vmatpush2.xpose.msra.mxu0 0.0
    %2178 = vmatprep.subr.mxu0 0.0
    %2179 = vmatpush2.xpose.msra.mxu0 0.0
    %2180 = vmatprep.subr.mxu0 0.0
    %2181 = vmatpush2.xpose.msra.mxu0 0.0
    %2182 = vmatprep.subr.mxu0 0.0
    %2183 = vmatpush2.xpose.msra.mxu0 0.0
    %2184 = vmatprep.subr.mxu0 0.0
    %2185 = vmatpush2.xpose.msra.mxu0 0.0
    %2186 = vmatprep.subr.mxu0 0.0
    %2187 = vmatpush2.xpose.msra.mxu0 0.0
    %2188 = vmatprep.subr.mxu0 0.0
    %2189 = vmatpush2.xpose.msra.mxu0 0.0
    %2190 = vmatprep.subr.mxu0 0.0
    %2191 = vmatpush2.xpose.msra.mxu0 0.0
    %2192 = vmatprep.subr.mxu0 0.0
    %2193 = vmatpush2.xpose.msra.mxu0 0.0
    %2194 = vmatprep.subr.mxu0 0.0
    %2195 = vmatpush2.xpose.msra.mxu0 0.0
    %2196 = vmatprep.subr.mxu0 0.0
    %2197 = vmatpush2.xpose.msra.mxu0 0.0
    %2198 = vmatprep.subr.mxu0 0.0
    %2199 = vmatpush2.xpose.msra.mxu0 0.0
    %2200 = vmatprep.mubr.f32.mxu0 0.0
    %2201 = vmatmul.mubr.f32.gmra.mxu0 %v2132
    %v2202 = vpop.f32.mrf.mxu0
    %v2203 = vadd.f32 %v65, %v2202
    %v2204 = vpop.f32.mrf.mxu0
    %2205 = vdwg.mxu0
    %v2206 = vsel %vm207, %v2126, -inf
    %2207 = vmax.xlane.f32.xlu0 %v2206
    %v2208 = vpop.xlane.xlu0 %2207
    %v2209 = vsel %vm207, %v2203, -inf
    %2210 = vmax.xlane.f32.xlu0 %v2209
    %v2211 = vpop.xlane.xlu0 %2210
    %v2212 = vsub.f32 %v2126, %v2208
    %v2213 = vsub.f32 %v2203, %v2211
    %v2214 = vmul.f32 %v2212, 1.442695
    %v2215 = vpow.pop %v2214
    %v2216 = vmul.f32 %v2213, 1.442695
    %v2217 = vpow.pop %v2216
    %v2218 = vsel %vm207, %v2215, 0.0
    %2219 = vadd.xlane.f32.xlu0 %v2218
    %v2220 = vpop.xlane.xlu0 %2219
    %v2221 = vsel %vm207, %v2217, 0.0
    %2222 = vadd.xlane.f32.xlu0 %v2221
    %v2223 = vpop.xlane.xlu0 %2222
    %v2224 = vrcp.pop %v2220
    %v2225 = vrcp.pop %v2223
    %v2226 = vmul.f32 %v2215, %v2224
    %v2227 = vmul.f32 %v2217, %v2225
    %2228 = vrot.lane.b32.xlu0 %v2044, 64
    %v2229 = vpop.permute.xlu0 %2228
    %v2232 = vsel %vm207, %v2226, 0
    %2234 = vmatprep.subr.mxu0 0.0
    %2235 = vmatpush1.msra.mxu0 0.0
    %2236 = vmatprep.subr.mxu0 0.0
    %2237 = vmatpush1.msra.mxu0 0.0
    %2238 = vmatprep.subr.mxu0 0.0
    %2239 = vmatpush1.msra.mxu0 0.0
    %2240 = vmatprep.subr.mxu0 0.0
    %2241 = vmatpush1.msra.mxu0 0.0
    %2242 = vmatprep.subr.mxu0 0.0
    %2243 = vmatpush1.msra.mxu0 0.0
    %2244 = vmatprep.subr.mxu0 0.0
    %2245 = vmatpush1.msra.mxu0 0.0
    %2246 = vmatprep.subr.mxu0 0.0
    %2247 = vmatpush1.msra.mxu0 0.0
    %2248 = vmatprep.subr.mxu0 0.0
    %2249 = vmatpush1.msra.mxu0 0.0
    %2250 = vmatprep.subr.mxu0 0.0
    %2251 = vmatpush1.msra.mxu0 0.0
    %2252 = vmatprep.subr.mxu0 0.0
    %2253 = vmatpush1.msra.mxu0 0.0
    %2254 = vmatprep.subr.mxu0 0.0
    %2255 = vmatpush1.msra.mxu0 0.0
    %2256 = vmatprep.subr.mxu0 0.0
    %2257 = vmatpush1.msra.mxu0 0.0
    %2258 = vmatprep.subr.mxu0 0.0
    %2259 = vmatpush1.msra.mxu0 0.0
    %2260 = vmatprep.subr.mxu0 0.0
    %2261 = vmatpush1.msra.mxu0 0.0
    %2262 = vmatprep.subr.mxu0 0.0
    %2263 = vmatpush1.msra.mxu0 0.0
    %2264 = vmatprep.subr.mxu0 0.0
    %2265 = vmatpush1.msra.mxu0 %v2229
    %2266 = vmatprep.subr.mxu0 0.0
    %2267 = vmatpush2.msra.mxu0 0.0
    %2268 = vmatprep.subr.mxu0 0.0
    %2269 = vmatpush2.msra.mxu0 0.0
    %2270 = vmatprep.subr.mxu0 0.0
    %2271 = vmatpush2.msra.mxu0 0.0
    %2272 = vmatprep.subr.mxu0 0.0
    %2273 = vmatpush2.msra.mxu0 0.0
    %2274 = vmatprep.subr.mxu0 0.0
    %2275 = vmatpush2.msra.mxu0 0.0
    %2276 = vmatprep.subr.mxu0 0.0
    %2277 = vmatpush2.msra.mxu0 0.0
    %2278 = vmatprep.subr.mxu0 0.0
    %2279 = vmatpush2.msra.mxu0 0.0
    %2280 = vmatprep.subr.mxu0 0.0
    %2281 = vmatpush2.msra.mxu0 0.0
    %2282 = vmatprep.subr.mxu0 0.0
    %2283 = vmatpush2.msra.mxu0 0.0
    %2284 = vmatprep.subr.mxu0 0.0
    %2285 = vmatpush2.msra.mxu0 0.0
    %2286 = vmatprep.subr.mxu0 0.0
    %2287 = vmatpush2.msra.mxu0 0.0
    %2288 = vmatprep.subr.mxu0 0.0
    %2289 = vmatpush2.msra.mxu0 0.0
    %2290 = vmatprep.subr.mxu0 0.0
    %2291 = vmatpush2.msra.mxu0 0.0
    %2292 = vmatprep.subr.mxu0 0.0
    %2293 = vmatpush2.msra.mxu0 0.0
    %2294 = vmatprep.subr.mxu0 0.0
    %2295 = vmatpush2.msra.mxu0 0.0
    %2296 = vmatprep.subr.mxu0 0.0
    %2297 = vmatpush2.msra.mxu0 0.0
    %2298 = vmatprep.mubr.f32.mxu0 0.0
    %2299 = vmatmul.mubr.f32.gmra.mxu0 %v2232
    %v2300 = vpop.f32.mrf.mxu0
    %v2301 = vadd.f32 0.0, %v2300
    %v2302 = vpop.f32.mrf.mxu0
    %2303 = vdwg.mxu0
    %2304 = vrot.lane.b32.xlu0 %v2049, 64
    %v2305 = vpop.permute.xlu0 %2304
    %v2308 = vsel %vm207, %v2227, 0
    %2310 = vmatprep.subr.mxu0 0.0
    %2311 = vmatpush1.msra.mxu0 0.0
    %2312 = vmatprep.subr.mxu0 0.0
    %2313 = vmatpush1.msra.mxu0 0.0
    %2314 = vmatprep.subr.mxu0 0.0
    %2315 = vmatpush1.msra.mxu0 0.0
    %2316 = vmatprep.subr.mxu0 0.0
    %2317 = vmatpush1.msra.mxu0 0.0
    %2318 = vmatprep.subr.mxu0 0.0
    %2319 = vmatpush1.msra.mxu0 0.0
    %2320 = vmatprep.subr.mxu0 0.0
    %2321 = vmatpush1.msra.mxu0 0.0
    %2322 = vmatprep.subr.mxu0 0.0
    %2323 = vmatpush1.msra.mxu0 0.0
    %2324 = vmatprep.subr.mxu0 0.0
    %2325 = vmatpush1.msra.mxu0 0.0
    %2326 = vmatprep.subr.mxu0 0.0
    %2327 = vmatpush1.msra.mxu0 0.0
    %2328 = vmatprep.subr.mxu0 0.0
    %2329 = vmatpush1.msra.mxu0 0.0
    %2330 = vmatprep.subr.mxu0 0.0
    %2331 = vmatpush1.msra.mxu0 0.0
    %2332 = vmatprep.subr.mxu0 0.0
    %2333 = vmatpush1.msra.mxu0 0.0
    %2334 = vmatprep.subr.mxu0 0.0
    %2335 = vmatpush1.msra.mxu0 0.0
    %2336 = vmatprep.subr.mxu0 0.0
    %2337 = vmatpush1.msra.mxu0 0.0
    %2338 = vmatprep.subr.mxu0 0.0
    %2339 = vmatpush1.msra.mxu0 0.0
    %2340 = vmatprep.subr.mxu0 0.0
    %2341 = vmatpush1.msra.mxu0 %v2305
    %2342 = vmatprep.subr.mxu0 0.0
    %2343 = vmatpush2.msra.mxu0 0.0
    %2344 = vmatprep.subr.mxu0 0.0
    %2345 = vmatpush2.msra.mxu0 0.0
    %2346 = vmatprep.subr.mxu0 0.0
    %2347 = vmatpush2.msra.mxu0 0.0
    %2348 = vmatprep.subr.mxu0 0.0
    %2349 = vmatpush2.msra.mxu0 0.0
    %2350 = vmatprep.subr.mxu0 0.0
    %2351 = vmatpush2.msra.mxu0 0.0
    %2352 = vmatprep.subr.mxu0 0.0
    %2353 = vmatpush2.msra.mxu0 0.0
    %2354 = vmatprep.subr.mxu0 0.0
    %2355 = vmatpush2.msra.mxu0 0.0
    %2356 = vmatprep.subr.mxu0 0.0
    %2357 = vmatpush2.msra.mxu0 0.0
    %2358 = vmatprep.subr.mxu0 0.0
    %2359 = vmatpush2.msra.mxu0 0.0
    %2360 = vmatprep.subr.mxu0 0.0
    %2361 = vmatpush2.msra.mxu0 0.0
    %2362 = vmatprep.subr.mxu0 0.0
    %2363 = vmatpush2.msra.mxu0 0.0
    %2364 = vmatprep.subr.mxu0 0.0
    %2365 = vmatpush2.msra.mxu0 0.0
    %2366 = vmatprep.subr.mxu0 0.0
    %2367 = vmatpush2.msra.mxu0 0.0
    %2368 = vmatprep.subr.mxu0 0.0
    %2369 = vmatpush2.msra.mxu0 0.0
    %2370 = vmatprep.subr.mxu0 0.0
    %2371 = vmatpush2.msra.mxu0 0.0
    %2372 = vmatprep.subr.mxu0 0.0
    %2373 = vmatpush2.msra.mxu0 0.0
    %2374 = vmatprep.mubr.f32.mxu0 0.0
    %2375 = vmatmul.mubr.f32.gmra.mxu0 %v2308
    %v2376 = vpop.f32.mrf.mxu0
    %v2377 = vadd.f32 0.0, %v2376
    %v2378 = vpop.f32.mrf.mxu0
    %2379 = vdwg.mxu0
    %2380 = vst.msk [vmem:[#allocation2] sm:$0xff] %vm207, %v2301
    %2381 = vst.msk [vmem:[#allocation2 + $0x8] sm:$0xff] %vm207, %v2377
    %2382 = vrot.lane.b32.xlu0 %v2044, 120
    %v2383 = vpop.permute.xlu0 %2382
    %2384 = vrot.lane.b32.xlu0 %v2044, 88
    %v2385 = vpop.permute.xlu0 %2384
    %v2386 = vsel %vm207, %v2383, 0
    %v2388 = vsel %vm207, %v2385, 0
    %2390 = vmatprep.subr.mxu0 0.0
    %2391 = vmatpush1.xpose.msra.mxu0 0.0
    %2392 = vmatprep.subr.mxu0 0.0
    %2393 = vmatpush1.xpose.msra.mxu0 0.0
    %2394 = vmatprep.subr.mxu0 0.0
    %2395 = vmatpush1.xpose.msra.mxu0 0.0
    %2396 = vmatprep.subr.mxu0 0.0
    %2397 = vmatpush1.xpose.msra.mxu0 0.0
    %2398 = vmatprep.subr.mxu0 0.0
    %2399 = vmatpush1.xpose.msra.mxu0 0.0
    %2400 = vmatprep.subr.mxu0 0.0
    %2401 = vmatpush1.xpose.msra.mxu0 0.0
    %2402 = vmatprep.subr.mxu0 0.0
    %2403 = vmatpush1.xpose.msra.mxu0 0.0
    %2404 = vmatprep.subr.mxu0 0.0
    %2405 = vmatpush1.xpose.msra.mxu0 0.0
    %2406 = vmatprep.subr.mxu0 0.0
    %2407 = vmatpush1.xpose.msra.mxu0 0.0
    %2408 = vmatprep.subr.mxu0 0.0
    %2409 = vmatpush1.xpose.msra.mxu0 0.0
    %2410 = vmatprep.subr.mxu0 0.0
    %2411 = vmatpush1.xpose.msra.mxu0 0.0
    %2412 = vmatprep.subr.mxu0 0.0
    %2413 = vmatpush1.xpose.msra.mxu0 0.0
    %2414 = vmatprep.subr.mxu0 0.0
    %2415 = vmatpush1.xpose.msra.mxu0 0.0
    %2416 = vmatprep.subr.mxu0 0.0
    %2417 = vmatpush1.xpose.msra.mxu0 0.0
    %2418 = vmatprep.subr.mxu0 0.0
    %2419 = vmatpush1.xpose.msra.mxu0 0.0
    %2420 = vmatprep.subr.mxu0 0.0
    %2421 = vmatpush1.xpose.msra.mxu0 %v2388
    %2422 = vmatprep.subr.mxu0 0.0
    %2423 = vmatpush2.xpose.msra.mxu0 0.0
    %2424 = vmatprep.subr.mxu0 0.0
    %2425 = vmatpush2.xpose.msra.mxu0 0.0
    %2426 = vmatprep.subr.mxu0 0.0
    %2427 = vmatpush2.xpose.msra.mxu0 0.0
    %2428 = vmatprep.subr.mxu0 0.0
    %2429 = vmatpush2.xpose.msra.mxu0 0.0
    %2430 = vmatprep.subr.mxu0 0.0
    %2431 = vmatpush2.xpose.msra.mxu0 0.0
    %2432 = vmatprep.subr.mxu0 0.0
    %2433 = vmatpush2.xpose.msra.mxu0 0.0
    %2434 = vmatprep.subr.mxu0 0.0
    %2435 = vmatpush2.xpose.msra.mxu0 0.0
    %2436 = vmatprep.subr.mxu0 0.0
    %2437 = vmatpush2.xpose.msra.mxu0 0.0
    %2438 = vmatprep.subr.mxu0 0.0
    %2439 = vmatpush2.xpose.msra.mxu0 0.0
    %2440 = vmatprep.subr.mxu0 0.0
    %2441 = vmatpush2.xpose.msra.mxu0 0.0
    %2442 = vmatprep.subr.mxu0 0.0
    %2443 = vmatpush2.xpose.msra.mxu0 0.0
    %2444 = vmatprep.subr.mxu0 0.0
    %2445 = vmatpush2.xpose.msra.mxu0 0.0
    %2446 = vmatprep.subr.mxu0 0.0
    %2447 = vmatpush2.xpose.msra.mxu0 0.0
    %2448 = vmatprep.subr.mxu0 0.0
    %2449 = vmatpush2.xpose.msra.mxu0 0.0
    %2450 = vmatprep.subr.mxu0 0.0
    %2451 = vmatpush2.xpose.msra.mxu0 0.0
    %2452 = vmatprep.subr.mxu0 0.0
    %2453 = vmatpush2.xpose.msra.mxu0 0.0
    %2454 = vmatprep.mubr.f32.mxu0 0.0
    %2455 = vmatmul.mubr.f32.gmra.mxu0 %v2386
    %v2456 = vpop.f32.mrf.mxu0
    %v2457 = vadd.f32 %v65, %v2456
    %v2458 = vpop.f32.mrf.mxu0
    %2459 = vdwg.mxu0
    %2460 = vrot.lane.b32.xlu0 %v2049, 120
    %v2461 = vpop.permute.xlu0 %2460
    %2462 = vrot.lane.b32.xlu0 %v2049, 88
    %v2463 = vpop.permute.xlu0 %2462
    %v2464 = vsel %vm207, %v2461, 0
    %v2466 = vsel %vm207, %v2463, 0
    %2468 = vmatprep.subr.mxu0 0.0
    %2469 = vmatpush1.xpose.msra.mxu0 0.0
    %2470 = vmatprep.subr.mxu0 0.0
    %2471 = vmatpush1.xpose.msra.mxu0 0.0
    %2472 = vmatprep.subr.mxu0 0.0
    %2473 = vmatpush1.xpose.msra.mxu0 0.0
    %2474 = vmatprep.subr.mxu0 0.0
    %2475 = vmatpush1.xpose.msra.mxu0 0.0
    %2476 = vmatprep.subr.mxu0 0.0
    %2477 = vmatpush1.xpose.msra.mxu0 0.0
    %2478 = vmatprep.subr.mxu0 0.0
    %2479 = vmatpush1.xpose.msra.mxu0 0.0
    %2480 = vmatprep.subr.mxu0 0.0
    %2481 = vmatpush1.xpose.msra.mxu0 0.0
    %2482 = vmatprep.subr.mxu0 0.0
    %2483 = vmatpush1.xpose.msra.mxu0 0.0
    %2484 = vmatprep.subr.mxu0 0.0
    %2485 = vmatpush1.xpose.msra.mxu0 0.0
    %2486 = vmatprep.subr.mxu0 0.0
    %2487 = vmatpush1.xpose.msra.mxu0 0.0
    %2488 = vmatprep.subr.mxu0 0.0
    %2489 = vmatpush1.xpose.msra.mxu0 0.0
    %2490 = vmatprep.subr.mxu0 0.0
    %2491 = vmatpush1.xpose.msra.mxu0 0.0
    %2492 = vmatprep.subr.mxu0 0.0
    %2493 = vmatpush1.xpose.msra.mxu0 0.0
    %2494 = vmatprep.subr.mxu0 0.0
    %2495 = vmatpush1.xpose.msra.mxu0 0.0
    %2496 = vmatprep.subr.mxu0 0.0
    %2497 = vmatpush1.xpose.msra.mxu0 0.0
    %2498 = vmatprep.subr.mxu0 0.0
    %2499 = vmatpush1.xpose.msra.mxu0 %v2466
    %2500 = vmatprep.subr.mxu0 0.0
    %2501 = vmatpush2.xpose.msra.mxu0 0.0
    %2502 = vmatprep.subr.mxu0 0.0
    %2503 = vmatpush2.xpose.msra.mxu0 0.0
    %2504 = vmatprep.subr.mxu0 0.0
    %2505 = vmatpush2.xpose.msra.mxu0 0.0
    %2506 = vmatprep.subr.mxu0 0.0
    %2507 = vmatpush2.xpose.msra.mxu0 0.0
    %2508 = vmatprep.subr.mxu0 0.0
    %2509 = vmatpush2.xpose.msra.mxu0 0.0
    %2510 = vmatprep.subr.mxu0 0.0
    %2511 = vmatpush2.xpose.msra.mxu0 0.0
    %2512 = vmatprep.subr.mxu0 0.0
    %2513 = vmatpush2.xpose.msra.mxu0 0.0
    %2514 = vmatprep.subr.mxu0 0.0
    %2515 = vmatpush2.xpose.msra.mxu0 0.0
    %2516 = vmatprep.subr.mxu0 0.0
    %2517 = vmatpush2.xpose.msra.mxu0 0.0
    %2518 = vmatprep.subr.mxu0 0.0
    %2519 = vmatpush2.xpose.msra.mxu0 0.0
    %2520 = vmatprep.subr.mxu0 0.0
    %2521 = vmatpush2.xpose.msra.mxu0 0.0
    %2522 = vmatprep.subr.mxu0 0.0
    %2523 = vmatpush2.xpose.msra.mxu0 0.0
    %2524 = vmatprep.subr.mxu0 0.0
    %2525 = vmatpush2.xpose.msra.mxu0 0.0
    %2526 = vmatprep.subr.mxu0 0.0
    %2527 = vmatpush2.xpose.msra.mxu0 0.0
    %2528 = vmatprep.subr.mxu0 0.0
    %2529 = vmatpush2.xpose.msra.mxu0 0.0
    %2530 = vmatprep.subr.mxu0 0.0
    %2531 = vmatpush2.xpose.msra.mxu0 0.0
    %2532 = vmatprep.mubr.f32.mxu0 0.0
    %2533 = vmatmul.mubr.f32.gmra.mxu0 %v2464
    %v2534 = vpop.f32.mrf.mxu0
    %v2535 = vadd.f32 %v65, %v2534
    %v2536 = vpop.f32.mrf.mxu0
    %2537 = vdwg.mxu0
    %v2538 = vsel %vm207, %v2457, -inf
    %2539 = vmax.xlane.f32.xlu0 %v2538
    %v2540 = vpop.xlane.xlu0 %2539
    %v2541 = vsel %vm207, %v2535, -inf
    %2542 = vmax.xlane.f32.xlu0 %v2541
    %v2543 = vpop.xlane.xlu0 %2542
    %v2544 = vsub.f32 %v2457, %v2540
    %v2545 = vsub.f32 %v2535, %v2543
    %v2546 = vmul.f32 %v2544, 1.442695
    %v2547 = vpow.pop %v2546
    %v2548 = vmul.f32 %v2545, 1.442695
    %v2549 = vpow.pop %v2548
    %v2550 = vsel %vm207, %v2547, 0.0
    %2551 = vadd.xlane.f32.xlu0 %v2550
    %v2552 = vpop.xlane.xlu0 %2551
    %v2553 = vsel %vm207, %v2549, 0.0
    %2554 = vadd.xlane.f32.xlu0 %v2553
    %v2555 = vpop.xlane.xlu0 %2554
    %v2556 = vrcp.pop %v2552
    %v2557 = vrcp.pop %v2555
    %v2558 = vmul.f32 %v2547, %v2556
    %v2559 = vmul.f32 %v2549, %v2557
    %2560 = vrot.lane.b32.xlu0 %v2044, 56
    %v2561 = vpop.permute.xlu0 %2560
    %v2564 = vsel %vm207, %v2558, 0
    %2566 = vmatprep.subr.mxu0 0.0
    %2567 = vmatpush1.msra.mxu0 0.0
    %2568 = vmatprep.subr.mxu0 0.0
    %2569 = vmatpush1.msra.mxu0 0.0
    %2570 = vmatprep.subr.mxu0 0.0
    %2571 = vmatpush1.msra.mxu0 0.0
    %2572 = vmatprep.subr.mxu0 0.0
    %2573 = vmatpush1.msra.mxu0 0.0
    %2574 = vmatprep.subr.mxu0 0.0
    %2575 = vmatpush1.msra.mxu0 0.0
    %2576 = vmatprep.subr.mxu0 0.0
    %2577 = vmatpush1.msra.mxu0 0.0
    %2578 = vmatprep.subr.mxu0 0.0
    %2579 = vmatpush1.msra.mxu0 0.0
    %2580 = vmatprep.subr.mxu0 0.0
    %2581 = vmatpush1.msra.mxu0 0.0
    %2582 = vmatprep.subr.mxu0 0.0
    %2583 = vmatpush1.msra.mxu0 0.0
    %2584 = vmatprep.subr.mxu0 0.0
    %2585 = vmatpush1.msra.mxu0 0.0
    %2586 = vmatprep.subr.mxu0 0.0
    %2587 = vmatpush1.msra.mxu0 0.0
    %2588 = vmatprep.subr.mxu0 0.0
    %2589 = vmatpush1.msra.mxu0 0.0
    %2590 = vmatprep.subr.mxu0 0.0
    %2591 = vmatpush1.msra.mxu0 0.0
    %2592 = vmatprep.subr.mxu0 0.0
    %2593 = vmatpush1.msra.mxu0 0.0
    %2594 = vmatprep.subr.mxu0 0.0
    %2595 = vmatpush1.msra.mxu0 0.0
    %2596 = vmatprep.subr.mxu0 0.0
    %2597 = vmatpush1.msra.mxu0 %v2561
    %2598 = vmatprep.subr.mxu0 0.0
    %2599 = vmatpush2.msra.mxu0 0.0
    %2600 = vmatprep.subr.mxu0 0.0
    %2601 = vmatpush2.msra.mxu0 0.0
    %2602 = vmatprep.subr.mxu0 0.0
    %2603 = vmatpush2.msra.mxu0 0.0
    %2604 = vmatprep.subr.mxu0 0.0
    %2605 = vmatpush2.msra.mxu0 0.0
    %2606 = vmatprep.subr.mxu0 0.0
    %2607 = vmatpush2.msra.mxu0 0.0
    %2608 = vmatprep.subr.mxu0 0.0
    %2609 = vmatpush2.msra.mxu0 0.0
    %2610 = vmatprep.subr.mxu0 0.0
    %2611 = vmatpush2.msra.mxu0 0.0
    %2612 = vmatprep.subr.mxu0 0.0
    %2613 = vmatpush2.msra.mxu0 0.0
    %2614 = vmatprep.subr.mxu0 0.0
    %2615 = vmatpush2.msra.mxu0 0.0
    %2616 = vmatprep.subr.mxu0 0.0
    %2617 = vmatpush2.msra.mxu0 0.0
    %2618 = vmatprep.subr.mxu0 0.0
    %2619 = vmatpush2.msra.mxu0 0.0
    %2620 = vmatprep.subr.mxu0 0.0
    %2621 = vmatpush2.msra.mxu0 0.0
    %2622 = vmatprep.subr.mxu0 0.0
    %2623 = vmatpush2.msra.mxu0 0.0
    %2624 = vmatprep.subr.mxu0 0.0
    %2625 = vmatpush2.msra.mxu0 0.0
    %2626 = vmatprep.subr.mxu0 0.0
    %2627 = vmatpush2.msra.mxu0 0.0
    %2628 = vmatprep.subr.mxu0 0.0
    %2629 = vmatpush2.msra.mxu0 0.0
    %2630 = vmatprep.mubr.f32.mxu0 0.0
    %2631 = vmatmul.mubr.f32.gmra.mxu0 %v2564
    %v2632 = vpop.f32.mrf.mxu0
    %v2633 = vadd.f32 0.0, %v2632
    %v2634 = vpop.f32.mrf.mxu0
    %2635 = vdwg.mxu0
    %2636 = vrot.lane.b32.xlu0 %v2049, 56
    %v2637 = vpop.permute.xlu0 %2636
    %v2640 = vsel %vm207, %v2559, 0
    %2642 = vmatprep.subr.mxu0 0.0
    %2643 = vmatpush1.msra.mxu0 0.0
    %2644 = vmatprep.subr.mxu0 0.0
    %2645 = vmatpush1.msra.mxu0 0.0
    %2646 = vmatprep.subr.mxu0 0.0
    %2647 = vmatpush1.msra.mxu0 0.0
    %2648 = vmatprep.subr.mxu0 0.0
    %2649 = vmatpush1.msra.mxu0 0.0
    %2650 = vmatprep.subr.mxu0 0.0
    %2651 = vmatpush1.msra.mxu0 0.0
    %2652 = vmatprep.subr.mxu0 0.0
    %2653 = vmatpush1.msra.mxu0 0.0
    %2654 = vmatprep.subr.mxu0 0.0
    %2655 = vmatpush1.msra.mxu0 0.0
    %2656 = vmatprep.subr.mxu0 0.0
    %2657 = vmatpush1.msra.mxu0 0.0
    %2658 = vmatprep.subr.mxu0 0.0
    %2659 = vmatpush1.msra.mxu0 0.0
    %2660 = vmatprep.subr.mxu0 0.0
    %2661 = vmatpush1.msra.mxu0 0.0
    %2662 = vmatprep.subr.mxu0 0.0
    %2663 = vmatpush1.msra.mxu0 0.0
    %2664 = vmatprep.subr.mxu0 0.0
    %2665 = vmatpush1.msra.mxu0 0.0
    %2666 = vmatprep.subr.mxu0 0.0
    %2667 = vmatpush1.msra.mxu0 0.0
    %2668 = vmatprep.subr.mxu0 0.0
    %2669 = vmatpush1.msra.mxu0 0.0
    %2670 = vmatprep.subr.mxu0 0.0
    %2671 = vmatpush1.msra.mxu0 0.0
    %2672 = vmatprep.subr.mxu0 0.0
    %2673 = vmatpush1.msra.mxu0 %v2637
    %2674 = vmatprep.subr.mxu0 0.0
    %2675 = vmatpush2.msra.mxu0 0.0
    %2676 = vmatprep.subr.mxu0 0.0
    %2677 = vmatpush2.msra.mxu0 0.0
    %2678 = vmatprep.subr.mxu0 0.0
    %2679 = vmatpush2.msra.mxu0 0.0
    %2680 = vmatprep.subr.mxu0 0.0
    %2681 = vmatpush2.msra.mxu0 0.0
    %2682 = vmatprep.subr.mxu0 0.0
    %2683 = vmatpush2.msra.mxu0 0.0
    %2684 = vmatprep.subr.mxu0 0.0
    %2685 = vmatpush2.msra.mxu0 0.0
    %2686 = vmatprep.subr.mxu0 0.0
    %2687 = vmatpush2.msra.mxu0 0.0
    %2688 = vmatprep.subr.mxu0 0.0
    %2689 = vmatpush2.msra.mxu0 0.0
    %2690 = vmatprep.subr.mxu0 0.0
    %2691 = vmatpush2.msra.mxu0 0.0
    %2692 = vmatprep.subr.mxu0 0.0
    %2693 = vmatpush2.msra.mxu0 0.0
    %2694 = vmatprep.subr.mxu0 0.0
    %2695 = vmatpush2.msra.mxu0 0.0
    %2696 = vmatprep.subr.mxu0 0.0
    %2697 = vmatpush2.msra.mxu0 0.0
    %2698 = vmatprep.subr.mxu0 0.0
    %2699 = vmatpush2.msra.mxu0 0.0
    %2700 = vmatprep.subr.mxu0 0.0
    %2701 = vmatpush2.msra.mxu0 0.0
    %2702 = vmatprep.subr.mxu0 0.0
    %2703 = vmatpush2.msra.mxu0 0.0
    %2704 = vmatprep.subr.mxu0 0.0
    %2705 = vmatpush2.msra.mxu0 0.0
    %2706 = vmatprep.mubr.f32.mxu0 0.0
    %2707 = vmatmul.mubr.f32.gmra.mxu0 %v2640
    %v2708 = vpop.f32.mrf.mxu0
    %v2709 = vadd.f32 0.0, %v2708
    %v2710 = vpop.f32.mrf.mxu0
    %2711 = vdwg.mxu0
    %2714 = vrot.lane.b32.xlu0 %v2633, 8
    %v2715 = vpop.permute.xlu0 %2714
    %2716 = vrot.lane.b32.xlu0 %v2709, 8
    %v2717 = vpop.permute.xlu0 %2716
    %2720 = vst.msk [vmem:[#allocation2] sm:$0xff] %vm873, %v2715
    %2721 = vst.msk [vmem:[#allocation2 + $0x8] sm:$0xff] %vm873, %v2717
    %2722 = vrot.lane.b32.xlu0 %v2044, 112
    %v2723 = vpop.permute.xlu0 %2722
    %2724 = vrot.lane.b32.xlu0 %v2044, 80
    %v2725 = vpop.permute.xlu0 %2724
    %v2726 = vsel %vm207, %v2723, 0
    %v2728 = vsel %vm207, %v2725, 0
    %2730 = vmatprep.subr.mxu0 0.0
    %2731 = vmatpush1.xpose.msra.mxu0 0.0
    %2732 = vmatprep.subr.mxu0 0.0
    %2733 = vmatpush1.xpose.msra.mxu0 0.0
    %2734 = vmatprep.subr.mxu0 0.0
    %2735 = vmatpush1.xpose.msra.mxu0 0.0
    %2736 = vmatprep.subr.mxu0 0.0
    %2737 = vmatpush1.xpose.msra.mxu0 0.0
    %2738 = vmatprep.subr.mxu0 0.0
    %2739 = vmatpush1.xpose.msra.mxu0 0.0
    %2740 = vmatprep.subr.mxu0 0.0
    %2741 = vmatpush1.xpose.msra.mxu0 0.0
    %2742 = vmatprep.subr.mxu0 0.0
    %2743 = vmatpush1.xpose.msra.mxu0 0.0
    %2744 = vmatprep.subr.mxu0 0.0
    %2745 = vmatpush1.xpose.msra.mxu0 0.0
    %2746 = vmatprep.subr.mxu0 0.0
    %2747 = vmatpush1.xpose.msra.mxu0 0.0
    %2748 = vmatprep.subr.mxu0 0.0
    %2749 = vmatpush1.xpose.msra.mxu0 0.0
    %2750 = vmatprep.subr.mxu0 0.0
    %2751 = vmatpush1.xpose.msra.mxu0 0.0
    %2752 = vmatprep.subr.mxu0 0.0
    %2753 = vmatpush1.xpose.msra.mxu0 0.0
    %2754 = vmatprep.subr.mxu0 0.0
    %2755 = vmatpush1.xpose.msra.mxu0 0.0
    %2756 = vmatprep.subr.mxu0 0.0
    %2757 = vmatpush1.xpose.msra.mxu0 0.0
    %2758 = vmatprep.subr.mxu0 0.0
    %2759 = vmatpush1.xpose.msra.mxu0 0.0
    %2760 = vmatprep.subr.mxu0 0.0
    %2761 = vmatpush1.xpose.msra.mxu0 %v2728
    %2762 = vmatprep.subr.mxu0 0.0
    %2763 = vmatpush2.xpose.msra.mxu0 0.0
    %2764 = vmatprep.subr.mxu0 0.0
    %2765 = vmatpush2.xpose.msra.mxu0 0.0
    %2766 = vmatprep.subr.mxu0 0.0
    %2767 = vmatpush2.xpose.msra.mxu0 0.0
    %2768 = vmatprep.subr.mxu0 0.0
    %2769 = vmatpush2.xpose.msra.mxu0 0.0
    %2770 = vmatprep.subr.mxu0 0.0
    %2771 = vmatpush2.xpose.msra.mxu0 0.0
    %2772 = vmatprep.subr.mxu0 0.0
    %2773 = vmatpush2.xpose.msra.mxu0 0.0
    %2774 = vmatprep.subr.mxu0 0.0
    %2775 = vmatpush2.xpose.msra.mxu0 0.0
    %2776 = vmatprep.subr.mxu0 0.0
    %2777 = vmatpush2.xpose.msra.mxu0 0.0
    %2778 = vmatprep.subr.mxu0 0.0
    %2779 = vmatpush2.xpose.msra.mxu0 0.0
    %2780 = vmatprep.subr.mxu0 0.0
    %2781 = vmatpush2.xpose.msra.mxu0 0.0
    %2782 = vmatprep.subr.mxu0 0.0
    %2783 = vmatpush2.xpose.msra.mxu0 0.0
    %2784 = vmatprep.subr.mxu0 0.0
    %2785 = vmatpush2.xpose.msra.mxu0 0.0
    %2786 = vmatprep.subr.mxu0 0.0
    %2787 = vmatpush2.xpose.msra.mxu0 0.0
    %2788 = vmatprep.subr.mxu0 0.0
    %2789 = vmatpush2.xpose.msra.mxu0 0.0
    %2790 = vmatprep.subr.mxu0 0.0
    %2791 = vmatpush2.xpose.msra.mxu0 0.0
    %2792 = vmatprep.subr.mxu0 0.0
    %2793 = vmatpush2.xpose.msra.mxu0 0.0
    %2794 = vmatprep.mubr.f32.mxu0 0.0
    %2795 = vmatmul.mubr.f32.gmra.mxu0 %v2726
    %v2796 = vpop.f32.mrf.mxu0
    %v2797 = vadd.f32 %v65, %v2796
    %v2798 = vpop.f32.mrf.mxu0
    %2799 = vdwg.mxu0
    %2800 = vrot.lane.b32.xlu0 %v2049, 112
    %v2801 = vpop.permute.xlu0 %2800
    %2802 = vrot.lane.b32.xlu0 %v2049, 80
    %v2803 = vpop.permute.xlu0 %2802
    %v2804 = vsel %vm207, %v2801, 0
    %v2806 = vsel %vm207, %v2803, 0
    %2808 = vmatprep.subr.mxu0 0.0
    %2809 = vmatpush1.xpose.msra.mxu0 0.0
    %2810 = vmatprep.subr.mxu0 0.0
    %2811 = vmatpush1.xpose.msra.mxu0 0.0
    %2812 = vmatprep.subr.mxu0 0.0
    %2813 = vmatpush1.xpose.msra.mxu0 0.0
    %2814 = vmatprep.subr.mxu0 0.0
    %2815 = vmatpush1.xpose.msra.mxu0 0.0
    %2816 = vmatprep.subr.mxu0 0.0
    %2817 = vmatpush1.xpose.msra.mxu0 0.0
    %2818 = vmatprep.subr.mxu0 0.0
    %2819 = vmatpush1.xpose.msra.mxu0 0.0
    %2820 = vmatprep.subr.mxu0 0.0
    %2821 = vmatpush1.xpose.msra.mxu0 0.0
    %2822 = vmatprep.subr.mxu0 0.0
    %2823 = vmatpush1.xpose.msra.mxu0 0.0
    %2824 = vmatprep.subr.mxu0 0.0
    %2825 = vmatpush1.xpose.msra.mxu0 0.0
    %2826 = vmatprep.subr.mxu0 0.0
    %2827 = vmatpush1.xpose.msra.mxu0 0.0
    %2828 = vmatprep.subr.mxu0 0.0
    %2829 = vmatpush1.xpose.msra.mxu0 0.0
    %2830 = vmatprep.subr.mxu0 0.0
    %2831 = vmatpush1.xpose.msra.mxu0 0.0
    %2832 = vmatprep.subr.mxu0 0.0
    %2833 = vmatpush1.xpose.msra.mxu0 0.0
    %2834 = vmatprep.subr.mxu0 0.0
    %2835 = vmatpush1.xpose.msra.mxu0 0.0
    %2836 = vmatprep.subr.mxu0 0.0
    %2837 = vmatpush1.xpose.msra.mxu0 0.0
    %2838 = vmatprep.subr.mxu0 0.0
    %2839 = vmatpush1.xpose.msra.mxu0 %v2806
    %2840 = vmatprep.subr.mxu0 0.0
    %2841 = vmatpush2.xpose.msra.mxu0 0.0
    %2842 = vmatprep.subr.mxu0 0.0
    %2843 = vmatpush2.xpose.msra.mxu0 0.0
    %2844 = vmatprep.subr.mxu0 0.0
    %2845 = vmatpush2.xpose.msra.mxu0 0.0
    %2846 = vmatprep.subr.mxu0 0.0
    %2847 = vmatpush2.xpose.msra.mxu0 0.0
    %2848 = vmatprep.subr.mxu0 0.0
    %2849 = vmatpush2.xpose.msra.mxu0 0.0
    %2850 = vmatprep.subr.mxu0 0.0
    %2851 = vmatpush2.xpose.msra.mxu0 0.0
    %2852 = vmatprep.subr.mxu0 0.0
    %2853 = vmatpush2.xpose.msra.mxu0 0.0
    %2854 = vmatprep.subr.mxu0 0.0
    %2855 = vmatpush2.xpose.msra.mxu0 0.0
    %2856 = vmatprep.subr.mxu0 0.0
    %2857 = vmatpush2.xpose.msra.mxu0 0.0
    %2858 = vmatprep.subr.mxu0 0.0
    %2859 = vmatpush2.xpose.msra.mxu0 0.0
    %2860 = vmatprep.subr.mxu0 0.0
    %2861 = vmatpush2.xpose.msra.mxu0 0.0
    %2862 = vmatprep.subr.mxu0 0.0
    %2863 = vmatpush2.xpose.msra.mxu0 0.0
    %2864 = vmatprep.subr.mxu0 0.0
    %2865 = vmatpush2.xpose.msra.mxu0 0.0
    %2866 = vmatprep.subr.mxu0 0.0
    %2867 = vmatpush2.xpose.msra.mxu0 0.0
    %2868 = vmatprep.subr.mxu0 0.0
    %2869 = vmatpush2.xpose.msra.mxu0 0.0
    %2870 = vmatprep.subr.mxu0 0.0
    %2871 = vmatpush2.xpose.msra.mxu0 0.0
    %2872 = vmatprep.mubr.f32.mxu0 0.0
    %2873 = vmatmul.mubr.f32.gmra.mxu0 %v2804
    %v2874 = vpop.f32.mrf.mxu0
    %v2875 = vadd.f32 %v65, %v2874
    %v2876 = vpop.f32.mrf.mxu0
    %2877 = vdwg.mxu0
    %v2878 = vsel %vm207, %v2797, -inf
    %2879 = vmax.xlane.f32.xlu0 %v2878
    %v2880 = vpop.xlane.xlu0 %2879
    %v2881 = vsel %vm207, %v2875, -inf
    %2882 = vmax.xlane.f32.xlu0 %v2881
    %v2883 = vpop.xlane.xlu0 %2882
    %v2884 = vsub.f32 %v2797, %v2880
    %v2885 = vsub.f32 %v2875, %v2883
    %v2886 = vmul.f32 %v2884, 1.442695
    %v2887 = vpow.pop %v2886
    %v2888 = vmul.f32 %v2885, 1.442695
    %v2889 = vpow.pop %v2888
    %v2890 = vsel %vm207, %v2887, 0.0
    %2891 = vadd.xlane.f32.xlu0 %v2890
    %v2892 = vpop.xlane.xlu0 %2891
    %v2893 = vsel %vm207, %v2889, 0.0
    %2894 = vadd.xlane.f32.xlu0 %v2893
    %v2895 = vpop.xlane.xlu0 %2894
    %v2896 = vrcp.pop %v2892
    %v2897 = vrcp.pop %v2895
    %v2898 = vmul.f32 %v2887, %v2896
    %v2899 = vmul.f32 %v2889, %v2897
    %2900 = vrot.lane.b32.xlu0 %v2044, 48
    %v2901 = vpop.permute.xlu0 %2900
    %v2904 = vsel %vm207, %v2898, 0
    %2906 = vmatprep.subr.mxu0 0.0
    %2907 = vmatpush1.msra.mxu0 0.0
    %2908 = vmatprep.subr.mxu0 0.0
    %2909 = vmatpush1.msra.mxu0 0.0
    %2910 = vmatprep.subr.mxu0 0.0
    %2911 = vmatpush1.msra.mxu0 0.0
    %2912 = vmatprep.subr.mxu0 0.0
    %2913 = vmatpush1.msra.mxu0 0.0
    %2914 = vmatprep.subr.mxu0 0.0
    %2915 = vmatpush1.msra.mxu0 0.0
    %2916 = vmatprep.subr.mxu0 0.0
    %2917 = vmatpush1.msra.mxu0 0.0
    %2918 = vmatprep.subr.mxu0 0.0
    %2919 = vmatpush1.msra.mxu0 0.0
    %2920 = vmatprep.subr.mxu0 0.0
    %2921 = vmatpush1.msra.mxu0 0.0
    %2922 = vmatprep.subr.mxu0 0.0
    %2923 = vmatpush1.msra.mxu0 0.0
    %2924 = vmatprep.subr.mxu0 0.0
    %2925 = vmatpush1.msra.mxu0 0.0
    %2926 = vmatprep.subr.mxu0 0.0
    %2927 = vmatpush1.msra.mxu0 0.0
    %2928 = vmatprep.subr.mxu0 0.0
    %2929 = vmatpush1.msra.mxu0 0.0
    %2930 = vmatprep.subr.mxu0 0.0
    %2931 = vmatpush1.msra.mxu0 0.0
    %2932 = vmatprep.subr.mxu0 0.0
    %2933 = vmatpush1.msra.mxu0 0.0
    %2934 = vmatprep.subr.mxu0 0.0
    %2935 = vmatpush1.msra.mxu0 0.0
    %2936 = vmatprep.subr.mxu0 0.0
    %2937 = vmatpush1.msra.mxu0 %v2901
    %2938 = vmatprep.subr.mxu0 0.0
    %2939 = vmatpush2.msra.mxu0 0.0
    %2940 = vmatprep.subr.mxu0 0.0
    %2941 = vmatpush2.msra.mxu0 0.0
    %2942 = vmatprep.subr.mxu0 0.0
    %2943 = vmatpush2.msra.mxu0 0.0
    %2944 = vmatprep.subr.mxu0 0.0
    %2945 = vmatpush2.msra.mxu0 0.0
    %2946 = vmatprep.subr.mxu0 0.0
    %2947 = vmatpush2.msra.mxu0 0.0
    %2948 = vmatprep.subr.mxu0 0.0
    %2949 = vmatpush2.msra.mxu0 0.0
    %2950 = vmatprep.subr.mxu0 0.0
    %2951 = vmatpush2.msra.mxu0 0.0
    %2952 = vmatprep.subr.mxu0 0.0
    %2953 = vmatpush2.msra.mxu0 0.0
    %2954 = vmatprep.subr.mxu0 0.0
    %2955 = vmatpush2.msra.mxu0 0.0
    %2956 = vmatprep.subr.mxu0 0.0
    %2957 = vmatpush2.msra.mxu0 0.0
    %2958 = vmatprep.subr.mxu0 0.0
    %2959 = vmatpush2.msra.mxu0 0.0
    %2960 = vmatprep.subr.mxu0 0.0
    %2961 = vmatpush2.msra.mxu0 0.0
    %2962 = vmatprep.subr.mxu0 0.0
    %2963 = vmatpush2.msra.mxu0 0.0
    %2964 = vmatprep.subr.mxu0 0.0
    %2965 = vmatpush2.msra.mxu0 0.0
    %2966 = vmatprep.subr.mxu0 0.0
    %2967 = vmatpush2.msra.mxu0 0.0
    %2968 = vmatprep.subr.mxu0 0.0
    %2969 = vmatpush2.msra.mxu0 0.0
    %2970 = vmatprep.mubr.f32.mxu0 0.0
    %2971 = vmatmul.mubr.f32.gmra.mxu0 %v2904
    %v2972 = vpop.f32.mrf.mxu0
    %v2973 = vadd.f32 0.0, %v2972
    %v2974 = vpop.f32.mrf.mxu0
    %2975 = vdwg.mxu0
    %2976 = vrot.lane.b32.xlu0 %v2049, 48
    %v2977 = vpop.permute.xlu0 %2976
    %v2980 = vsel %vm207, %v2899, 0
    %2982 = vmatprep.subr.mxu0 0.0
    %2983 = vmatpush1.msra.mxu0 0.0
    %2984 = vmatprep.subr.mxu0 0.0
    %2985 = vmatpush1.msra.mxu0 0.0
    %2986 = vmatprep.subr.mxu0 0.0
    %2987 = vmatpush1.msra.mxu0 0.0
    %2988 = vmatprep.subr.mxu0 0.0
    %2989 = vmatpush1.msra.mxu0 0.0
    %2990 = vmatprep.subr.mxu0 0.0
    %2991 = vmatpush1.msra.mxu0 0.0
    %2992 = vmatprep.subr.mxu0 0.0
    %2993 = vmatpush1.msra.mxu0 0.0
    %2994 = vmatprep.subr.mxu0 0.0
    %2995 = vmatpush1.msra.mxu0 0.0
    %2996 = vmatprep.subr.mxu0 0.0
    %2997 = vmatpush1.msra.mxu0 0.0
    %2998 = vmatprep.subr.mxu0 0.0
    %2999 = vmatpush1.msra.mxu0 0.0
    %3000 = vmatprep.subr.mxu0 0.0
    %3001 = vmatpush1.msra.mxu0 0.0
    %3002 = vmatprep.subr.mxu0 0.0
    %3003 = vmatpush1.msra.mxu0 0.0
    %3004 = vmatprep.subr.mxu0 0.0
    %3005 = vmatpush1.msra.mxu0 0.0
    %3006 = vmatprep.subr.mxu0 0.0
    %3007 = vmatpush1.msra.mxu0 0.0
    %3008 = vmatprep.subr.mxu0 0.0
    %3009 = vmatpush1.msra.mxu0 0.0
    %3010 = vmatprep.subr.mxu0 0.0
    %3011 = vmatpush1.msra.mxu0 0.0
    %3012 = vmatprep.subr.mxu0 0.0
    %3013 = vmatpush1.msra.mxu0 %v2977
    %3014 = vmatprep.subr.mxu0 0.0
    %3015 = vmatpush2.msra.mxu0 0.0
    %3016 = vmatprep.subr.mxu0 0.0
    %3017 = vmatpush2.msra.mxu0 0.0
    %3018 = vmatprep.subr.mxu0 0.0
    %3019 = vmatpush2.msra.mxu0 0.0
    %3020 = vmatprep.subr.mxu0 0.0
    %3021 = vmatpush2.msra.mxu0 0.0
    %3022 = vmatprep.subr.mxu0 0.0
    %3023 = vmatpush2.msra.mxu0 0.0
    %3024 = vmatprep.subr.mxu0 0.0
    %3025 = vmatpush2.msra.mxu0 0.0
    %3026 = vmatprep.subr.mxu0 0.0
    %3027 = vmatpush2.msra.mxu0 0.0
    %3028 = vmatprep.subr.mxu0 0.0
    %3029 = vmatpush2.msra.mxu0 0.0
    %3030 = vmatprep.subr.mxu0 0.0
    %3031 = vmatpush2.msra.mxu0 0.0
    %3032 = vmatprep.subr.mxu0 0.0
    %3033 = vmatpush2.msra.mxu0 0.0
    %3034 = vmatprep.subr.mxu0 0.0
    %3035 = vmatpush2.msra.mxu0 0.0
    %3036 = vmatprep.subr.mxu0 0.0
    %3037 = vmatpush2.msra.mxu0 0.0
    %3038 = vmatprep.subr.mxu0 0.0
    %3039 = vmatpush2.msra.mxu0 0.0
    %3040 = vmatprep.subr.mxu0 0.0
    %3041 = vmatpush2.msra.mxu0 0.0
    %3042 = vmatprep.subr.mxu0 0.0
    %3043 = vmatpush2.msra.mxu0 0.0
    %3044 = vmatprep.subr.mxu0 0.0
    %3045 = vmatpush2.msra.mxu0 0.0
    %3046 = vmatprep.mubr.f32.mxu0 0.0
    %3047 = vmatmul.mubr.f32.gmra.mxu0 %v2980
    %v3048 = vpop.f32.mrf.mxu0
    %v3049 = vadd.f32 0.0, %v3048
    %v3050 = vpop.f32.mrf.mxu0
    %3051 = vdwg.mxu0
    %3054 = vrot.lane.b32.xlu0 %v2973, 16
    %v3055 = vpop.permute.xlu0 %3054
    %3056 = vrot.lane.b32.xlu0 %v3049, 16
    %v3057 = vpop.permute.xlu0 %3056
    %3060 = vst.msk [vmem:[#allocation2] sm:$0xff] %vm1214, %v3055
    %3061 = vst.msk [vmem:[#allocation2 + $0x8] sm:$0xff] %vm1214, %v3057
    %3062 = vrot.lane.b32.xlu0 %v2044, 104
    %v3063 = vpop.permute.xlu0 %3062
    %3064 = vrot.lane.b32.xlu0 %v2044, 72
    %v3065 = vpop.permute.xlu0 %3064
    %v3066 = vsel %vm207, %v3063, 0
    %v3068 = vsel %vm207, %v3065, 0
    %3070 = vmatprep.subr.mxu0 0.0
    %3071 = vmatpush1.xpose.msra.mxu0 0.0
    %3072 = vmatprep.subr.mxu0 0.0
    %3073 = vmatpush1.xpose.msra.mxu0 0.0
    %3074 = vmatprep.subr.mxu0 0.0
    %3075 = vmatpush1.xpose.msra.mxu0 0.0
    %3076 = vmatprep.subr.mxu0 0.0
    %3077 = vmatpush1.xpose.msra.mxu0 0.0
    %3078 = vmatprep.subr.mxu0 0.0
    %3079 = vmatpush1.xpose.msra.mxu0 0.0
    %3080 = vmatprep.subr.mxu0 0.0
    %3081 = vmatpush1.xpose.msra.mxu0 0.0
    %3082 = vmatprep.subr.mxu0 0.0
    %3083 = vmatpush1.xpose.msra.mxu0 0.0
    %3084 = vmatprep.subr.mxu0 0.0
    %3085 = vmatpush1.xpose.msra.mxu0 0.0
    %3086 = vmatprep.subr.mxu0 0.0
    %3087 = vmatpush1.xpose.msra.mxu0 0.0
    %3088 = vmatprep.subr.mxu0 0.0
    %3089 = vmatpush1.xpose.msra.mxu0 0.0
    %3090 = vmatprep.subr.mxu0 0.0
    %3091 = vmatpush1.xpose.msra.mxu0 0.0
    %3092 = vmatprep.subr.mxu0 0.0
    %3093 = vmatpush1.xpose.msra.mxu0 0.0
    %3094 = vmatprep.subr.mxu0 0.0
    %3095 = vmatpush1.xpose.msra.mxu0 0.0
    %3096 = vmatprep.subr.mxu0 0.0
    %3097 = vmatpush1.xpose.msra.mxu0 0.0
    %3098 = vmatprep.subr.mxu0 0.0
    %3099 = vmatpush1.xpose.msra.mxu0 0.0
    %3100 = vmatprep.subr.mxu0 0.0
    %3101 = vmatpush1.xpose.msra.mxu0 %v3068
    %3102 = vmatprep.subr.mxu0 0.0
    %3103 = vmatpush2.xpose.msra.mxu0 0.0
    %3104 = vmatprep.subr.mxu0 0.0
    %3105 = vmatpush2.xpose.msra.mxu0 0.0
    %3106 = vmatprep.subr.mxu0 0.0
    %3107 = vmatpush2.xpose.msra.mxu0 0.0
    %3108 = vmatprep.subr.mxu0 0.0
    %3109 = vmatpush2.xpose.msra.mxu0 0.0
    %3110 = vmatprep.subr.mxu0 0.0
    %3111 = vmatpush2.xpose.msra.mxu0 0.0
    %3112 = vmatprep.subr.mxu0 0.0
    %3113 = vmatpush2.xpose.msra.mxu0 0.0
    %3114 = vmatprep.subr.mxu0 0.0
    %3115 = vmatpush2.xpose.msra.mxu0 0.0
    %3116 = vmatprep.subr.mxu0 0.0
    %3117 = vmatpush2.xpose.msra.mxu0 0.0
    %3118 = vmatprep.subr.mxu0 0.0
    %3119 = vmatpush2.xpose.msra.mxu0 0.0
    %3120 = vmatprep.subr.mxu0 0.0
    %3121 = vmatpush2.xpose.msra.mxu0 0.0
    %3122 = vmatprep.subr.mxu0 0.0
    %3123 = vmatpush2.xpose.msra.mxu0 0.0
    %3124 = vmatprep.subr.mxu0 0.0
    %3125 = vmatpush2.xpose.msra.mxu0 0.0
    %3126 = vmatprep.subr.mxu0 0.0
    %3127 = vmatpush2.xpose.msra.mxu0 0.0
    %3128 = vmatprep.subr.mxu0 0.0
    %3129 = vmatpush2.xpose.msra.mxu0 0.0
    %3130 = vmatprep.subr.mxu0 0.0
    %3131 = vmatpush2.xpose.msra.mxu0 0.0
    %3132 = vmatprep.subr.mxu0 0.0
    %3133 = vmatpush2.xpose.msra.mxu0 0.0
    %3134 = vmatprep.mubr.f32.mxu0 0.0
    %3135 = vmatmul.mubr.f32.gmra.mxu0 %v3066
    %v3136 = vpop.f32.mrf.mxu0
    %v3137 = vadd.f32 %v65, %v3136
    %v3138 = vpop.f32.mrf.mxu0
    %3139 = vdwg.mxu0
    %3140 = vrot.lane.b32.xlu0 %v2049, 104
    %v3141 = vpop.permute.xlu0 %3140
    %3142 = vrot.lane.b32.xlu0 %v2049, 72
    %v3143 = vpop.permute.xlu0 %3142
    %v3144 = vsel %vm207, %v3141, 0
    %v3146 = vsel %vm207, %v3143, 0
    %3148 = vmatprep.subr.mxu0 0.0
    %3149 = vmatpush1.xpose.msra.mxu0 0.0
    %3150 = vmatprep.subr.mxu0 0.0
    %3151 = vmatpush1.xpose.msra.mxu0 0.0
    %3152 = vmatprep.subr.mxu0 0.0
    %3153 = vmatpush1.xpose.msra.mxu0 0.0
    %3154 = vmatprep.subr.mxu0 0.0
    %3155 = vmatpush1.xpose.msra.mxu0 0.0
    %3156 = vmatprep.subr.mxu0 0.0
    %3157 = vmatpush1.xpose.msra.mxu0 0.0
    %3158 = vmatprep.subr.mxu0 0.0
    %3159 = vmatpush1.xpose.msra.mxu0 0.0
    %3160 = vmatprep.subr.mxu0 0.0
    %3161 = vmatpush1.xpose.msra.mxu0 0.0
    %3162 = vmatprep.subr.mxu0 0.0
    %3163 = vmatpush1.xpose.msra.mxu0 0.0
    %3164 = vmatprep.subr.mxu0 0.0
    %3165 = vmatpush1.xpose.msra.mxu0 0.0
    %3166 = vmatprep.subr.mxu0 0.0
    %3167 = vmatpush1.xpose.msra.mxu0 0.0
    %3168 = vmatprep.subr.mxu0 0.0
    %3169 = vmatpush1.xpose.msra.mxu0 0.0
    %3170 = vmatprep.subr.mxu0 0.0
    %3171 = vmatpush1.xpose.msra.mxu0 0.0
    %3172 = vmatprep.subr.mxu0 0.0
    %3173 = vmatpush1.xpose.msra.mxu0 0.0
    %3174 = vmatprep.subr.mxu0 0.0
    %3175 = vmatpush1.xpose.msra.mxu0 0.0
    %3176 = vmatprep.subr.mxu0 0.0
    %3177 = vmatpush1.xpose.msra.mxu0 0.0
    %3178 = vmatprep.subr.mxu0 0.0
    %3179 = vmatpush1.xpose.msra.mxu0 %v3146
    %3180 = vmatprep.subr.mxu0 0.0
    %3181 = vmatpush2.xpose.msra.mxu0 0.0
    %3182 = vmatprep.subr.mxu0 0.0
    %3183 = vmatpush2.xpose.msra.mxu0 0.0
    %3184 = vmatprep.subr.mxu0 0.0
    %3185 = vmatpush2.xpose.msra.mxu0 0.0
    %3186 = vmatprep.subr.mxu0 0.0
    %3187 = vmatpush2.xpose.msra.mxu0 0.0
    %3188 = vmatprep.subr.mxu0 0.0
    %3189 = vmatpush2.xpose.msra.mxu0 0.0
    %3190 = vmatprep.subr.mxu0 0.0
    %3191 = vmatpush2.xpose.msra.mxu0 0.0
    %3192 = vmatprep.subr.mxu0 0.0
    %3193 = vmatpush2.xpose.msra.mxu0 0.0
    %3194 = vmatprep.subr.mxu0 0.0
    %3195 = vmatpush2.xpose.msra.mxu0 0.0
    %3196 = vmatprep.subr.mxu0 0.0
    %3197 = vmatpush2.xpose.msra.mxu0 0.0
    %3198 = vmatprep.subr.mxu0 0.0
    %3199 = vmatpush2.xpose.msra.mxu0 0.0
    %3200 = vmatprep.subr.mxu0 0.0
    %3201 = vmatpush2.xpose.msra.mxu0 0.0
    %3202 = vmatprep.subr.mxu0 0.0
    %3203 = vmatpush2.xpose.msra.mxu0 0.0
    %3204 = vmatprep.subr.mxu0 0.0
    %3205 = vmatpush2.xpose.msra.mxu0 0.0
    %3206 = vmatprep.subr.mxu0 0.0
    %3207 = vmatpush2.xpose.msra.mxu0 0.0
    %3208 = vmatprep.subr.mxu0 0.0
    %3209 = vmatpush2.xpose.msra.mxu0 0.0
    %3210 = vmatprep.subr.mxu0 0.0
    %3211 = vmatpush2.xpose.msra.mxu0 0.0
    %3212 = vmatprep.mubr.f32.mxu0 0.0
    %3213 = vmatmul.mubr.f32.gmra.mxu0 %v3144
    %v3214 = vpop.f32.mrf.mxu0
    %v3215 = vadd.f32 %v65, %v3214
    %v3216 = vpop.f32.mrf.mxu0
    %3217 = vdwg.mxu0
    %v3218 = vsel %vm207, %v3137, -inf
    %3219 = vmax.xlane.f32.xlu0 %v3218
    %v3220 = vpop.xlane.xlu0 %3219
    %v3221 = vsel %vm207, %v3215, -inf
    %3222 = vmax.xlane.f32.xlu0 %v3221
    %v3223 = vpop.xlane.xlu0 %3222
    %v3224 = vsub.f32 %v3137, %v3220
    %v3225 = vsub.f32 %v3215, %v3223
    %v3226 = vmul.f32 %v3224, 1.442695
    %v3227 = vpow.pop %v3226
    %v3228 = vmul.f32 %v3225, 1.442695
    %v3229 = vpow.pop %v3228
    %v3230 = vsel %vm207, %v3227, 0.0
    %3231 = vadd.xlane.f32.xlu0 %v3230
    %v3232 = vpop.xlane.xlu0 %3231
    %v3233 = vsel %vm207, %v3229, 0.0
    %3234 = vadd.xlane.f32.xlu0 %v3233
    %v3235 = vpop.xlane.xlu0 %3234
    %v3236 = vrcp.pop %v3232
    %v3237 = vrcp.pop %v3235
    %v3238 = vmul.f32 %v3227, %v3236
    %v3239 = vmul.f32 %v3229, %v3237
    %3240 = vrot.lane.b32.xlu0 %v2044, 40
    %v3241 = vpop.permute.xlu0 %3240
    %v3244 = vsel %vm207, %v3238, 0
    %3246 = vmatprep.subr.mxu0 0.0
    %3247 = vmatpush1.msra.mxu0 0.0
    %3248 = vmatprep.subr.mxu0 0.0
    %3249 = vmatpush1.msra.mxu0 0.0
    %3250 = vmatprep.subr.mxu0 0.0
    %3251 = vmatpush1.msra.mxu0 0.0
    %3252 = vmatprep.subr.mxu0 0.0
    %3253 = vmatpush1.msra.mxu0 0.0
    %3254 = vmatprep.subr.mxu0 0.0
    %3255 = vmatpush1.msra.mxu0 0.0
    %3256 = vmatprep.subr.mxu0 0.0
    %3257 = vmatpush1.msra.mxu0 0.0
    %3258 = vmatprep.subr.mxu0 0.0
    %3259 = vmatpush1.msra.mxu0 0.0
    %3260 = vmatprep.subr.mxu0 0.0
    %3261 = vmatpush1.msra.mxu0 0.0
    %3262 = vmatprep.subr.mxu0 0.0
    %3263 = vmatpush1.msra.mxu0 0.0
    %3264 = vmatprep.subr.mxu0 0.0
    %3265 = vmatpush1.msra.mxu0 0.0
    %3266 = vmatprep.subr.mxu0 0.0
    %3267 = vmatpush1.msra.mxu0 0.0
    %3268 = vmatprep.subr.mxu0 0.0
    %3269 = vmatpush1.msra.mxu0 0.0
    %3270 = vmatprep.subr.mxu0 0.0
    %3271 = vmatpush1.msra.mxu0 0.0
    %3272 = vmatprep.subr.mxu0 0.0
    %3273 = vmatpush1.msra.mxu0 0.0
    %3274 = vmatprep.subr.mxu0 0.0
    %3275 = vmatpush1.msra.mxu0 0.0
    %3276 = vmatprep.subr.mxu0 0.0
    %3277 = vmatpush1.msra.mxu0 %v3241
    %3278 = vmatprep.subr.mxu0 0.0
    %3279 = vmatpush2.msra.mxu0 0.0
    %3280 = vmatprep.subr.mxu0 0.0
    %3281 = vmatpush2.msra.mxu0 0.0
    %3282 = vmatprep.subr.mxu0 0.0
    %3283 = vmatpush2.msra.mxu0 0.0
    %3284 = vmatprep.subr.mxu0 0.0
    %3285 = vmatpush2.msra.mxu0 0.0
    %3286 = vmatprep.subr.mxu0 0.0
    %3287 = vmatpush2.msra.mxu0 0.0
    %3288 = vmatprep.subr.mxu0 0.0
    %3289 = vmatpush2.msra.mxu0 0.0
    %3290 = vmatprep.subr.mxu0 0.0
    %3291 = vmatpush2.msra.mxu0 0.0
    %3292 = vmatprep.subr.mxu0 0.0
    %3293 = vmatpush2.msra.mxu0 0.0
    %3294 = vmatprep.subr.mxu0 0.0
    %3295 = vmatpush2.msra.mxu0 0.0
    %3296 = vmatprep.subr.mxu0 0.0
    %3297 = vmatpush2.msra.mxu0 0.0
    %3298 = vmatprep.subr.mxu0 0.0
    %3299 = vmatpush2.msra.mxu0 0.0
    %3300 = vmatprep.subr.mxu0 0.0
    %3301 = vmatpush2.msra.mxu0 0.0
    %3302 = vmatprep.subr.mxu0 0.0
    %3303 = vmatpush2.msra.mxu0 0.0
    %3304 = vmatprep.subr.mxu0 0.0
    %3305 = vmatpush2.msra.mxu0 0.0
    %3306 = vmatprep.subr.mxu0 0.0
    %3307 = vmatpush2.msra.mxu0 0.0
    %3308 = vmatprep.subr.mxu0 0.0
    %3309 = vmatpush2.msra.mxu0 0.0
    %3310 = vmatprep.mubr.f32.mxu0 0.0
    %3311 = vmatmul.mubr.f32.gmra.mxu0 %v3244
    %v3312 = vpop.f32.mrf.mxu0
    %v3313 = vadd.f32 0.0, %v3312
    %v3314 = vpop.f32.mrf.mxu0
    %3315 = vdwg.mxu0
    %3316 = vrot.lane.b32.xlu0 %v2049, 40
    %v3317 = vpop.permute.xlu0 %3316
    %v3320 = vsel %vm207, %v3239, 0
    %3322 = vmatprep.subr.mxu0 0.0
    %3323 = vmatpush1.msra.mxu0 0.0
    %3324 = vmatprep.subr.mxu0 0.0
    %3325 = vmatpush1.msra.mxu0 0.0
    %3326 = vmatprep.subr.mxu0 0.0
    %3327 = vmatpush1.msra.mxu0 0.0
    %3328 = vmatprep.subr.mxu0 0.0
    %3329 = vmatpush1.msra.mxu0 0.0
    %3330 = vmatprep.subr.mxu0 0.0
    %3331 = vmatpush1.msra.mxu0 0.0
    %3332 = vmatprep.subr.mxu0 0.0
    %3333 = vmatpush1.msra.mxu0 0.0
    %3334 = vmatprep.subr.mxu0 0.0
    %3335 = vmatpush1.msra.mxu0 0.0
    %3336 = vmatprep.subr.mxu0 0.0
    %3337 = vmatpush1.msra.mxu0 0.0
    %3338 = vmatprep.subr.mxu0 0.0
    %3339 = vmatpush1.msra.mxu0 0.0
    %3340 = vmatprep.subr.mxu0 0.0
    %3341 = vmatpush1.msra.mxu0 0.0
    %3342 = vmatprep.subr.mxu0 0.0
    %3343 = vmatpush1.msra.mxu0 0.0
    %3344 = vmatprep.subr.mxu0 0.0
    %3345 = vmatpush1.msra.mxu0 0.0
    %3346 = vmatprep.subr.mxu0 0.0
    %3347 = vmatpush1.msra.mxu0 0.0
    %3348 = vmatprep.subr.mxu0 0.0
    %3349 = vmatpush1.msra.mxu0 0.0
    %3350 = vmatprep.subr.mxu0 0.0
    %3351 = vmatpush1.msra.mxu0 0.0
    %3352 = vmatprep.subr.mxu0 0.0
    %3353 = vmatpush1.msra.mxu0 %v3317
    %3354 = vmatprep.subr.mxu0 0.0
    %3355 = vmatpush2.msra.mxu0 0.0
    %3356 = vmatprep.subr.mxu0 0.0
    %3357 = vmatpush2.msra.mxu0 0.0
    %3358 = vmatprep.subr.mxu0 0.0
    %3359 = vmatpush2.msra.mxu0 0.0
    %3360 = vmatprep.subr.mxu0 0.0
    %3361 = vmatpush2.msra.mxu0 0.0
    %3362 = vmatprep.subr.mxu0 0.0
    %3363 = vmatpush2.msra.mxu0 0.0
    %3364 = vmatprep.subr.mxu0 0.0
    %3365 = vmatpush2.msra.mxu0 0.0
    %3366 = vmatprep.subr.mxu0 0.0
    %3367 = vmatpush2.msra.mxu0 0.0
    %3368 = vmatprep.subr.mxu0 0.0
    %3369 = vmatpush2.msra.mxu0 0.0
    %3370 = vmatprep.subr.mxu0 0.0
    %3371 = vmatpush2.msra.mxu0 0.0
    %3372 = vmatprep.subr.mxu0 0.0
    %3373 = vmatpush2.msra.mxu0 0.0
    %3374 = vmatprep.subr.mxu0 0.0
    %3375 = vmatpush2.msra.mxu0 0.0
    %3376 = vmatprep.subr.mxu0 0.0
    %3377 = vmatpush2.msra.mxu0 0.0
    %3378 = vmatprep.subr.mxu0 0.0
    %3379 = vmatpush2.msra.mxu0 0.0
    %3380 = vmatprep.subr.mxu0 0.0
    %3381 = vmatpush2.msra.mxu0 0.0
    %3382 = vmatprep.subr.mxu0 0.0
    %3383 = vmatpush2.msra.mxu0 0.0
    %3384 = vmatprep.subr.mxu0 0.0
    %3385 = vmatpush2.msra.mxu0 0.0
    %3386 = vmatprep.mubr.f32.mxu0 0.0
    %3387 = vmatmul.mubr.f32.gmra.mxu0 %v3320
    %v3388 = vpop.f32.mrf.mxu0
    %v3389 = vadd.f32 0.0, %v3388
    %v3390 = vpop.f32.mrf.mxu0
    %3391 = vdwg.mxu0
    %3394 = vrot.lane.b32.xlu0 %v3313, 24
    %v3395 = vpop.permute.xlu0 %3394
    %3396 = vrot.lane.b32.xlu0 %v3389, 24
    %v3397 = vpop.permute.xlu0 %3396
    %3400 = vst.msk [vmem:[#allocation2] sm:$0xff] %vm1555, %v3395
    %3401 = vst.msk [vmem:[#allocation2 + $0x8] sm:$0xff] %vm1555, %v3397
    %v3402 = vld [vmem:[#allocation2] sm:$0xff]
    %v3403 = vld [vmem:[#allocation2 + $0x8] sm:$0xff]
    %s3404 = scalar_lea.vmem %s6, 32
    %v3405 = vld [vmem:[%s3404] sm:$0xff]
    %v3406 = vld [vmem:[%s3404 + $0x8] sm:$0xff]
    %v3407 = vld [vmem:[%s3404 + $0x10] sm:$0xff]
    %v3408 = vld [vmem:[%s3404 + $0x18] sm:$0xff]
    %v3410 = vsel %vm68, %v3402, 0
    %v3413 = vsel %vm68, %v3403, 0
    %3415 = vmatprep.subr.mxu0 0.0
    %3416 = vmatpush1.msra.mxu0 0.0
    %3417 = vmatprep.subr.mxu0 0.0
    %3418 = vmatpush1.msra.mxu0 0.0
    %3419 = vmatprep.subr.mxu0 0.0
    %3420 = vmatpush1.msra.mxu0 0.0
    %3421 = vmatprep.subr.mxu0 0.0
    %3422 = vmatpush1.msra.mxu0 0.0
    %3423 = vmatprep.subr.mxu0 0.0
    %3424 = vmatpush1.msra.mxu0 0.0
    %3425 = vmatprep.subr.mxu0 0.0
    %3426 = vmatpush1.msra.mxu0 0.0
    %3427 = vmatprep.subr.mxu0 0.0
    %3428 = vmatpush1.msra.mxu0 0.0
    %3429 = vmatprep.subr.mxu0 0.0
    %3430 = vmatpush1.msra.mxu0 0.0
    %3431 = vmatprep.subr.mxu0 0.0
    %3432 = vmatpush1.msra.mxu0 0.0
    %3433 = vmatprep.subr.mxu0 0.0
    %3434 = vmatpush1.msra.mxu0 0.0
    %3435 = vmatprep.subr.mxu0 0.0
    %3436 = vmatpush1.msra.mxu0 0.0
    %3437 = vmatprep.subr.mxu0 0.0
    %3438 = vmatpush1.msra.mxu0 0.0
    %3439 = vmatprep.subr.mxu0 0.0
    %3440 = vmatpush1.msra.mxu0 %v3408
    %3441 = vmatprep.subr.mxu0 0.0
    %3442 = vmatpush1.msra.mxu0 %v3407
    %3443 = vmatprep.subr.mxu0 0.0
    %3444 = vmatpush1.msra.mxu0 %v3406
    %3445 = vmatprep.subr.mxu0 0.0
    %3446 = vmatpush1.msra.mxu0 %v3405
    %3447 = vmatprep.subr.mxu0 0.0
    %3448 = vmatpush2.msra.mxu0 0.0
    %3449 = vmatprep.subr.mxu0 0.0
    %3450 = vmatpush2.msra.mxu0 0.0
    %3451 = vmatprep.subr.mxu0 0.0
    %3452 = vmatpush2.msra.mxu0 0.0
    %3453 = vmatprep.subr.mxu0 0.0
    %3454 = vmatpush2.msra.mxu0 0.0
    %3455 = vmatprep.subr.mxu0 0.0
    %3456 = vmatpush2.msra.mxu0 0.0
    %3457 = vmatprep.subr.mxu0 0.0
    %3458 = vmatpush2.msra.mxu0 0.0
    %3459 = vmatprep.subr.mxu0 0.0
    %3460 = vmatpush2.msra.mxu0 0.0
    %3461 = vmatprep.subr.mxu0 0.0
    %3462 = vmatpush2.msra.mxu0 0.0
    %3463 = vmatprep.subr.mxu0 0.0
    %3464 = vmatpush2.msra.mxu0 0.0
    %3465 = vmatprep.subr.mxu0 0.0
    %3466 = vmatpush2.msra.mxu0 0.0
    %3467 = vmatprep.subr.mxu0 0.0
    %3468 = vmatpush2.msra.mxu0 0.0
    %3469 = vmatprep.subr.mxu0 0.0
    %3470 = vmatpush2.msra.mxu0 0.0
    %3471 = vmatprep.subr.mxu0 0.0
    %3472 = vmatpush2.msra.mxu0 0.0
    %3473 = vmatprep.subr.mxu0 0.0
    %3474 = vmatpush2.msra.mxu0 0.0
    %3475 = vmatprep.subr.mxu0 0.0
    %3476 = vmatpush2.msra.mxu0 0.0
    %3477 = vmatprep.subr.mxu0 0.0
    %3478 = vmatpush2.msra.mxu0 0.0
    %3479 = vmatprep.mubr.f32.mxu0 0.0
    %3480 = vmatmul.mubr.f32.gmra.mxu0 %v3410
    %v3481 = vpop.f32.mrf.mxu0
    %v3482 = vadd.f32 0.0, %v3481
    %v3483 = vpop.f32.mrf.mxu0
    %3484 = vmatprep.mubr.f32.mxu0 0.0
    %3485 = vmatmul.mubr.f32.gmra.mxu0 %v3413
    %v3486 = vpop.f32.mrf.mxu0
    %v3487 = vadd.f32 0.0, %v3486
    %v3488 = vpop.f32.mrf.mxu0
    %3489 = vdwg.mxu0
    %v3490 = vadd.f32 %v1910, %v3482
    %v3491 = vadd.f32 %v1911, %v3487
    %s3492 = scalar_lea.vmem %s7, 1
    %v3493 = vld [vmem:[%s3492] sm:$0x1]
    %v3495 = vlaneseq
    %v3496 = vshrl.u32 %v3495, 7
    %v3497 = vsub.s32 0, %v3496
    %v3498 = vrot.slane %v3493, %v3497
    %v3500 = vadd.f32 %v3490, %v3498
    %v3501 = vadd.f32 %v3491, %v3498
    %s3502 = scalar_lea.vmem %s8, 1
    %v3503 = vld [vmem:[%s3502] sm:$0x1]
    %s3504 = scalar_lea.vmem %s9, 1
    %v3505 = vld [vmem:[%s3504] sm:$0x1]
    %v3506 = vsel %vm68, %v3500, 0.0
    %3507 = vadd.xlane.f32.xlu0 %v3506
    %v3508 = vpop.xlane.xlu0 %3507
    %v3509 = vsel %vm68, %v3501, 0.0
    %3510 = vadd.xlane.f32.xlu0 %v3509
    %v3511 = vpop.xlane.xlu0 %3510
    %v3512 = vmul.f32 %v3508, %v75
    %v3513 = vmul.f32 %v3511, %v75
    %v3514 = vsub.f32 %v3500, %v3512
    %v3515 = vsub.f32 %v3501, %v3513
    %v3516 = vmul.f32 %v3514, %v3514
    %v3517 = vmul.f32 %v3515, %v3515
    %v3518 = vsel %vm68, %v3516, 0.0
    %3519 = vadd.xlane.f32.xlu0 %v3518
    %v3520 = vpop.xlane.xlu0 %3519
    %v3521 = vsel %vm68, %v3517, 0.0
    %3522 = vadd.xlane.f32.xlu0 %v3521
    %v3523 = vpop.xlane.xlu0 %3522
    %v3524 = vmul.f32 %v3520, %v75
    %v3525 = vmul.f32 %v3523, %v75
    %v3526 = vadd.f32 %v3524, 1e-05
    %v3527 = vadd.f32 %v3525, 1e-05
    %v3528 = vrsqrt.pop %v3526
    %v3529 = vrsqrt.pop %v3527
    %v3530 = vmul.f32 %v3514, %v3528
    %v3531 = vmul.f32 %v3515, %v3529
    %v3533 = vlaneseq
    %v3534 = vshrl.u32 %v3533, 7
    %v3535 = vsub.s32 0, %v3534
    %v3536 = vrot.slane %v3503, %v3535
    %v3538 = vmul.f32 %v3530, %v3536
    %v3539 = vmul.f32 %v3531, %v3536
    %v3541 = vlaneseq
    %v3542 = vshrl.u32 %v3541, 7
    %v3543 = vsub.s32 0, %v3542
    %v3544 = vrot.slane %v3505, %v3543
    %v3546 = vadd.f32 %v3538, %v3544
    %v3547 = vadd.f32 %v3539, %v3544
    %s3548 = scalar_lea.vmem %s10, 32
    %v3549 = vld [vmem:[%s3548] sm:$0xff]
    %v3550 = vld [vmem:[%s3548 + $0x8] sm:$0xff]
    %v3551 = vld [vmem:[%s3548 + $0x10] sm:$0xff]
    %v3552 = vld [vmem:[%s3548 + $0x18] sm:$0xff]
    %s3553 = scalar_lea.vmem %s11, 1
    %v3554 = vld [vmem:[%s3553] sm:$0x1]
    %v3556 = vlaneseq
    %v3557 = vshrl.u32 %v3556, 7
    %v3558 = vsub.s32 0, %v3557
    %v3559 = vrot.slane %v3554, %v3558
    %v3562 = vsel %vm68, %v3546, 0
    %v3565 = vsel %vm68, %v3547, 0
    %3567 = vmatprep.subr.mxu0 0.0
    %3568 = vmatpush1.msra.mxu0 0.0
    %3569 = vmatprep.subr.mxu0 0.0
    %3570 = vmatpush1.msra.mxu0 0.0
    %3571 = vmatprep.subr.mxu0 0.0
    %3572 = vmatpush1.msra.mxu0 0.0
    %3573 = vmatprep.subr.mxu0 0.0
    %3574 = vmatpush1.msra.mxu0 0.0
    %3575 = vmatprep.subr.mxu0 0.0
    %3576 = vmatpush1.msra.mxu0 0.0
    %3577 = vmatprep.subr.mxu0 0.0
    %3578 = vmatpush1.msra.mxu0 0.0
    %3579 = vmatprep.subr.mxu0 0.0
    %3580 = vmatpush1.msra.mxu0 0.0
    %3581 = vmatprep.subr.mxu0 0.0
    %3582 = vmatpush1.msra.mxu0 0.0
    %3583 = vmatprep.subr.mxu0 0.0
    %3584 = vmatpush1.msra.mxu0 0.0
    %3585 = vmatprep.subr.mxu0 0.0
    %3586 = vmatpush1.msra.mxu0 0.0
    %3587 = vmatprep.subr.mxu0 0.0
    %3588 = vmatpush1.msra.mxu0 0.0
    %3589 = vmatprep.subr.mxu0 0.0
    %3590 = vmatpush1.msra.mxu0 0.0
    %3591 = vmatprep.subr.mxu0 0.0
    %3592 = vmatpush1.msra.mxu0 %v3552
    %3593 = vmatprep.subr.mxu0 0.0
    %3594 = vmatpush1.msra.mxu0 %v3551
    %3595 = vmatprep.subr.mxu0 0.0
    %3596 = vmatpush1.msra.mxu0 %v3550
    %3597 = vmatprep.subr.mxu0 0.0
    %3598 = vmatpush1.msra.mxu0 %v3549
    %3599 = vmatprep.subr.mxu0 0.0
    %3600 = vmatpush2.msra.mxu0 0.0
    %3601 = vmatprep.subr.mxu0 0.0
    %3602 = vmatpush2.msra.mxu0 0.0
    %3603 = vmatprep.subr.mxu0 0.0
    %3604 = vmatpush2.msra.mxu0 0.0
    %3605 = vmatprep.subr.mxu0 0.0
    %3606 = vmatpush2.msra.mxu0 0.0
    %3607 = vmatprep.subr.mxu0 0.0
    %3608 = vmatpush2.msra.mxu0 0.0
    %3609 = vmatprep.subr.mxu0 0.0
    %3610 = vmatpush2.msra.mxu0 0.0
    %3611 = vmatprep.subr.mxu0 0.0
    %3612 = vmatpush2.msra.mxu0 0.0
    %3613 = vmatprep.subr.mxu0 0.0
    %3614 = vmatpush2.msra.mxu0 0.0
    %3615 = vmatprep.subr.mxu0 0.0
    %3616 = vmatpush2.msra.mxu0 0.0
    %3617 = vmatprep.subr.mxu0 0.0
    %3618 = vmatpush2.msra.mxu0 0.0
    %3619 = vmatprep.subr.mxu0 0.0
    %3620 = vmatpush2.msra.mxu0 0.0
    %3621 = vmatprep.subr.mxu0 0.0
    %3622 = vmatpush2.msra.mxu0 0.0
    %3623 = vmatprep.subr.mxu0 0.0
    %3624 = vmatpush2.msra.mxu0 0.0
    %3625 = vmatprep.subr.mxu0 0.0
    %3626 = vmatpush2.msra.mxu0 0.0
    %3627 = vmatprep.subr.mxu0 0.0
    %3628 = vmatpush2.msra.mxu0 0.0
    %3629 = vmatprep.subr.mxu0 0.0
    %3630 = vmatpush2.msra.mxu0 0.0
    %3631 = vmatprep.mubr.f32.mxu0 0.0
    %3632 = vmatmul.mubr.f32.gmra.mxu0 %v3562
    %v3633 = vpop.f32.mrf.mxu0
    %v3634 = vadd.f32 %v3559, %v3633
    %v3635 = vpop.f32.mrf.mxu0
    %3636 = vmatprep.mubr.f32.mxu0 0.0
    %3637 = vmatmul.mubr.f32.gmra.mxu0 %v3565
    %v3638 = vpop.f32.mrf.mxu0
    %v3639 = vadd.f32 %v3559, %v3638
    %v3640 = vpop.f32.mrf.mxu0
    %3641 = vdwg.mxu0
    %v3642 = vmul.f32 %v3634, 0.5
    %v3643 = vmul.f32 %v3639, 0.5
    %v3644 = vmul.f32 %v3634, 0.044715
    %v3645 = vmul.f32 %v3639, 0.044715
    %v3646 = vmul.f32 %v3644, %v3634
    %v3647 = vmul.f32 %v3645, %v3639
    %v3648 = vmul.f32 %v3646, %v3634
    %v3649 = vmul.f32 %v3647, %v3639
    %v3650 = vadd.f32 %v3634, %v3648
    %v3651 = vadd.f32 %v3639, %v3649
    %v3652 = vmul.f32 %v3650, 0.7978846
    %v3653 = vmul.f32 %v3651, 0.7978846
    %v3654 = vtanh.pop %v3652
    %v3655 = vtanh.pop %v3653
    %v3656 = vadd.f32 %v3654, 1.0
    %v3657 = vadd.f32 %v3655, 1.0
    %v3658 = vmul.f32 %v3642, %v3656
    %v3659 = vmul.f32 %v3643, %v3657
    %s3660 = scalar_lea.vmem %s12, 128
    %v3661 = vld [vmem:[%s3660] sm:$0xff]
    %v3662 = vld [vmem:[%s3660 + $0x8] sm:$0xff]
    %v3663 = vld [vmem:[%s3660 + $0x10] sm:$0xff]
    %v3664 = vld [vmem:[%s3660 + $0x18] sm:$0xff]
    %v3665 = vld [vmem:[%s3660 + $0x20] sm:$0xff]
    %v3666 = vld [vmem:[%s3660 + $0x28] sm:$0xff]
    %v3667 = vld [vmem:[%s3660 + $0x30] sm:$0xff]
    %v3668 = vld [vmem:[%s3660 + $0x38] sm:$0xff]
    %v3669 = vld [vmem:[%s3660 + $0x40] sm:$0xff]
    %v3670 = vld [vmem:[%s3660 + $0x48] sm:$0xff]
    %v3671 = vld [vmem:[%s3660 + $0x50] sm:$0xff]
    %v3672 = vld [vmem:[%s3660 + $0x58] sm:$0xff]
    %v3673 = vld [vmem:[%s3660 + $0x60] sm:$0xff]
    %v3674 = vld [vmem:[%s3660 + $0x68] sm:$0xff]
    %v3675 = vld [vmem:[%s3660 + $0x70] sm:$0xff]
    %v3676 = vld [vmem:[%s3660 + $0x78] sm:$0xff]
    %3677 = vmatprep.subr.mxu0 0.0
    %3678 = vmatpush1.msra.mxu0 %v3676
    %3679 = vmatprep.subr.mxu0 0.0
    %3680 = vmatpush1.msra.mxu0 %v3675
    %3681 = vmatprep.subr.mxu0 0.0
    %3682 = vmatpush1.msra.mxu0 %v3674
    %3683 = vmatprep.subr.mxu0 0.0
    %3684 = vmatpush1.msra.mxu0 %v3673
    %3685 = vmatprep.subr.mxu0 0.0
    %3686 = vmatpush1.msra.mxu0 %v3672
    %3687 = vmatprep.subr.mxu0 0.0
    %3688 = vmatpush1.msra.mxu0 %v3671
    %3689 = vmatprep.subr.mxu0 0.0
    %3690 = vmatpush1.msra.mxu0 %v3670
    %3691 = vmatprep.subr.mxu0 0.0
    %3692 = vmatpush1.msra.mxu0 %v3669
    %3693 = vmatprep.subr.mxu0 0.0
    %3694 = vmatpush1.msra.mxu0 %v3668
    %3695 = vmatprep.subr.mxu0 0.0
    %3696 = vmatpush1.msra.mxu0 %v3667
    %3697 = vmatprep.subr.mxu0 0.0
    %3698 = vmatpush1.msra.mxu0 %v3666
    %3699 = vmatprep.subr.mxu0 0.0
    %3700 = vmatpush1.msra.mxu0 %v3665
    %3701 = vmatprep.subr.mxu0 0.0
    %3702 = vmatpush1.msra.mxu0 %v3664
    %3703 = vmatprep.subr.mxu0 0.0
    %3704 = vmatpush1.msra.mxu0 %v3663
    %3705 = vmatprep.subr.mxu0 0.0
    %3706 = vmatpush1.msra.mxu0 %v3662
    %3707 = vmatprep.subr.mxu0 0.0
    %3708 = vmatpush1.msra.mxu0 %v3661
    %3709 = vmatprep.subr.mxu0 0.0
    %3710 = vmatpush2.msra.mxu0 0.0
    %3711 = vmatprep.subr.mxu0 0.0
    %3712 = vmatpush2.msra.mxu0 0.0
    %3713 = vmatprep.subr.mxu0 0.0
    %3714 = vmatpush2.msra.mxu0 0.0
    %3715 = vmatprep.subr.mxu0 0.0
    %3716 = vmatpush2.msra.mxu0 0.0
    %3717 = vmatprep.subr.mxu0 0.0
    %3718 = vmatpush2.msra.mxu0 0.0
    %3719 = vmatprep.subr.mxu0 0.0
    %3720 = vmatpush2.msra.mxu0 0.0
    %3721 = vmatprep.subr.mxu0 0.0
    %3722 = vmatpush2.msra.mxu0 0.0
    %3723 = vmatprep.subr.mxu0 0.0
    %3724 = vmatpush2.msra.mxu0 0.0
    %3725 = vmatprep.subr.mxu0 0.0
    %3726 = vmatpush2.msra.mxu0 0.0
    %3727 = vmatprep.subr.mxu0 0.0
    %3728 = vmatpush2.msra.mxu0 0.0
    %3729 = vmatprep.subr.mxu0 0.0
    %3730 = vmatpush2.msra.mxu0 0.0
    %3731 = vmatprep.subr.mxu0 0.0
    %3732 = vmatpush2.msra.mxu0 0.0
    %3733 = vmatprep.subr.mxu0 0.0
    %3734 = vmatpush2.msra.mxu0 0.0
    %3735 = vmatprep.subr.mxu0 0.0
    %3736 = vmatpush2.msra.mxu0 0.0
    %3737 = vmatprep.subr.mxu0 0.0
    %3738 = vmatpush2.msra.mxu0 0.0
    %3739 = vmatprep.subr.mxu0 0.0
    %3740 = vmatpush2.msra.mxu0 0.0
    %3741 = vmatprep.mubr.f32.mxu0 0.0
    %3742 = vmatmul.mubr.f32.gmra.mxu0 %v3658
    %v3743 = vpop.f32.mrf.mxu0
    %v3744 = vadd.f32 0.0, %v3743
    %v3745 = vpop.f32.mrf.mxu0
    %3746 = vmatprep.mubr.f32.mxu0 0.0
    %3747 = vmatmul.mubr.f32.gmra.mxu0 %v3659
    %v3748 = vpop.f32.mrf.mxu0
    %v3749 = vadd.f32 0.0, %v3748
    %v3750 = vpop.f32.mrf.mxu0
    %3751 = vdwg.mxu0
    %v3752 = vadd.f32 %v3500, %v3744
    %v3753 = vadd.f32 %v3501, %v3749
    %s3754 = scalar_lea.vmem %s13, 1
    %v3755 = vld [vmem:[%s3754] sm:$0x1]
    %v3757 = vlaneseq
    %v3758 = vshrl.u32 %v3757, 7
    %v3759 = vsub.s32 0, %v3758
    %v3760 = vrot.slane %v3755, %v3759
    %v3762 = vadd.f32 %v3752, %v3760
    %v3763 = vadd.f32 %v3753, %v3760
    %v3764 = vld [vmem:[%s14] sm:$0x1]
    %v3765 = vld [vmem:[%s15] sm:$0x1]
    %v3766 = vsel %vm68, %v3762, 0.0
    %3767 = vadd.xlane.f32.xlu0 %v3766
    %v3768 = vpop.xlane.xlu0 %3767
    %v3769 = vsel %vm68, %v3763, 0.0
    %3770 = vadd.xlane.f32.xlu0 %v3769
    %v3771 = vpop.xlane.xlu0 %3770
    %v3772 = vmul.f32 %v3768, %v75
    %v3773 = vmul.f32 %v3771, %v75
    %v3774 = vsub.f32 %v3762, %v3772
    %v3775 = vsub.f32 %v3763, %v3773
    %v3776 = vmul.f32 %v3774, %v3774
    %v3777 = vmul.f32 %v3775, %v3775
    %v3778 = vsel %vm68, %v3776, 0.0
    %3779 = vadd.xlane.f32.xlu0 %v3778
    %v3780 = vpop.xlane.xlu0 %3779
    %v3781 = vsel %vm68, %v3777, 0.0
    %3782 = vadd.xlane.f32.xlu0 %v3781
    %v3783 = vpop.xlane.xlu0 %3782
    %v3784 = vmul.f32 %v3780, %v75
    %v3785 = vmul.f32 %v3783, %v75
    %v3786 = vadd.f32 %v3784, 1e-05
    %v3787 = vadd.f32 %v3785, 1e-05
    %v3788 = vrsqrt.pop %v3786
    %v3789 = vrsqrt.pop %v3787
    %v3790 = vmul.f32 %v3774, %v3788
    %v3791 = vmul.f32 %v3775, %v3789
    %v3793 = vlaneseq
    %v3794 = vshrl.u32 %v3793, 7
    %v3795 = vsub.s32 0, %v3794
    %v3796 = vrot.slane %v3764, %v3795
    %v3798 = vmul.f32 %v3790, %v3796
    %v3799 = vmul.f32 %v3791, %v3796
    %v3801 = vlaneseq
    %v3802 = vshrl.u32 %v3801, 7
    %v3803 = vsub.s32 0, %v3802
    %v3804 = vrot.slane %v3765, %v3803
    %v3806 = vadd.f32 %v3798, %v3804
    %v3807 = vadd.f32 %v3799, %v3804
    %3808 = vst.msk [vmem:[#allocation3] sm:$0xff] %vm68, %v3806
    %3809 = vst.msk [vmem:[#allocation3 + $0x8] sm:$0xff] %vm68, %v3807
    // Predicated region
    $region66: #{tpu_custom_call.1} parent=1 // pred_check
      _
    $region67: #{tpu_custom_call.1} parent=1 // pred_check_branch
      %3811 = sbr.rel (0) target = $region69
    $region68: #{tpu_custom_call.1} parent=1 // pred_region
      %s3813 = ssub.s32 256, 256
      %3814 = vsyncadd [#allocation4], %s3813
      %s3815 = sshll.u32 [#allocation3], 4
      %s3816 = int_to_ptr.vmem [resolvable:$true] %s3815
      %3821 = dma.vmem_to_hbm [thread:$0]  %s3816, 256, %s16, [#allocation4], 128, 128, 8
    $region69: #{tpu_custom_call.1} parent=1 // pred_fallthru
      _
    // Predicated region
    $region70: #{tpu_custom_call.1} parent=1 // pred_check
      _
    $region71: #{tpu_custom_call.1} parent=1 // pred_check_branch
      %3823 = sbr.rel (0) target = $region73
    $region72: #{tpu_custom_call.1} parent=1 // pred_region
      %3824 = dma.done [#allocation4], 256
    $region73: #{tpu_custom_call.1} parent=1 // pred_fallthru
      _
    %3825 = vsyncpa [#allocation4], 1

</llo_original>
